<compile_context>
chip_gen: v7x
topology: tpu7x:2x2x1
jax: 0.10.0
libtpu: 0.0.40
codegen_flags: <defaults>
</compile_context>

<pallas_src>
import math

import jax
import jax.numpy as jnp
from jax.experimental import pallas as pl
from jax.experimental.pallas import tpu as pltpu

EPS = 1e-6
NEG = -1e9


# ----------------------------- kernel helpers ------------------------------
def _layer_norm(x, alpha, bias):
    # matches LayerNormalization: unbiased std (ddof=1), divide by (std + eps)
    d = x.shape[-1]
    mean = jnp.mean(x, axis=-1, keepdims=True)
    var = jnp.sum((x - mean) ** 2, axis=-1, keepdims=True) * (1.0 / (d - 1))
    std = jnp.sqrt(var)
    inv = pl.reciprocal(std + EPS, approx=True)      # EUP, off the VALU path
    return (x - mean) * (alpha * inv) + bias


def _mha(q_in, kv_in, mask, wq, bq, wk, bk, wv, bv, wo, bo):
    """Head-batched multi-head attention for one batch element.

    q_in / kv_in : (S, D) float32 activations
    mask         : (S, S) or (1, S) float 0/1 (0 => masked)
    wq/wk/wv     : (h, D, dk) bfloat16 (wq/bq pre-scaled by 1/sqrt(dk) on host)
    bq/bk/bv     : (h, 1, dk) float32
    wo           : (h, dk, D) bfloat16 ;  bo : (1, D) float32
    """
    h, D, dk = wq.shape
    S = q_in.shape[0]

    qb = jnp.broadcast_to(q_in.astype(jnp.bfloat16)[None], (h, S, D))
    kb = jnp.broadcast_to(kv_in.astype(jnp.bfloat16)[None], (h, S, D))

    # per-head projections as one batch-leading batched matmul each
    q = jnp.einsum('hsd,hde->hse', qb, wq, preferred_element_type=jnp.float32) + bq
    k = jnp.einsum('hsd,hde->hse', kb, wk, preferred_element_type=jnp.float32) + bk
    v = jnp.einsum('hsd,hde->hse', kb, wv, preferred_element_type=jnp.float32) + bv

    # scores (scale already folded into wq/bq)
    sc = jnp.einsum('hqe,hke->hqk',
                    q.astype(jnp.bfloat16), k.astype(jnp.bfloat16),
                    preferred_element_type=jnp.float32)
    sc = jnp.where(mask == 0.0, NEG, sc)
    sc = sc - jnp.max(sc, axis=-1, keepdims=True)
    p = jnp.exp(sc)
    p = p * pl.reciprocal(jnp.sum(p, axis=-1, keepdims=True), approx=True)

    ctx = jnp.einsum('hqk,hke->hqe',
                     p.astype(jnp.bfloat16), v.astype(jnp.bfloat16),
                     preferred_element_type=jnp.float32)
    # output projection: per-head partials summed over heads == concat(ctx) @ Wo
    out_h = jnp.einsum('hqe,hed->hqd',
                       ctx.astype(jnp.bfloat16), wo,
                       preferred_element_type=jnp.float32)
    return jnp.sum(out_h, axis=0) + bo


# --------------------------------- kernel ----------------------------------
def decoder_block_kernel(
    ln_ref,                       # SMEM (6,): alpha0,bias0,alpha1,bias1,alpha2,bias2
    x_ref, enc_ref,               # (1, S, D) float32 each
    tmask_ref,                    # (1, 1, S, S) float32
    smask_ref,                    # (1, 1, 1, S) float32
    wq1, bq1, wk1, bk1, wv1, bv1, wo1, bo1,     # self-attention (per-head)
    wq2, bq2, wk2, bk2, wv2, bv2, wo2, bo2,     # cross-attention (per-head)
    w1, b1, w2, b2,               # feed-forward
    o_ref,                        # (1, S, D) float32 (aliased with x)
):
    x = x_ref[0]                  # (S, D) f32
    enc = enc_ref[0]              # (S, D) f32
    tmask = tmask_ref[0, 0]       # (S, S)
    smask = smask_ref[0, 0]       # (1, S), broadcasts against (h, S, S)

    # residual 1: x + self_attention(norm(x))   (dropout p=0 -> identity)
    xn = _layer_norm(x, ln_ref[0], ln_ref[1])
    x = x + _mha(xn, xn, tmask,
                 wq1[...], bq1[...], wk1[...], bk1[...],
                 wv1[...], bv1[...], wo1[...], bo1[...])

    # residual 2: x + cross_attention(norm(x), enc, enc)
    xn = _layer_norm(x, ln_ref[2], ln_ref[3])
    x = x + _mha(xn, enc, smask,
                 wq2[...], bq2[...], wk2[...], bk2[...],
                 wv2[...], bv2[...], wo2[...], bo2[...])

    # residual 3: x + FFN(norm(x))  (Linear -> ReLU -> Linear)
    xn = _layer_norm(x, ln_ref[4], ln_ref[5])
    hid = jnp.dot(xn.astype(jnp.bfloat16), w1[...],
                  preferred_element_type=jnp.float32) + b1[...]
    hid = jnp.maximum(hid, 0.0)
    ff = jnp.dot(hid.astype(jnp.bfloat16), w2[...],
                 preferred_element_type=jnp.float32) + b2[...]
    x = x + ff

    o_ref[0] = x                  # single lane-dense store at the end


# ------------------------- host-side weight prep ---------------------------
def _per_head_in(w, b, h, scale=1.0):
    """Linear y = x @ w + b  ->  per-head (h, D, dk) bf16 and (h, 1, dk) f32."""
    d_in, d_out = w.shape
    dk = d_out // h
    w_h = (w * scale).reshape(d_in, h, dk).transpose(1, 0, 2)
    b_h = (b * scale).reshape(h, 1, dk)
    return w_h.astype(jnp.bfloat16), b_h.astype(jnp.float32)


def _per_head_out(wo, h):
    d_in, d_out = wo.shape
    dk = d_in // h
    return wo.reshape(h, dk, d_out).astype(jnp.bfloat16)


# -------------------------------- wrapper ----------------------------------
def decoder_block(x, enc, tgt_mask, src_mask, ln_params, weights, *, h):
    B, S, D = x.shape
    (wq1, bq1, wk1, bk1, wv1, bv1, wo1, bo1,
     wq2, bq2, wk2, bk2, wv2, bv2, wo2, bo2,
     w1, b1, w2, b2) = weights

    dk = D // h
    scale = 1.0 / math.sqrt(dk)          # folded into Wq / bq (one-time, on host)

    wq1h, bq1h = _per_head_in(wq1, bq1, h, scale)
    wk1h, bk1h = _per_head_in(wk1, bk1, h)
    wv1h, bv1h = _per_head_in(wv1, bv1, h)
    wo1h = _per_head_out(wo1, h)
    wq2h, bq2h = _per_head_in(wq2, bq2, h, scale)
    wk2h, bk2h = _per_head_in(wk2, bk2, h)
    wv2h, bv2h = _per_head_in(wv2, bv2, h)
    wo2h = _per_head_out(wo2, h)

    prepped = (
        wq1h, bq1h, wk1h, bk1h, wv1h, bv1h, wo1h, bo1.astype(jnp.float32),
        wq2h, bq2h, wk2h, bk2h, wv2h, bv2h, wo2h, bo2.astype(jnp.float32),
        w1.astype(jnp.bfloat16), b1.astype(jnp.float32),
        w2.astype(jnp.bfloat16), b2.astype(jnp.float32),
    )

    # grid-invariant full-shape weight blocks (constant index_map)
    weight_specs = [
        pl.BlockSpec(w.shape, lambda b, n=w.ndim: (0,) * n) for w in prepped
    ]
    in_specs = [
        pl.BlockSpec(memory_space=pltpu.MemorySpace.SMEM),        # LN scalars
        pl.BlockSpec((1, S, D), lambda b: (b, 0, 0)),             # x
        pl.BlockSpec((1, S, D), lambda b: (b, 0, 0)),             # encoder output
        pl.BlockSpec((1, 1, S, S), lambda b: (b, 0, 0, 0)),       # tgt mask
        pl.BlockSpec((1, 1, 1, S), lambda b: (b, 0, 0, 0)),       # src mask
    ] + weight_specs

    return pl.pallas_call(
        decoder_block_kernel,
        out_shape=jax.ShapeDtypeStruct((B, S, D), jnp.float32),
        grid=(B,),
        in_specs=in_specs,
        out_specs=pl.BlockSpec((1, S, D), lambda b: (b, 0, 0)),
        input_output_aliases={1: 0},      # reuse x's HBM buffer for the output
        compiler_params=pltpu.CompilerParams(
            dimension_semantics=("parallel",),
            vmem_limit_bytes=32 * 1024 * 1024,
        ),
    )(ln_params, x, enc, tgt_mask, src_mask, *prepped)


# ------------------------- pure-JAX f32 reference --------------------------
def reference(x, enc, tgt_mask, src_mask, ln_params, weights, *, h):
    (wq1, bq1, wk1, bk1, wv1, bv1, wo1, bo1,
     wq2, bq2, wk2, bk2, wv2, bv2, wo2, bo2,
     w1, b1, w2, b2) = weights

    def ln(z, a, b):
        d = z.shape[-1]
        mean = z.mean(-1, keepdims=True)
        std = jnp.sqrt(((z - mean) ** 2).sum(-1, keepdims=True) / (d - 1))
        return a * (z - mean) / (std + EPS) + b

    def mha(q, k, v, mask, wq, bq, wk, bk, wv, bv, wo, bo):
        B, S, D = q.shape
        dk = D // h
        Q = (q @ wq + bq).reshape(B, S, h, dk).transpose(0, 2, 1, 3)
        K = (k @ wk + bk).reshape(B, S, h, dk).transpose(0, 2, 1, 3)
        V = (v @ wv + bv).reshape(B, S, h, dk).transpose(0, 2, 1, 3)
        sc = Q @ K.transpose(0, 1, 3, 2) / math.sqrt(dk)
        sc = jnp.where(mask == 0, NEG, sc)
        at = jax.nn.softmax(sc, axis=-1)
        o = (at @ V).transpose(0, 2, 1, 3).reshape(B, S, D)
        return o @ wo + bo

    a0, c0, a1, c1, a2, c2 = [ln_params[i] for i in range(6)]
    xn = ln(x, a0, c0)
    x = x + mha(xn, xn, xn, tgt_mask, wq1, bq1, wk1, bk1, wv1, bv1, wo1, bo1)
    xn = ln(x, a1, c1)
    x = x + mha(xn, enc, enc, src_mask, wq2, bq2, wk2, bk2, wv2, bv2, wo2, bo2)
    xn = ln(x, a2, c2)
    x = x + (jnp.maximum(xn @ w1 + b1, 0.0) @ w2 + b2)
    return x


# ---------------------------------- main -----------------------------------
if __name__ == "__main__":
    B, S, D, H, F = 2, 8, 32, 4, 64  # batch, seq, d_model, heads, d_ff

    key = jax.random.PRNGKey(0)
    keys = jax.random.split(key, 32)
    ki = iter(keys)

    def w(shape):
        return jax.random.normal(next(ki), shape, jnp.float32) * 0.05

    x = jax.random.normal(next(ki), (B, S, D), jnp.float32)
    enc = jax.random.normal(next(ki), (B, S, D), jnp.float32)

    # causal look-ahead mask for decoder self-attention
    tgt_mask = jnp.broadcast_to(jnp.tril(jnp.ones((S, S), jnp.float32)), (B, 1, S, S))
    # padding mask for cross-attention: batch 1 has its last 2 source positions masked
    src_mask = jnp.ones((B, 1, 1, S), jnp.float32)
    src_mask = src_mask.at[1, 0, 0, S - 2:].set(0.0)

    # Parameters.  Linear weights stored as (in, out); biases (1, out).
    weights = (
        # self-attention: Wq, bq, Wk, bk, Wv, bv, Wo, bo
        w((D, D)), w((1, D)), w((D, D)), w((1, D)),
        w((D, D)), w((1, D)), w((D, D)), w((1, D)),
        # cross-attention: Wq, bq, Wk, bk, Wv, bv, Wo, bo
        w((D, D)), w((1, D)), w((D, D)), w((1, D)),
        w((D, D)), w((1, D)), w((D, D)), w((1, D)),
        # feed-forward: W1 (D,F), b1 (1,F), W2 (F,D), b2 (1,D)
        w((D, F)), w((1, F)), w((F, D)), w((1, D)),
    )
    # LayerNormalization scalars (alpha, bias) for the 3 residual connections
    ln_params = jnp.array([1.0, 0.0, 1.0, 0.0, 1.0, 0.0], jnp.float32)

    ref = reference(x, enc, tgt_mask, src_mask, ln_params, weights, h=H)
    ref = jax.block_until_ready(ref)

    out = decoder_block(x, enc, tgt_mask, src_mask, ln_params, weights, h=H)
    out = jax.block_until_ready(out)

    assert out.shape == (B, S, D)
    max_err = jnp.max(jnp.abs(out - ref))
    # bf16 MXU matmuls + approximate reciprocals vs. full-f32 reference
    assert jnp.allclose(out, ref, rtol=5e-3, atol=5e-3), f"max abs err {max_err}"

    print("KERNEL_OK")
</pallas_src>

<mosaic_0001>
module attributes {stable_mosaic.version = 11 : i64} {
  func.func @decoder_block_kernel(%arg0: i32, %arg1: memref<6xf32, #tpu.memory_space<smem>>, %arg2: memref<1x8x32xf32, #tpu.memory_space<vmem>>, %arg3: memref<1x8x32xf32, #tpu.memory_space<vmem>>, %arg4: memref<1x1x8x8xf32, #tpu.memory_space<vmem>>, %arg5: memref<1x1x1x8xf32, #tpu.memory_space<vmem>>, %arg6: memref<4x32x8xbf16, #tpu.memory_space<vmem>>, %arg7: memref<4x1x8xf32, #tpu.memory_space<vmem>>, %arg8: memref<4x32x8xbf16, #tpu.memory_space<vmem>>, %arg9: memref<4x1x8xf32, #tpu.memory_space<vmem>>, %arg10: memref<4x32x8xbf16, #tpu.memory_space<vmem>>, %arg11: memref<4x1x8xf32, #tpu.memory_space<vmem>>, %arg12: memref<4x8x32xbf16, #tpu.memory_space<vmem>>, %arg13: memref<1x32xf32, #tpu.memory_space<vmem>>, %arg14: memref<4x32x8xbf16, #tpu.memory_space<vmem>>, %arg15: memref<4x1x8xf32, #tpu.memory_space<vmem>>, %arg16: memref<4x32x8xbf16, #tpu.memory_space<vmem>>, %arg17: memref<4x1x8xf32, #tpu.memory_space<vmem>>, %arg18: memref<4x32x8xbf16, #tpu.memory_space<vmem>>, %arg19: memref<4x1x8xf32, #tpu.memory_space<vmem>>, %arg20: memref<4x8x32xbf16, #tpu.memory_space<vmem>>, %arg21: memref<1x32xf32, #tpu.memory_space<vmem>>, %arg22: memref<32x64xbf16, #tpu.memory_space<vmem>>, %arg23: memref<1x64xf32, #tpu.memory_space<vmem>>, %arg24: memref<64x32xbf16, #tpu.memory_space<vmem>>, %arg25: memref<1x32xf32, #tpu.memory_space<vmem>>, %arg26: memref<1x8x32xf32, #tpu.memory_space<vmem>>) attributes {dimension_semantics = [#tpu.dimension_semantics<parallel>], iteration_bounds = array<i64: 2>, scalar_prefetch = 0 : i64, scratch_operands = 0 : i64, tpu.core_type = #tpu.core_type<tc>, window_params = [{transform_indices = @transform_0, window_bounds = array<i64: 6>}, {transform_indices = @transform_1, window_bounds = array<i64: 1, 8, 32>}, {transform_indices = @transform_2, window_bounds = array<i64: 1, 8, 32>}, {transform_indices = @transform_3, window_bounds = array<i64: 1, 1, 8, 8>}, {transform_indices = @transform_4, window_bounds = array<i64: 1, 1, 1, 8>}, {pipeline_mode = #tpu.pipeline_mode<synchronous>, transform_indices = @transform_5, window_bounds = array<i64: 4, 32, 8>}, {pipeline_mode = #tpu.pipeline_mode<synchronous>, transform_indices = @transform_6, window_bounds = array<i64: 4, 1, 8>}, {pipeline_mode = #tpu.pipeline_mode<synchronous>, transform_indices = @transform_7, window_bounds = array<i64: 4, 32, 8>}, {pipeline_mode = #tpu.pipeline_mode<synchronous>, transform_indices = @transform_8, window_bounds = array<i64: 4, 1, 8>}, {pipeline_mode = #tpu.pipeline_mode<synchronous>, transform_indices = @transform_9, window_bounds = array<i64: 4, 32, 8>}, {pipeline_mode = #tpu.pipeline_mode<synchronous>, transform_indices = @transform_10, window_bounds = array<i64: 4, 1, 8>}, {pipeline_mode = #tpu.pipeline_mode<synchronous>, transform_indices = @transform_11, window_bounds = array<i64: 4, 8, 32>}, {pipeline_mode = #tpu.pipeline_mode<synchronous>, transform_indices = @transform_12, window_bounds = array<i64: 1, 32>}, {pipeline_mode = #tpu.pipeline_mode<synchronous>, transform_indices = @transform_13, window_bounds = array<i64: 4, 32, 8>}, {pipeline_mode = #tpu.pipeline_mode<synchronous>, transform_indices = @transform_14, window_bounds = array<i64: 4, 1, 8>}, {pipeline_mode = #tpu.pipeline_mode<synchronous>, transform_indices = @transform_15, window_bounds = array<i64: 4, 32, 8>}, {pipeline_mode = #tpu.pipeline_mode<synchronous>, transform_indices = @transform_16, window_bounds = array<i64: 4, 1, 8>}, {pipeline_mode = #tpu.pipeline_mode<synchronous>, transform_indices = @transform_17, window_bounds = array<i64: 4, 32, 8>}, {pipeline_mode = #tpu.pipeline_mode<synchronous>, transform_indices = @transform_18, window_bounds = array<i64: 4, 1, 8>}, {pipeline_mode = #tpu.pipeline_mode<synchronous>, transform_indices = @transform_19, window_bounds = array<i64: 4, 8, 32>}, {pipeline_mode = #tpu.pipeline_mode<synchronous>, transform_indices = @transform_20, window_bounds = array<i64: 1, 32>}, {pipeline_mode = #tpu.pipeline_mode<synchronous>, transform_indices = @transform_21, window_bounds = array<i64: 32, 64>}, {pipeline_mode = #tpu.pipeline_mode<synchronous>, transform_indices = @transform_22, window_bounds = array<i64: 1, 64>}, {pipeline_mode = #tpu.pipeline_mode<synchronous>, transform_indices = @transform_23, window_bounds = array<i64: 64, 32>}, {pipeline_mode = #tpu.pipeline_mode<synchronous>, transform_indices = @transform_24, window_bounds = array<i64: 1, 32>}, {transform_indices = @transform_25, window_bounds = array<i64: 1, 8, 32>}]} {
    %c0 = arith.constant 0 : index
    %c0_0 = arith.constant 0 : index
    %c0_1 = arith.constant 0 : index
    %0 = vector.load %arg2[%c0, %c0_0, %c0_1] : memref<1x8x32xf32, #tpu.memory_space<vmem>>, vector<1x8x32xf32>
    %1 = vector.shape_cast %0 : vector<1x8x32xf32> to vector<8x32xf32>
    %c0_2 = arith.constant 0 : index
    %c0_3 = arith.constant 0 : index
    %c0_4 = arith.constant 0 : index
    %2 = vector.load %arg3[%c0_2, %c0_3, %c0_4] : memref<1x8x32xf32, #tpu.memory_space<vmem>>, vector<1x8x32xf32>
    %3 = vector.shape_cast %2 : vector<1x8x32xf32> to vector<8x32xf32>
    %c0_5 = arith.constant 0 : index
    %c0_6 = arith.constant 0 : index
    %c0_7 = arith.constant 0 : index
    %c0_8 = arith.constant 0 : index
    %4 = vector.load %arg4[%c0_5, %c0_6, %c0_7, %c0_8] : memref<1x1x8x8xf32, #tpu.memory_space<vmem>>, vector<1x1x8x8xf32>
    %5 = vector.shape_cast %4 : vector<1x1x8x8xf32> to vector<8x8xf32>
    %c0_9 = arith.constant 0 : index
    %c0_10 = arith.constant 0 : index
    %c0_11 = arith.constant 0 : index
    %c0_12 = arith.constant 0 : index
    %6 = vector.load %arg5[%c0_9, %c0_10, %c0_11, %c0_12] : memref<1x1x1x8xf32, #tpu.memory_space<vmem>>, vector<1x1x1x8xf32>
    %7 = vector.shape_cast %6 : vector<1x1x1x8xf32> to vector<1x8xf32>
    %c0_13 = arith.constant 0 : index
    %8 = memref.load %arg1[%c0_13] : memref<6xf32, #tpu.memory_space<smem>>
    %c1 = arith.constant 1 : index
    %9 = memref.load %arg1[%c1] : memref<6xf32, #tpu.memory_space<smem>>
    %cst = arith.constant dense<0.000000e+00> : vector<8xf32>
    %10 = vector.multi_reduction <add>, %1, %cst [1] : vector<8x32xf32> to vector<8xf32>
    %11 = vector.shape_cast %10 : vector<8xf32> to vector<8x1xf32>
    %cst_14 = arith.constant 3.200000e+01 : f32
    %12 = vector.broadcast %cst_14 : f32 to vector<8x1xf32>
    %13 = arith.divf %11, %12 : vector<8x1xf32>
    %14 = vector.broadcast %13 : vector<8x1xf32> to vector<8x32xf32>
    %15 = arith.subf %1, %14 : vector<8x32xf32>
    %16 = arith.mulf %15, %15 : vector<8x32xf32>
    %cst_15 = arith.constant dense<0.000000e+00> : vector<8xf32>
    %17 = vector.multi_reduction <add>, %16, %cst_15 [1] : vector<8x32xf32> to vector<8xf32>
    %18 = vector.shape_cast %17 : vector<8xf32> to vector<8x1xf32>
    %cst_16 = arith.constant 0.0322580636 : f32
    %19 = vector.broadcast %cst_16 : f32 to vector<8x1xf32>
    %20 = arith.mulf %18, %19 : vector<8x1xf32>
    %21 = math.sqrt %20 : vector<8x1xf32>
    %cst_17 = arith.constant 9.99999997E-7 : f32
    %22 = vector.broadcast %cst_17 : f32 to vector<8x1xf32>
    %23 = arith.addf %21, %22 : vector<8x1xf32>
    %24 = tpu.reciprocal %23 {approx = true} : vector<8x1xf32> -> vector<8x1xf32>
    %25 = vector.broadcast %13 : vector<8x1xf32> to vector<8x32xf32>
    %26 = arith.subf %1, %25 : vector<8x32xf32>
    %27 = vector.broadcast %8 : f32 to vector<8x1xf32>
    %28 = arith.mulf %27, %24 : vector<8x1xf32>
    %29 = vector.broadcast %28 : vector<8x1xf32> to vector<8x32xf32>
    %30 = arith.mulf %26, %29 : vector<8x32xf32>
    %31 = vector.broadcast %9 : f32 to vector<8x32xf32>
    %32 = arith.addf %30, %31 : vector<8x32xf32>
    %c0_18 = arith.constant 0 : index
    %c0_19 = arith.constant 0 : index
    %c0_20 = arith.constant 0 : index
    %33 = vector.load %arg6[%c0_18, %c0_19, %c0_20] : memref<4x32x8xbf16, #tpu.memory_space<vmem>>, vector<4x32x8xbf16>
    %c0_21 = arith.constant 0 : index
    %c0_22 = arith.constant 0 : index
    %c0_23 = arith.constant 0 : index
    %34 = vector.load %arg7[%c0_21, %c0_22, %c0_23] : memref<4x1x8xf32, #tpu.memory_space<vmem>>, vector<4x1x8xf32>
    %c0_24 = arith.constant 0 : index
    %c0_25 = arith.constant 0 : index
    %c0_26 = arith.constant 0 : index
    %35 = vector.load %arg8[%c0_24, %c0_25, %c0_26] : memref<4x32x8xbf16, #tpu.memory_space<vmem>>, vector<4x32x8xbf16>
    %c0_27 = arith.constant 0 : index
    %c0_28 = arith.constant 0 : index
    %c0_29 = arith.constant 0 : index
    %36 = vector.load %arg9[%c0_27, %c0_28, %c0_29] : memref<4x1x8xf32, #tpu.memory_space<vmem>>, vector<4x1x8xf32>
    %c0_30 = arith.constant 0 : index
    %c0_31 = arith.constant 0 : index
    %c0_32 = arith.constant 0 : index
    %37 = vector.load %arg10[%c0_30, %c0_31, %c0_32] : memref<4x32x8xbf16, #tpu.memory_space<vmem>>, vector<4x32x8xbf16>
    %c0_33 = arith.constant 0 : index
    %c0_34 = arith.constant 0 : index
    %c0_35 = arith.constant 0 : index
    %38 = vector.load %arg11[%c0_33, %c0_34, %c0_35] : memref<4x1x8xf32, #tpu.memory_space<vmem>>, vector<4x1x8xf32>
    %c0_36 = arith.constant 0 : index
    %c0_37 = arith.constant 0 : index
    %c0_38 = arith.constant 0 : index
    %39 = vector.load %arg12[%c0_36, %c0_37, %c0_38] : memref<4x8x32xbf16, #tpu.memory_space<vmem>>, vector<4x8x32xbf16>
    %c0_39 = arith.constant 0 : index
    %c0_40 = arith.constant 0 : index
    %40 = vector.load %arg13[%c0_39, %c0_40] : memref<1x32xf32, #tpu.memory_space<vmem>>, vector<1x32xf32>
    %41 = arith.truncf %32 : vector<8x32xf32> to vector<8x32xbf16>
    %42 = vector.shape_cast %41 : vector<8x32xbf16> to vector<1x8x32xbf16>
    %43 = vector.shape_cast %42 : vector<1x8x32xbf16> to vector<1x8x32xbf16>
    %44 = vector.broadcast %43 : vector<1x8x32xbf16> to vector<4x8x32xbf16>
    %45 = arith.truncf %32 : vector<8x32xf32> to vector<8x32xbf16>
    %46 = vector.shape_cast %45 : vector<8x32xbf16> to vector<1x8x32xbf16>
    %47 = vector.shape_cast %46 : vector<1x8x32xbf16> to vector<1x8x32xbf16>
    %48 = vector.broadcast %47 : vector<1x8x32xbf16> to vector<4x8x32xbf16>
    "tpu.trace_start"() <{level = 10 : i32, message = "hsd,hde->hse"}> : () -> ()
    %cst_41 = arith.constant dense<0.000000e+00> : vector<4x8x8xf32>
    %49 = tpu.matmul %44, %33, %cst_41 {dimension_numbers = #tpu.dot_dimension_numbers<[2], [1], [1], [2], [0, 0, 0, 1, 1, 2], [0], [0]>} : vector<4x8x32xbf16>, vector<4x32x8xbf16>, vector<4x8x8xf32> -> vector<4x8x8xf32>
    "tpu.trace_stop"() : () -> ()
    %50 = vector.broadcast %34 : vector<4x1x8xf32> to vector<4x8x8xf32>
    %51 = arith.addf %49, %50 : vector<4x8x8xf32>
    "tpu.trace_start"() <{level = 10 : i32, message = "hsd,hde->hse"}> : () -> ()
    %cst_42 = arith.constant dense<0.000000e+00> : vector<4x8x8xf32>
    %52 = tpu.matmul %48, %35, %cst_42 {dimension_numbers = #tpu.dot_dimension_numbers<[2], [1], [1], [2], [0, 0, 0, 1, 1, 2], [0], [0]>} : vector<4x8x32xbf16>, vector<4x32x8xbf16>, vector<4x8x8xf32> -> vector<4x8x8xf32>
    "tpu.trace_stop"() : () -> ()
    %53 = vector.broadcast %36 : vector<4x1x8xf32> to vector<4x8x8xf32>
    %54 = arith.addf %52, %53 : vector<4x8x8xf32>
    "tpu.trace_start"() <{level = 10 : i32, message = "hsd,hde->hse"}> : () -> ()
    %cst_43 = arith.constant dense<0.000000e+00> : vector<4x8x8xf32>
    %55 = tpu.matmul %48, %37, %cst_43 {dimension_numbers = #tpu.dot_dimension_numbers<[2], [1], [1], [2], [0, 0, 0, 1, 1, 2], [0], [0]>} : vector<4x8x32xbf16>, vector<4x32x8xbf16>, vector<4x8x8xf32> -> vector<4x8x8xf32>
    "tpu.trace_stop"() : () -> ()
    %56 = vector.broadcast %38 : vector<4x1x8xf32> to vector<4x8x8xf32>
    %57 = arith.addf %55, %56 : vector<4x8x8xf32>
    %58 = arith.truncf %51 : vector<4x8x8xf32> to vector<4x8x8xbf16>
    %59 = arith.truncf %54 : vector<4x8x8xf32> to vector<4x8x8xbf16>
    "tpu.trace_start"() <{level = 10 : i32, message = "hqe,hke->hqk"}> : () -> ()
    %cst_44 = arith.constant dense<0.000000e+00> : vector<4x8x8xf32>
    %60 = tpu.matmul %58, %59, %cst_44 {dimension_numbers = #tpu.dot_dimension_numbers<[2], [2], [1], [1], [0, 0, 0, 1, 1, 1], [0], [0]>} : vector<4x8x8xbf16>, vector<4x8x8xbf16>, vector<4x8x8xf32> -> vector<4x8x8xf32>
    %cst_45 = arith.constant 0.000000e+00 : f32
    "tpu.trace_stop"() : () -> ()
    %61 = vector.broadcast %cst_45 : f32 to vector<8x8xf32>
    %62 = arith.cmpf oeq, %5, %61 : vector<8x8xf32>
    %cst_46 = arith.constant -1.000000e+09 : f32
    %63 = vector.shape_cast %62 : vector<8x8xi1> to vector<1x8x8xi1>
    %64 = vector.broadcast %63 : vector<1x8x8xi1> to vector<4x8x8xi1>
    %65 = vector.broadcast %cst_46 : f32 to vector<4x8x8xf32>
    %66 = arith.select %64, %65, %60 : vector<4x8x8xi1>, vector<4x8x8xf32>
    %cst_47 = arith.constant dense<0xFF800000> : vector<4x8xf32>
    %67 = vector.multi_reduction <maximumf>, %66, %cst_47 [2] : vector<4x8x8xf32> to vector<4x8xf32>
    %68 = vector.shape_cast %67 : vector<4x8xf32> to vector<4x8x1xf32>
    %69 = vector.broadcast %68 : vector<4x8x1xf32> to vector<4x8x8xf32>
    %70 = arith.subf %66, %69 : vector<4x8x8xf32>
    %71 = math.exp %70 : vector<4x8x8xf32>
    %cst_48 = arith.constant dense<0.000000e+00> : vector<4x8xf32>
    %72 = vector.multi_reduction <add>, %71, %cst_48 [2] : vector<4x8x8xf32> to vector<4x8xf32>
    %73 = vector.shape_cast %72 : vector<4x8xf32> to vector<4x8x1xf32>
    %74 = tpu.reciprocal %73 {approx = true} : vector<4x8x1xf32> -> vector<4x8x1xf32>
    %75 = vector.broadcast %74 : vector<4x8x1xf32> to vector<4x8x8xf32>
    %76 = arith.mulf %71, %75 : vector<4x8x8xf32>
    %77 = arith.truncf %76 : vector<4x8x8xf32> to vector<4x8x8xbf16>
    %78 = arith.truncf %57 : vector<4x8x8xf32> to vector<4x8x8xbf16>
    "tpu.trace_start"() <{level = 10 : i32, message = "hqk,hke->hqe"}> : () -> ()
    %cst_49 = arith.constant dense<0.000000e+00> : vector<4x8x8xf32>
    %79 = tpu.matmul %77, %78, %cst_49 {dimension_numbers = #tpu.dot_dimension_numbers<[2], [1], [1], [2], [0, 0, 0, 1, 1, 2], [0], [0]>} : vector<4x8x8xbf16>, vector<4x8x8xbf16>, vector<4x8x8xf32> -> vector<4x8x8xf32>
    "tpu.trace_stop"() : () -> ()
    %80 = arith.truncf %79 : vector<4x8x8xf32> to vector<4x8x8xbf16>
    "tpu.trace_start"() <{level = 10 : i32, message = "hqe,hed->hqd"}> : () -> ()
    %cst_50 = arith.constant dense<0.000000e+00> : vector<4x8x32xf32>
    %81 = tpu.matmul %80, %39, %cst_50 {dimension_numbers = #tpu.dot_dimension_numbers<[2], [1], [1], [2], [0, 0, 0, 1, 1, 2], [0], [0]>} : vector<4x8x8xbf16>, vector<4x8x32xbf16>, vector<4x8x32xf32> -> vector<4x8x32xf32>
    "tpu.trace_stop"() : () -> ()
    %cst_51 = arith.constant dense<0.000000e+00> : vector<8x32xf32>
    %82 = vector.multi_reduction <add>, %81, %cst_51 [0] : vector<4x8x32xf32> to vector<8x32xf32>
    %83 = vector.broadcast %40 : vector<1x32xf32> to vector<8x32xf32>
    %84 = arith.addf %82, %83 : vector<8x32xf32>
    %85 = arith.addf %1, %84 : vector<8x32xf32>
    %c2 = arith.constant 2 : index
    %86 = memref.load %arg1[%c2] : memref<6xf32, #tpu.memory_space<smem>>
    %c3 = arith.constant 3 : index
    %87 = memref.load %arg1[%c3] : memref<6xf32, #tpu.memory_space<smem>>
    %cst_52 = arith.constant dense<0.000000e+00> : vector<8xf32>
    %88 = vector.multi_reduction <add>, %85, %cst_52 [1] : vector<8x32xf32> to vector<8xf32>
    %89 = vector.shape_cast %88 : vector<8xf32> to vector<8x1xf32>
    %cst_53 = arith.constant 3.200000e+01 : f32
    %90 = vector.broadcast %cst_53 : f32 to vector<8x1xf32>
    %91 = arith.divf %89, %90 : vector<8x1xf32>
    %92 = vector.broadcast %91 : vector<8x1xf32> to vector<8x32xf32>
    %93 = arith.subf %85, %92 : vector<8x32xf32>
    %94 = arith.mulf %93, %93 : vector<8x32xf32>
    %cst_54 = arith.constant dense<0.000000e+00> : vector<8xf32>
    %95 = vector.multi_reduction <add>, %94, %cst_54 [1] : vector<8x32xf32> to vector<8xf32>
    %96 = vector.shape_cast %95 : vector<8xf32> to vector<8x1xf32>
    %cst_55 = arith.constant 0.0322580636 : f32
    %97 = vector.broadcast %cst_55 : f32 to vector<8x1xf32>
    %98 = arith.mulf %96, %97 : vector<8x1xf32>
    %99 = math.sqrt %98 : vector<8x1xf32>
    %cst_56 = arith.constant 9.99999997E-7 : f32
    %100 = vector.broadcast %cst_56 : f32 to vector<8x1xf32>
    %101 = arith.addf %99, %100 : vector<8x1xf32>
    %102 = tpu.reciprocal %101 {approx = true} : vector<8x1xf32> -> vector<8x1xf32>
    %103 = vector.broadcast %91 : vector<8x1xf32> to vector<8x32xf32>
    %104 = arith.subf %85, %103 : vector<8x32xf32>
    %105 = vector.broadcast %86 : f32 to vector<8x1xf32>
    %106 = arith.mulf %105, %102 : vector<8x1xf32>
    %107 = vector.broadcast %106 : vector<8x1xf32> to vector<8x32xf32>
    %108 = arith.mulf %104, %107 : vector<8x32xf32>
    %109 = vector.broadcast %87 : f32 to vector<8x32xf32>
    %110 = arith.addf %108, %109 : vector<8x32xf32>
    %c0_57 = arith.constant 0 : index
    %c0_58 = arith.constant 0 : index
    %c0_59 = arith.constant 0 : index
    %111 = vector.load %arg14[%c0_57, %c0_58, %c0_59] : memref<4x32x8xbf16, #tpu.memory_space<vmem>>, vector<4x32x8xbf16>
    %c0_60 = arith.constant 0 : index
    %c0_61 = arith.constant 0 : index
    %c0_62 = arith.constant 0 : index
    %112 = vector.load %arg15[%c0_60, %c0_61, %c0_62] : memref<4x1x8xf32, #tpu.memory_space<vmem>>, vector<4x1x8xf32>
    %c0_63 = arith.constant 0 : index
    %c0_64 = arith.constant 0 : index
    %c0_65 = arith.constant 0 : index
    %113 = vector.load %arg16[%c0_63, %c0_64, %c0_65] : memref<4x32x8xbf16, #tpu.memory_space<vmem>>, vector<4x32x8xbf16>
    %c0_66 = arith.constant 0 : index
    %c0_67 = arith.constant 0 : index
    %c0_68 = arith.constant 0 : index
    %114 = vector.load %arg17[%c0_66, %c0_67, %c0_68] : memref<4x1x8xf32, #tpu.memory_space<vmem>>, vector<4x1x8xf32>
    %c0_69 = arith.constant 0 : index
    %c0_70 = arith.constant 0 : index
    %c0_71 = arith.constant 0 : index
    %115 = vector.load %arg18[%c0_69, %c0_70, %c0_71] : memref<4x32x8xbf16, #tpu.memory_space<vmem>>, vector<4x32x8xbf16>
    %c0_72 = arith.constant 0 : index
    %c0_73 = arith.constant 0 : index
    %c0_74 = arith.constant 0 : index
    %116 = vector.load %arg19[%c0_72, %c0_73, %c0_74] : memref<4x1x8xf32, #tpu.memory_space<vmem>>, vector<4x1x8xf32>
    %c0_75 = arith.constant 0 : index
    %c0_76 = arith.constant 0 : index
    %c0_77 = arith.constant 0 : index
    %117 = vector.load %arg20[%c0_75, %c0_76, %c0_77] : memref<4x8x32xbf16, #tpu.memory_space<vmem>>, vector<4x8x32xbf16>
    %c0_78 = arith.constant 0 : index
    %c0_79 = arith.constant 0 : index
    %118 = vector.load %arg21[%c0_78, %c0_79] : memref<1x32xf32, #tpu.memory_space<vmem>>, vector<1x32xf32>
    %119 = arith.truncf %110 : vector<8x32xf32> to vector<8x32xbf16>
    %120 = vector.shape_cast %119 : vector<8x32xbf16> to vector<1x8x32xbf16>
    %121 = vector.shape_cast %120 : vector<1x8x32xbf16> to vector<1x8x32xbf16>
    %122 = vector.broadcast %121 : vector<1x8x32xbf16> to vector<4x8x32xbf16>
    %123 = arith.truncf %3 : vector<8x32xf32> to vector<8x32xbf16>
    %124 = vector.shape_cast %123 : vector<8x32xbf16> to vector<1x8x32xbf16>
    %125 = vector.shape_cast %124 : vector<1x8x32xbf16> to vector<1x8x32xbf16>
    %126 = vector.broadcast %125 : vector<1x8x32xbf16> to vector<4x8x32xbf16>
    "tpu.trace_start"() <{level = 10 : i32, message = "hsd,hde->hse"}> : () -> ()
    %cst_80 = arith.constant dense<0.000000e+00> : vector<4x8x8xf32>
    %127 = tpu.matmul %122, %111, %cst_80 {dimension_numbers = #tpu.dot_dimension_numbers<[2], [1], [1], [2], [0, 0, 0, 1, 1, 2], [0], [0]>} : vector<4x8x32xbf16>, vector<4x32x8xbf16>, vector<4x8x8xf32> -> vector<4x8x8xf32>
    "tpu.trace_stop"() : () -> ()
    %128 = vector.broadcast %112 : vector<4x1x8xf32> to vector<4x8x8xf32>
    %129 = arith.addf %127, %128 : vector<4x8x8xf32>
    "tpu.trace_start"() <{level = 10 : i32, message = "hsd,hde->hse"}> : () -> ()
    %cst_81 = arith.constant dense<0.000000e+00> : vector<4x8x8xf32>
    %130 = tpu.matmul %126, %113, %cst_81 {dimension_numbers = #tpu.dot_dimension_numbers<[2], [1], [1], [2], [0, 0, 0, 1, 1, 2], [0], [0]>} : vector<4x8x32xbf16>, vector<4x32x8xbf16>, vector<4x8x8xf32> -> vector<4x8x8xf32>
    "tpu.trace_stop"() : () -> ()
    %131 = vector.broadcast %114 : vector<4x1x8xf32> to vector<4x8x8xf32>
    %132 = arith.addf %130, %131 : vector<4x8x8xf32>
    "tpu.trace_start"() <{level = 10 : i32, message = "hsd,hde->hse"}> : () -> ()
    %cst_82 = arith.constant dense<0.000000e+00> : vector<4x8x8xf32>
    %133 = tpu.matmul %126, %115, %cst_82 {dimension_numbers = #tpu.dot_dimension_numbers<[2], [1], [1], [2], [0, 0, 0, 1, 1, 2], [0], [0]>} : vector<4x8x32xbf16>, vector<4x32x8xbf16>, vector<4x8x8xf32> -> vector<4x8x8xf32>
    "tpu.trace_stop"() : () -> ()
    %134 = vector.broadcast %116 : vector<4x1x8xf32> to vector<4x8x8xf32>
    %135 = arith.addf %133, %134 : vector<4x8x8xf32>
    %136 = arith.truncf %129 : vector<4x8x8xf32> to vector<4x8x8xbf16>
    %137 = arith.truncf %132 : vector<4x8x8xf32> to vector<4x8x8xbf16>
    "tpu.trace_start"() <{level = 10 : i32, message = "hqe,hke->hqk"}> : () -> ()
    %cst_83 = arith.constant dense<0.000000e+00> : vector<4x8x8xf32>
    %138 = tpu.matmul %136, %137, %cst_83 {dimension_numbers = #tpu.dot_dimension_numbers<[2], [2], [1], [1], [0, 0, 0, 1, 1, 1], [0], [0]>} : vector<4x8x8xbf16>, vector<4x8x8xbf16>, vector<4x8x8xf32> -> vector<4x8x8xf32>
    %cst_84 = arith.constant 0.000000e+00 : f32
    "tpu.trace_stop"() : () -> ()
    %139 = vector.broadcast %cst_84 : f32 to vector<1x8xf32>
    %140 = arith.cmpf oeq, %7, %139 : vector<1x8xf32>
    %cst_85 = arith.constant -1.000000e+09 : f32
    %141 = vector.shape_cast %140 : vector<1x8xi1> to vector<1x1x8xi1>
    %142 = vector.broadcast %141 : vector<1x1x8xi1> to vector<4x8x8xi1>
    %143 = vector.broadcast %cst_85 : f32 to vector<4x8x8xf32>
    %144 = arith.select %142, %143, %138 : vector<4x8x8xi1>, vector<4x8x8xf32>
    %cst_86 = arith.constant dense<0xFF800000> : vector<4x8xf32>
    %145 = vector.multi_reduction <maximumf>, %144, %cst_86 [2] : vector<4x8x8xf32> to vector<4x8xf32>
    %146 = vector.shape_cast %145 : vector<4x8xf32> to vector<4x8x1xf32>
    %147 = vector.broadcast %146 : vector<4x8x1xf32> to vector<4x8x8xf32>
    %148 = arith.subf %144, %147 : vector<4x8x8xf32>
    %149 = math.exp %148 : vector<4x8x8xf32>
    %cst_87 = arith.constant dense<0.000000e+00> : vector<4x8xf32>
    %150 = vector.multi_reduction <add>, %149, %cst_87 [2] : vector<4x8x8xf32> to vector<4x8xf32>
    %151 = vector.shape_cast %150 : vector<4x8xf32> to vector<4x8x1xf32>
    %152 = tpu.reciprocal %151 {approx = true} : vector<4x8x1xf32> -> vector<4x8x1xf32>
    %153 = vector.broadcast %152 : vector<4x8x1xf32> to vector<4x8x8xf32>
    %154 = arith.mulf %149, %153 : vector<4x8x8xf32>
    %155 = arith.truncf %154 : vector<4x8x8xf32> to vector<4x8x8xbf16>
    %156 = arith.truncf %135 : vector<4x8x8xf32> to vector<4x8x8xbf16>
    "tpu.trace_start"() <{level = 10 : i32, message = "hqk,hke->hqe"}> : () -> ()
    %cst_88 = arith.constant dense<0.000000e+00> : vector<4x8x8xf32>
    %157 = tpu.matmul %155, %156, %cst_88 {dimension_numbers = #tpu.dot_dimension_numbers<[2], [1], [1], [2], [0, 0, 0, 1, 1, 2], [0], [0]>} : vector<4x8x8xbf16>, vector<4x8x8xbf16>, vector<4x8x8xf32> -> vector<4x8x8xf32>
    "tpu.trace_stop"() : () -> ()
    %158 = arith.truncf %157 : vector<4x8x8xf32> to vector<4x8x8xbf16>
    "tpu.trace_start"() <{level = 10 : i32, message = "hqe,hed->hqd"}> : () -> ()
    %cst_89 = arith.constant dense<0.000000e+00> : vector<4x8x32xf32>
    %159 = tpu.matmul %158, %117, %cst_89 {dimension_numbers = #tpu.dot_dimension_numbers<[2], [1], [1], [2], [0, 0, 0, 1, 1, 2], [0], [0]>} : vector<4x8x8xbf16>, vector<4x8x32xbf16>, vector<4x8x32xf32> -> vector<4x8x32xf32>
    "tpu.trace_stop"() : () -> ()
    %cst_90 = arith.constant dense<0.000000e+00> : vector<8x32xf32>
    %160 = vector.multi_reduction <add>, %159, %cst_90 [0] : vector<4x8x32xf32> to vector<8x32xf32>
    %161 = vector.broadcast %118 : vector<1x32xf32> to vector<8x32xf32>
    %162 = arith.addf %160, %161 : vector<8x32xf32>
    %163 = arith.addf %85, %162 : vector<8x32xf32>
    %c4 = arith.constant 4 : index
    %164 = memref.load %arg1[%c4] : memref<6xf32, #tpu.memory_space<smem>>
    %c5 = arith.constant 5 : index
    %165 = memref.load %arg1[%c5] : memref<6xf32, #tpu.memory_space<smem>>
    %cst_91 = arith.constant dense<0.000000e+00> : vector<8xf32>
    %166 = vector.multi_reduction <add>, %163, %cst_91 [1] : vector<8x32xf32> to vector<8xf32>
    %167 = vector.shape_cast %166 : vector<8xf32> to vector<8x1xf32>
    %cst_92 = arith.constant 3.200000e+01 : f32
    %168 = vector.broadcast %cst_92 : f32 to vector<8x1xf32>
    %169 = arith.divf %167, %168 : vector<8x1xf32>
    %170 = vector.broadcast %169 : vector<8x1xf32> to vector<8x32xf32>
    %171 = arith.subf %163, %170 : vector<8x32xf32>
    %172 = arith.mulf %171, %171 : vector<8x32xf32>
    %cst_93 = arith.constant dense<0.000000e+00> : vector<8xf32>
    %173 = vector.multi_reduction <add>, %172, %cst_93 [1] : vector<8x32xf32> to vector<8xf32>
    %174 = vector.shape_cast %173 : vector<8xf32> to vector<8x1xf32>
    %cst_94 = arith.constant 0.0322580636 : f32
    %175 = vector.broadcast %cst_94 : f32 to vector<8x1xf32>
    %176 = arith.mulf %174, %175 : vector<8x1xf32>
    %177 = math.sqrt %176 : vector<8x1xf32>
    %cst_95 = arith.constant 9.99999997E-7 : f32
    %178 = vector.broadcast %cst_95 : f32 to vector<8x1xf32>
    %179 = arith.addf %177, %178 : vector<8x1xf32>
    %180 = tpu.reciprocal %179 {approx = true} : vector<8x1xf32> -> vector<8x1xf32>
    %181 = vector.broadcast %169 : vector<8x1xf32> to vector<8x32xf32>
    %182 = arith.subf %163, %181 : vector<8x32xf32>
    %183 = vector.broadcast %164 : f32 to vector<8x1xf32>
    %184 = arith.mulf %183, %180 : vector<8x1xf32>
    %185 = vector.broadcast %184 : vector<8x1xf32> to vector<8x32xf32>
    %186 = arith.mulf %182, %185 : vector<8x32xf32>
    %187 = vector.broadcast %165 : f32 to vector<8x32xf32>
    %188 = arith.addf %186, %187 : vector<8x32xf32>
    %189 = arith.truncf %188 : vector<8x32xf32> to vector<8x32xbf16>
    %c0_96 = arith.constant 0 : index
    %c0_97 = arith.constant 0 : index
    %190 = vector.load %arg22[%c0_96, %c0_97] : memref<32x64xbf16, #tpu.memory_space<vmem>>, vector<32x64xbf16>
    %cst_98 = arith.constant dense<0.000000e+00> : vector<8x64xf32>
    %191 = tpu.matmul %189, %190, %cst_98 {dimension_numbers = #tpu.dot_dimension_numbers<[1], [0], [0], [1], [0, 0, 1, 1], [], []>} : vector<8x32xbf16>, vector<32x64xbf16>, vector<8x64xf32> -> vector<8x64xf32>
    %c0_99 = arith.constant 0 : index
    %c0_100 = arith.constant 0 : index
    %192 = vector.load %arg23[%c0_99, %c0_100] : memref<1x64xf32, #tpu.memory_space<vmem>>, vector<1x64xf32>
    %193 = vector.broadcast %192 : vector<1x64xf32> to vector<8x64xf32>
    %194 = arith.addf %191, %193 : vector<8x64xf32>
    %cst_101 = arith.constant 0.000000e+00 : f32
    %195 = vector.broadcast %cst_101 : f32 to vector<8x64xf32>
    %196 = arith.maximumf %194, %195 : vector<8x64xf32>
    %197 = arith.truncf %196 : vector<8x64xf32> to vector<8x64xbf16>
    %c0_102 = arith.constant 0 : index
    %c0_103 = arith.constant 0 : index
    %198 = vector.load %arg24[%c0_102, %c0_103] : memref<64x32xbf16, #tpu.memory_space<vmem>>, vector<64x32xbf16>
    %cst_104 = arith.constant dense<0.000000e+00> : vector<8x32xf32>
    %199 = tpu.matmul %197, %198, %cst_104 {dimension_numbers = #tpu.dot_dimension_numbers<[1], [0], [0], [1], [0, 0, 1, 1], [], []>} : vector<8x64xbf16>, vector<64x32xbf16>, vector<8x32xf32> -> vector<8x32xf32>
    %c0_105 = arith.constant 0 : index
    %c0_106 = arith.constant 0 : index
    %200 = vector.load %arg25[%c0_105, %c0_106] : memref<1x32xf32, #tpu.memory_space<vmem>>, vector<1x32xf32>
    %201 = vector.broadcast %200 : vector<1x32xf32> to vector<8x32xf32>
    %202 = arith.addf %199, %201 : vector<8x32xf32>
    %203 = arith.addf %163, %202 : vector<8x32xf32>
    %c0_107 = arith.constant 0 : index
    %c0_108 = arith.constant 0 : index
    %c0_109 = arith.constant 0 : index
    %204 = vector.load %arg26[%c0_107, %c0_108, %c0_109] : memref<1x8x32xf32, #tpu.memory_space<vmem>>, vector<1x8x32xf32>
    %205 = vector.shape_cast %204 : vector<1x8x32xf32> to vector<8x32xf32>
    %206 = vector.shape_cast %203 : vector<8x32xf32> to vector<1x8x32xf32>
    tpu.vector_store %arg26[%c0_107, %c0_108, %c0_109], %206 {strides = array<i32>} : memref<1x8x32xf32, #tpu.memory_space<vmem>>, vector<1x8x32xf32>,
    return
  }
  func.func @transform_0(%arg0: i32) -> i32 {
    %c0_i32 = arith.constant 0 : i32
    %c0_i32_0 = arith.constant 0 : i32
    return %c0_i32 : i32
  }
  func.func @transform_1(%arg0: i32) -> (i32, i32, i32) {
    %c0_i32 = arith.constant 0 : i32
    %c0_i32_0 = arith.constant 0 : i32
    %c0_i32_1 = arith.constant 0 : i32
    return %arg0, %c0_i32, %c0_i32_0 : i32, i32, i32
  }
  func.func @transform_2(%arg0: i32) -> (i32, i32, i32) {
    %c0_i32 = arith.constant 0 : i32
    %c0_i32_0 = arith.constant 0 : i32
    %c0_i32_1 = arith.constant 0 : i32
    return %arg0, %c0_i32, %c0_i32_0 : i32, i32, i32
  }
  func.func @transform_3(%arg0: i32) -> (i32, i32, i32, i32) {
    %c0_i32 = arith.constant 0 : i32
    %c0_i32_0 = arith.constant 0 : i32
    %c0_i32_1 = arith.constant 0 : i32
    %c0_i32_2 = arith.constant 0 : i32
    return %arg0, %c0_i32, %c0_i32_0, %c0_i32_1 : i32, i32, i32, i32
  }
  func.func @transform_4(%arg0: i32) -> (i32, i32, i32, i32) {
    %c0_i32 = arith.constant 0 : i32
    %c0_i32_0 = arith.constant 0 : i32
    %c0_i32_1 = arith.constant 0 : i32
    %c0_i32_2 = arith.constant 0 : i32
    return %arg0, %c0_i32, %c0_i32_0, %c0_i32_1 : i32, i32, i32, i32
  }
  func.func @transform_5(%arg0: i32) -> (i32, i32, i32) {
    %c0_i32 = arith.constant 0 : i32
    %c0_i32_0 = arith.constant 0 : i32
    %c0_i32_1 = arith.constant 0 : i32
    %c0_i32_2 = arith.constant 0 : i32
    return %c0_i32, %c0_i32_0, %c0_i32_1 : i32, i32, i32
  }
  func.func @transform_6(%arg0: i32) -> (i32, i32, i32) {
    %c0_i32 = arith.constant 0 : i32
    %c0_i32_0 = arith.constant 0 : i32
    %c0_i32_1 = arith.constant 0 : i32
    %c0_i32_2 = arith.constant 0 : i32
    return %c0_i32, %c0_i32_0, %c0_i32_1 : i32, i32, i32
  }
  func.func @transform_7(%arg0: i32) -> (i32, i32, i32) {
    %c0_i32 = arith.constant 0 : i32
    %c0_i32_0 = arith.constant 0 : i32
    %c0_i32_1 = arith.constant 0 : i32
    %c0_i32_2 = arith.constant 0 : i32
    return %c0_i32, %c0_i32_0, %c0_i32_1 : i32, i32, i32
  }
  func.func @transform_8(%arg0: i32) -> (i32, i32, i32) {
    %c0_i32 = arith.constant 0 : i32
    %c0_i32_0 = arith.constant 0 : i32
    %c0_i32_1 = arith.constant 0 : i32
    %c0_i32_2 = arith.constant 0 : i32
    return %c0_i32, %c0_i32_0, %c0_i32_1 : i32, i32, i32
  }
  func.func @transform_9(%arg0: i32) -> (i32, i32, i32) {
    %c0_i32 = arith.constant 0 : i32
    %c0_i32_0 = arith.constant 0 : i32
    %c0_i32_1 = arith.constant 0 : i32
    %c0_i32_2 = arith.constant 0 : i32
    return %c0_i32, %c0_i32_0, %c0_i32_1 : i32, i32, i32
  }
  func.func @transform_10(%arg0: i32) -> (i32, i32, i32) {
    %c0_i32 = arith.constant 0 : i32
    %c0_i32_0 = arith.constant 0 : i32
    %c0_i32_1 = arith.constant 0 : i32
    %c0_i32_2 = arith.constant 0 : i32
    return %c0_i32, %c0_i32_0, %c0_i32_1 : i32, i32, i32
  }
  func.func @transform_11(%arg0: i32) -> (i32, i32, i32) {
    %c0_i32 = arith.constant 0 : i32
    %c0_i32_0 = arith.constant 0 : i32
    %c0_i32_1 = arith.constant 0 : i32
    %c0_i32_2 = arith.constant 0 : i32
    return %c0_i32, %c0_i32_0, %c0_i32_1 : i32, i32, i32
  }
  func.func @transform_12(%arg0: i32) -> (i32, i32) {
    %c0_i32 = arith.constant 0 : i32
    %c0_i32_0 = arith.constant 0 : i32
    %c0_i32_1 = arith.constant 0 : i32
    return %c0_i32, %c0_i32_0 : i32, i32
  }
  func.func @transform_13(%arg0: i32) -> (i32, i32, i32) {
    %c0_i32 = arith.constant 0 : i32
    %c0_i32_0 = arith.constant 0 : i32
    %c0_i32_1 = arith.constant 0 : i32
    %c0_i32_2 = arith.constant 0 : i32
    return %c0_i32, %c0_i32_0, %c0_i32_1 : i32, i32, i32
  }
  func.func @transform_14(%arg0: i32) -> (i32, i32, i32) {
    %c0_i32 = arith.constant 0 : i32
    %c0_i32_0 = arith.constant 0 : i32
    %c0_i32_1 = arith.constant 0 : i32
    %c0_i32_2 = arith.constant 0 : i32
    return %c0_i32, %c0_i32_0, %c0_i32_1 : i32, i32, i32
  }
  func.func @transform_15(%arg0: i32) -> (i32, i32, i32) {
    %c0_i32 = arith.constant 0 : i32
    %c0_i32_0 = arith.constant 0 : i32
    %c0_i32_1 = arith.constant 0 : i32
    %c0_i32_2 = arith.constant 0 : i32
    return %c0_i32, %c0_i32_0, %c0_i32_1 : i32, i32, i32
  }
  func.func @transform_16(%arg0: i32) -> (i32, i32, i32) {
    %c0_i32 = arith.constant 0 : i32
    %c0_i32_0 = arith.constant 0 : i32
    %c0_i32_1 = arith.constant 0 : i32
    %c0_i32_2 = arith.constant 0 : i32
    return %c0_i32, %c0_i32_0, %c0_i32_1 : i32, i32, i32
  }
  func.func @transform_17(%arg0: i32) -> (i32, i32, i32) {
    %c0_i32 = arith.constant 0 : i32
    %c0_i32_0 = arith.constant 0 : i32
    %c0_i32_1 = arith.constant 0 : i32
    %c0_i32_2 = arith.constant 0 : i32
    return %c0_i32, %c0_i32_0, %c0_i32_1 : i32, i32, i32
  }
  func.func @transform_18(%arg0: i32) -> (i32, i32, i32) {
    %c0_i32 = arith.constant 0 : i32
    %c0_i32_0 = arith.constant 0 : i32
    %c0_i32_1 = arith.constant 0 : i32
    %c0_i32_2 = arith.constant 0 : i32
    return %c0_i32, %c0_i32_0, %c0_i32_1 : i32, i32, i32
  }
  func.func @transform_19(%arg0: i32) -> (i32, i32, i32) {
    %c0_i32 = arith.constant 0 : i32
    %c0_i32_0 = arith.constant 0 : i32
    %c0_i32_1 = arith.constant 0 : i32
    %c0_i32_2 = arith.constant 0 : i32
    return %c0_i32, %c0_i32_0, %c0_i32_1 : i32, i32, i32
  }
  func.func @transform_20(%arg0: i32) -> (i32, i32) {
    %c0_i32 = arith.constant 0 : i32
    %c0_i32_0 = arith.constant 0 : i32
    %c0_i32_1 = arith.constant 0 : i32
    return %c0_i32, %c0_i32_0 : i32, i32
  }
  func.func @transform_21(%arg0: i32) -> (i32, i32) {
    %c0_i32 = arith.constant 0 : i32
    %c0_i32_0 = arith.constant 0 : i32
    %c0_i32_1 = arith.constant 0 : i32
    return %c0_i32, %c0_i32_0 : i32, i32
  }
  func.func @transform_22(%arg0: i32) -> (i32, i32) {
    %c0_i32 = arith.constant 0 : i32
    %c0_i32_0 = arith.constant 0 : i32
    %c0_i32_1 = arith.constant 0 : i32
    return %c0_i32, %c0_i32_0 : i32, i32
  }
  func.func @transform_23(%arg0: i32) -> (i32, i32) {
    %c0_i32 = arith.constant 0 : i32
    %c0_i32_0 = arith.constant 0 : i32
    %c0_i32_1 = arith.constant 0 : i32
    return %c0_i32, %c0_i32_0 : i32, i32
  }
  func.func @transform_24(%arg0: i32) -> (i32, i32) {
    %c0_i32 = arith.constant 0 : i32
    %c0_i32_0 = arith.constant 0 : i32
    %c0_i32_1 = arith.constant 0 : i32
    return %c0_i32, %c0_i32_0 : i32, i32
  }
  func.func @transform_25(%arg0: i32) -> (i32, i32, i32) {
    %c0_i32 = arith.constant 0 : i32
    %c0_i32_0 = arith.constant 0 : i32
    %c0_i32_1 = arith.constant 0 : i32
    return %arg0, %c0_i32, %c0_i32_0 : i32, i32, i32
  }
}

</mosaic_0001>

<llo_original>
// kernel: tpu_custom_call.1
$region0: #{tpu_custom_call.1}
  #allocation0 [shape = 'u32[]', space=smem, size = 0x4, offset = 0x4, fixed_abs, tag = 'smem constant byte address 0x4 - core index']
  #allocation1 [shape = 'u32[144,128]{1,0:T(1,128)}', space=vmem, size = 0x12000, scoped, tag = 'internal scratch']
  %s0 = inlined_call_operand.vmem [shape: f32[6], index: 0, kind: input, shape index: {}]
  %s1 = inlined_call_operand.hbm [shape: f32[2,8,32], index: 1, kind: input, shape index: {}, may-alias: {1,25}]
  %s2 = inlined_call_operand.vmem [shape: f32[2,8,32], index: 2, kind: input, shape index: {}]
  %s3 = inlined_call_operand.vmem [shape: f32[2,1,8,8], index: 3, kind: input, shape index: {}]
  %s4 = inlined_call_operand.vmem [shape: f32[2,1,1,8], index: 4, kind: input, shape index: {}]
  %s5 = inlined_call_operand.vmem [shape: bf16[4,32,8], index: 5, kind: input, shape index: {}]
  %s6 = inlined_call_operand.vmem [shape: f32[4,1,8], index: 6, kind: input, shape index: {}]
  %s7 = inlined_call_operand.vmem [shape: bf16[4,32,8], index: 7, kind: input, shape index: {}]
  %s8 = inlined_call_operand.vmem [shape: f32[4,1,8], index: 8, kind: input, shape index: {}]
  %s9 = inlined_call_operand.vmem [shape: bf16[4,32,8], index: 9, kind: input, shape index: {}]
  %s10 = inlined_call_operand.vmem [shape: f32[4,1,8], index: 10, kind: input, shape index: {}]
  %s11 = inlined_call_operand.vmem [shape: bf16[4,8,32], index: 11, kind: input, shape index: {}]
  %s12 = inlined_call_operand.vmem [shape: f32[1,32], index: 12, kind: input, shape index: {}]
  %s13 = inlined_call_operand.vmem [shape: bf16[4,32,8], index: 13, kind: input, shape index: {}]
  %s14 = inlined_call_operand.vmem [shape: f32[4,1,8], index: 14, kind: input, shape index: {}]
  %s15 = inlined_call_operand.vmem [shape: bf16[4,32,8], index: 15, kind: input, shape index: {}]
  %s16 = inlined_call_operand.vmem [shape: f32[4,1,8], index: 16, kind: input, shape index: {}]
  %s17 = inlined_call_operand.vmem [shape: bf16[4,32,8], index: 17, kind: input, shape index: {}]
  %s18 = inlined_call_operand.vmem [shape: f32[4,1,8], index: 18, kind: input, shape index: {}]
  %s19 = inlined_call_operand.vmem [shape: bf16[4,8,32], index: 19, kind: input, shape index: {}]
  %s20 = inlined_call_operand.vmem [shape: f32[1,32], index: 20, kind: input, shape index: {}]
  %s21 = inlined_call_operand.vmem [shape: bf16[32,64], index: 21, kind: input, shape index: {}]
  %s22 = inlined_call_operand.vmem [shape: f32[1,64], index: 22, kind: input, shape index: {}]
  %s23 = inlined_call_operand.vmem [shape: bf16[64,32], index: 23, kind: input, shape index: {}]
  %s24 = inlined_call_operand.vmem [shape: f32[1,32], index: 24, kind: input, shape index: {}]
  %s25 = inlined_call_operand.hbm [shape: f32[2,8,32], index: 25, kind: output, shape index: {}, may-alias: {1,25}]
  %s26 = sld [smem:[#allocation0]]
  $region141: #{tpu_custom_call.1} parent=0
    _
  %s28 = ssub.s32 1, %s26
  %s29 = scalar_select 0, %s28, %s26
  $region1: #{tpu_custom_call.1} parent=0
    #allocation2 [shape = 'u8[512]{0}', space=smem, size = 0x200, scoped, tag = 'input window, operand 0, single buffered']
    #allocation3 [shape = 's32[2]{0}', space=sflag, size = 0x8, scoped, tag = 'scoped memory for tpu_custom_call.1']
    #allocation4 [shape = 's32[2]{0}', space=sflag, size = 0x8, scoped, tag = 'scoped memory for tpu_custom_call.1']
    #allocation5 [shape = 's32[2]{0}', space=sflag, size = 0x8, scoped, tag = 'scoped memory for tpu_custom_call.1']
    #allocation6 [shape = 'u8[8192]{0}', space=vmem, size = 0x2000, scoped, tag = 'input window, operand 1']
    #allocation7 [shape = 'u8[8192]{0}', space=vmem, size = 0x2000, scoped, tag = 'output window, operand 0']
    %30 = vsyncpa [#allocation5], 0
    %31 = vsyncpa [#allocation3], 0
    %s32 = scalar_lea.sflag [#allocation3], 1
    %33 = vsyncpa %s32, 0
    %34 = vsyncpa [#allocation4], 0
    %s35 = scalar_lea.sflag [#allocation4], 1
    %36 = vsyncpa %s35, 0
    loop: start=0, step=1, limit=4
    $region2: #{tpu_custom_call.1} parent=1 // loop_pre_header
      _
    $region3: #{tpu_custom_call.1} parent=1 // loop_header
      %s38 = sphi 0, %s42
      %p39 = scmp.ge.s32.totalorder %s38, 4
      %s46 = sphi 0, %s46
      %s48 = sphi 0, %s46
      %s49 = sphi 0, %s48
      %s63 = sphi 0, %s49
      %s69 = sphi 0, %s71
      %s72 = sphi 0, %s69
      %s73 = sphi 0, %s72
      %s89 = sphi 0, %s73
      %s95 = sphi 0, %s97
      %s98 = sphi 0, %s95
      %s99 = sphi 0, %s98
      %s115 = sphi 0, %s99
      %s121 = sphi 0, %s123
      %s124 = sphi 0, %s121
      %s125 = sphi 0, %s124
      %s141 = sphi 0, %s125
      %s147 = sphi 0, %s149
      %s150 = sphi 0, %s147
      %s151 = sphi 0, %s150
      %s167 = sphi 0, %s151
      %s171 = sphi 0, %s171
      %s173 = sphi 0, %s171
      %s174 = sphi 0, %s173
      %s188 = sphi 0, %s174
      %s192 = sphi 0, %s192
      %s194 = sphi 0, %s192
      %s195 = sphi 0, %s194
      %s209 = sphi 0, %s195
      %s213 = sphi 0, %s213
      %s215 = sphi 0, %s213
      %s216 = sphi 0, %s215
      %s230 = sphi 0, %s216
      %s234 = sphi 0, %s234
      %s236 = sphi 0, %s234
      %s237 = sphi 0, %s236
      %s251 = sphi 0, %s237
      %s255 = sphi 0, %s255
      %s257 = sphi 0, %s255
      %s258 = sphi 0, %s257
      %s272 = sphi 0, %s258
      %s276 = sphi 0, %s276
      %s278 = sphi 0, %s276
      %s279 = sphi 0, %s278
      %s293 = sphi 0, %s279
      %s297 = sphi 0, %s297
      %s299 = sphi 0, %s297
      %s300 = sphi 0, %s299
      %s314 = sphi 0, %s300
      %s318 = sphi 0, %s318
      %s320 = sphi 0, %s318
      %s321 = sphi 0, %s320
      %s335 = sphi 0, %s321
      %s339 = sphi 0, %s339
      %s341 = sphi 0, %s339
      %s342 = sphi 0, %s341
      %s356 = sphi 0, %s342
      %s360 = sphi 0, %s360
      %s362 = sphi 0, %s360
      %s363 = sphi 0, %s362
      %s377 = sphi 0, %s363
      %s381 = sphi 0, %s381
      %s383 = sphi 0, %s381
      %s384 = sphi 0, %s383
      %s398 = sphi 0, %s384
      %s402 = sphi 0, %s402
      %s404 = sphi 0, %s402
      %s405 = sphi 0, %s404
      %s419 = sphi 0, %s405
      %s423 = sphi 0, %s423
      %s425 = sphi 0, %s423
      %s426 = sphi 0, %s425
      %s440 = sphi 0, %s426
      %s444 = sphi 0, %s444
      %s446 = sphi 0, %s444
      %s447 = sphi 0, %s446
      %s461 = sphi 0, %s447
      %s465 = sphi 0, %s465
      %s467 = sphi 0, %s465
      %s468 = sphi 0, %s467
      %s482 = sphi 0, %s468
      %s486 = sphi 0, %s486
      %s488 = sphi 0, %s486
      %s489 = sphi 0, %s488
      %s503 = sphi 0, %s489
      %s507 = sphi 0, %s507
      %s509 = sphi 0, %s507
      %s510 = sphi 0, %s509
      %s524 = sphi 0, %s510
      %s528 = sphi 0, %s528
      %s530 = sphi 0, %s528
      %s531 = sphi 0, %s530
      %s545 = sphi 0, %s531
      %s549 = sphi 0, %s549
      %s551 = sphi 0, %s549
      %s552 = sphi 0, %s551
      %s566 = sphi 0, %s552
      %s570 = sphi 0, %s570
      %s572 = sphi 0, %s570
      %s573 = sphi 0, %s572
      %s587 = sphi 0, %s573
      %s593 = sphi 0, %s595
      %s596 = sphi 0, %s593
      %s597 = sphi 0, %s596
      %s613 = sphi 0, %s597
    $region4: #{tpu_custom_call.1} parent=1 // loop_header_branch
      %41 = sbr.rel (%p39) target = $region8
    $region5: #{tpu_custom_call.1} parent=1 // loop_body
      %s43 = ssub.s32 %s38, 1
      %s44 = ssub.s32 %s38, 2
      %s45 = sadd.s32 %s38, 1
      %s47 = sadd.s32 %s46, 1
      %p50 = scmp.eq.s32.totalorder %s38, 1
      %p51 = scmp.ne.s32.totalorder %s46, %s48
      %p52 = scmp.eq.s32.totalorder %s38, 0
      %p53 = por %p51, %p52
      %p54 = scmp.ne.s32.totalorder %s46, %s48
      %p55 = scmp.eq.s32.totalorder %s43, 1
      %p56 = por %p54, %p55
      %p57 = scmp.ne.s32.totalorder %s48, %s49
      %p58 = scmp.eq.s32.totalorder %s43, 0
      %p59 = por %p57, %p58
      %p60 = scmp.ne.s32.totalorder %s48, %s49
      %p61 = scmp.eq.s32.totalorder %s44, 1
      %p62 = por %p60, %p61
      %p64 = scmp.ne.s32.totalorder %s49, %s63
      %p65 = scmp.eq.s32.totalorder %s44, 0
      %p66 = por %p64, %p65
      %s67 = ssub.s32 %s38, %s45
      %p68 = scmp.eq.s32.totalorder %s67, 0
      %s70 = sadd.s32 %s69, 1
      %s71 = scalar_select %p68, %s69, %s70
      %p74 = pneg %p68
      %p75 = scmp.eq.s32.totalorder %s38, 1
      %p76 = por %p74, %p75
      %p77 = scmp.ne.s32.totalorder %s69, %s72
      %p78 = scmp.eq.s32.totalorder %s38, 0
      %p79 = por %p77, %p78
      %p80 = scmp.ne.s32.totalorder %s69, %s72
      %p81 = scmp.eq.s32.totalorder %s43, 1
      %p82 = por %p80, %p81
      %p83 = scmp.ne.s32.totalorder %s72, %s73
      %p84 = scmp.eq.s32.totalorder %s43, 0
      %p85 = por %p83, %p84
      %p86 = scmp.ne.s32.totalorder %s72, %s73
      %p87 = scmp.eq.s32.totalorder %s44, 1
      %p88 = por %p86, %p87
      %p90 = scmp.ne.s32.totalorder %s73, %s89
      %p91 = scmp.eq.s32.totalorder %s44, 0
      %p92 = por %p90, %p91
      %s93 = ssub.s32 %s38, %s45
      %p94 = scmp.eq.s32.totalorder %s93, 0
      %s96 = sadd.s32 %s95, 1
      %s97 = scalar_select %p94, %s95, %s96
      %p100 = pneg %p94
      %p101 = scmp.eq.s32.totalorder %s38, 1
      %p102 = por %p100, %p101
      %p103 = scmp.ne.s32.totalorder %s95, %s98
      %p104 = scmp.eq.s32.totalorder %s38, 0
      %p105 = por %p103, %p104
      %p106 = scmp.ne.s32.totalorder %s95, %s98
      %p107 = scmp.eq.s32.totalorder %s43, 1
      %p108 = por %p106, %p107
      %p109 = scmp.ne.s32.totalorder %s98, %s99
      %p110 = scmp.eq.s32.totalorder %s43, 0
      %p111 = por %p109, %p110
      %p112 = scmp.ne.s32.totalorder %s98, %s99
      %p113 = scmp.eq.s32.totalorder %s44, 1
      %p114 = por %p112, %p113
      %p116 = scmp.ne.s32.totalorder %s99, %s115
      %p117 = scmp.eq.s32.totalorder %s44, 0
      %p118 = por %p116, %p117
      %s119 = ssub.s32 %s38, %s45
      %p120 = scmp.eq.s32.totalorder %s119, 0
      %s122 = sadd.s32 %s121, 1
      %s123 = scalar_select %p120, %s121, %s122
      %p126 = pneg %p120
      %p127 = scmp.eq.s32.totalorder %s38, 1
      %p128 = por %p126, %p127
      %p129 = scmp.ne.s32.totalorder %s121, %s124
      %p130 = scmp.eq.s32.totalorder %s38, 0
      %p131 = por %p129, %p130
      %p132 = scmp.ne.s32.totalorder %s121, %s124
      %p133 = scmp.eq.s32.totalorder %s43, 1
      %p134 = por %p132, %p133
      %p135 = scmp.ne.s32.totalorder %s124, %s125
      %p136 = scmp.eq.s32.totalorder %s43, 0
      %p137 = por %p135, %p136
      %p138 = scmp.ne.s32.totalorder %s124, %s125
      %p139 = scmp.eq.s32.totalorder %s44, 1
      %p140 = por %p138, %p139
      %p142 = scmp.ne.s32.totalorder %s125, %s141
      %p143 = scmp.eq.s32.totalorder %s44, 0
      %p144 = por %p142, %p143
      %s145 = ssub.s32 %s38, %s45
      %p146 = scmp.eq.s32.totalorder %s145, 0
      %s148 = sadd.s32 %s147, 1
      %s149 = scalar_select %p146, %s147, %s148
      %p152 = pneg %p146
      %p153 = scmp.eq.s32.totalorder %s38, 1
      %p154 = por %p152, %p153
      %p155 = scmp.ne.s32.totalorder %s147, %s150
      %p156 = scmp.eq.s32.totalorder %s38, 0
      %p157 = por %p155, %p156
      %p158 = scmp.ne.s32.totalorder %s147, %s150
      %p159 = scmp.eq.s32.totalorder %s43, 1
      %p160 = por %p158, %p159
      %p161 = scmp.ne.s32.totalorder %s150, %s151
      %p162 = scmp.eq.s32.totalorder %s43, 0
      %p163 = por %p161, %p162
      %p164 = scmp.ne.s32.totalorder %s150, %s151
      %p165 = scmp.eq.s32.totalorder %s44, 1
      %p166 = por %p164, %p165
      %p168 = scmp.ne.s32.totalorder %s151, %s167
      %p169 = scmp.eq.s32.totalorder %s44, 0
      %p170 = por %p168, %p169
      %s172 = sadd.s32 %s171, 1
      %p175 = scmp.eq.s32.totalorder %s38, 1
      %p176 = scmp.ne.s32.totalorder %s171, %s173
      %p177 = scmp.eq.s32.totalorder %s38, 0
      %p178 = por %p176, %p177
      %p179 = scmp.ne.s32.totalorder %s171, %s173
      %p180 = scmp.eq.s32.totalorder %s43, 1
      %p181 = por %p179, %p180
      %p182 = scmp.ne.s32.totalorder %s173, %s174
      %p183 = scmp.eq.s32.totalorder %s43, 0
      %p184 = por %p182, %p183
      %p185 = scmp.ne.s32.totalorder %s173, %s174
      %p186 = scmp.eq.s32.totalorder %s44, 1
      %p187 = por %p185, %p186
      %p189 = scmp.ne.s32.totalorder %s174, %s188
      %p190 = scmp.eq.s32.totalorder %s44, 0
      %p191 = por %p189, %p190
      %s193 = sadd.s32 %s192, 1
      %p196 = scmp.eq.s32.totalorder %s38, 1
      %p197 = scmp.ne.s32.totalorder %s192, %s194
      %p198 = scmp.eq.s32.totalorder %s38, 0
      %p199 = por %p197, %p198
      %p200 = scmp.ne.s32.totalorder %s192, %s194
      %p201 = scmp.eq.s32.totalorder %s43, 1
      %p202 = por %p200, %p201
      %p203 = scmp.ne.s32.totalorder %s194, %s195
      %p204 = scmp.eq.s32.totalorder %s43, 0
      %p205 = por %p203, %p204
      %p206 = scmp.ne.s32.totalorder %s194, %s195
      %p207 = scmp.eq.s32.totalorder %s44, 1
      %p208 = por %p206, %p207
      %p210 = scmp.ne.s32.totalorder %s195, %s209
      %p211 = scmp.eq.s32.totalorder %s44, 0
      %p212 = por %p210, %p211
      %s214 = sadd.s32 %s213, 1
      %p217 = scmp.eq.s32.totalorder %s38, 1
      %p218 = scmp.ne.s32.totalorder %s213, %s215
      %p219 = scmp.eq.s32.totalorder %s38, 0
      %p220 = por %p218, %p219
      %p221 = scmp.ne.s32.totalorder %s213, %s215
      %p222 = scmp.eq.s32.totalorder %s43, 1
      %p223 = por %p221, %p222
      %p224 = scmp.ne.s32.totalorder %s215, %s216
      %p225 = scmp.eq.s32.totalorder %s43, 0
      %p226 = por %p224, %p225
      %p227 = scmp.ne.s32.totalorder %s215, %s216
      %p228 = scmp.eq.s32.totalorder %s44, 1
      %p229 = por %p227, %p228
      %p231 = scmp.ne.s32.totalorder %s216, %s230
      %p232 = scmp.eq.s32.totalorder %s44, 0
      %p233 = por %p231, %p232
      %s235 = sadd.s32 %s234, 1
      %p238 = scmp.eq.s32.totalorder %s38, 1
      %p239 = scmp.ne.s32.totalorder %s234, %s236
      %p240 = scmp.eq.s32.totalorder %s38, 0
      %p241 = por %p239, %p240
      %p242 = scmp.ne.s32.totalorder %s234, %s236
      %p243 = scmp.eq.s32.totalorder %s43, 1
      %p244 = por %p242, %p243
      %p245 = scmp.ne.s32.totalorder %s236, %s237
      %p246 = scmp.eq.s32.totalorder %s43, 0
      %p247 = por %p245, %p246
      %p248 = scmp.ne.s32.totalorder %s236, %s237
      %p249 = scmp.eq.s32.totalorder %s44, 1
      %p250 = por %p248, %p249
      %p252 = scmp.ne.s32.totalorder %s237, %s251
      %p253 = scmp.eq.s32.totalorder %s44, 0
      %p254 = por %p252, %p253
      %s256 = sadd.s32 %s255, 1
      %p259 = scmp.eq.s32.totalorder %s38, 1
      %p260 = scmp.ne.s32.totalorder %s255, %s257
      %p261 = scmp.eq.s32.totalorder %s38, 0
      %p262 = por %p260, %p261
      %p263 = scmp.ne.s32.totalorder %s255, %s257
      %p264 = scmp.eq.s32.totalorder %s43, 1
      %p265 = por %p263, %p264
      %p266 = scmp.ne.s32.totalorder %s257, %s258
      %p267 = scmp.eq.s32.totalorder %s43, 0
      %p268 = por %p266, %p267
      %p269 = scmp.ne.s32.totalorder %s257, %s258
      %p270 = scmp.eq.s32.totalorder %s44, 1
      %p271 = por %p269, %p270
      %p273 = scmp.ne.s32.totalorder %s258, %s272
      %p274 = scmp.eq.s32.totalorder %s44, 0
      %p275 = por %p273, %p274
      %s277 = sadd.s32 %s276, 1
      %p280 = scmp.eq.s32.totalorder %s38, 1
      %p281 = scmp.ne.s32.totalorder %s276, %s278
      %p282 = scmp.eq.s32.totalorder %s38, 0
      %p283 = por %p281, %p282
      %p284 = scmp.ne.s32.totalorder %s276, %s278
      %p285 = scmp.eq.s32.totalorder %s43, 1
      %p286 = por %p284, %p285
      %p287 = scmp.ne.s32.totalorder %s278, %s279
      %p288 = scmp.eq.s32.totalorder %s43, 0
      %p289 = por %p287, %p288
      %p290 = scmp.ne.s32.totalorder %s278, %s279
      %p291 = scmp.eq.s32.totalorder %s44, 1
      %p292 = por %p290, %p291
      %p294 = scmp.ne.s32.totalorder %s279, %s293
      %p295 = scmp.eq.s32.totalorder %s44, 0
      %p296 = por %p294, %p295
      %s298 = sadd.s32 %s297, 1
      %p301 = scmp.eq.s32.totalorder %s38, 1
      %p302 = scmp.ne.s32.totalorder %s297, %s299
      %p303 = scmp.eq.s32.totalorder %s38, 0
      %p304 = por %p302, %p303
      %p305 = scmp.ne.s32.totalorder %s297, %s299
      %p306 = scmp.eq.s32.totalorder %s43, 1
      %p307 = por %p305, %p306
      %p308 = scmp.ne.s32.totalorder %s299, %s300
      %p309 = scmp.eq.s32.totalorder %s43, 0
      %p310 = por %p308, %p309
      %p311 = scmp.ne.s32.totalorder %s299, %s300
      %p312 = scmp.eq.s32.totalorder %s44, 1
      %p313 = por %p311, %p312
      %p315 = scmp.ne.s32.totalorder %s300, %s314
      %p316 = scmp.eq.s32.totalorder %s44, 0
      %p317 = por %p315, %p316
      %s319 = sadd.s32 %s318, 1
      %p322 = scmp.eq.s32.totalorder %s38, 1
      %p323 = scmp.ne.s32.totalorder %s318, %s320
      %p324 = scmp.eq.s32.totalorder %s38, 0
      %p325 = por %p323, %p324
      %p326 = scmp.ne.s32.totalorder %s318, %s320
      %p327 = scmp.eq.s32.totalorder %s43, 1
      %p328 = por %p326, %p327
      %p329 = scmp.ne.s32.totalorder %s320, %s321
      %p330 = scmp.eq.s32.totalorder %s43, 0
      %p331 = por %p329, %p330
      %p332 = scmp.ne.s32.totalorder %s320, %s321
      %p333 = scmp.eq.s32.totalorder %s44, 1
      %p334 = por %p332, %p333
      %p336 = scmp.ne.s32.totalorder %s321, %s335
      %p337 = scmp.eq.s32.totalorder %s44, 0
      %p338 = por %p336, %p337
      %s340 = sadd.s32 %s339, 1
      %p343 = scmp.eq.s32.totalorder %s38, 1
      %p344 = scmp.ne.s32.totalorder %s339, %s341
      %p345 = scmp.eq.s32.totalorder %s38, 0
      %p346 = por %p344, %p345
      %p347 = scmp.ne.s32.totalorder %s339, %s341
      %p348 = scmp.eq.s32.totalorder %s43, 1
      %p349 = por %p347, %p348
      %p350 = scmp.ne.s32.totalorder %s341, %s342
      %p351 = scmp.eq.s32.totalorder %s43, 0
      %p352 = por %p350, %p351
      %p353 = scmp.ne.s32.totalorder %s341, %s342
      %p354 = scmp.eq.s32.totalorder %s44, 1
      %p355 = por %p353, %p354
      %p357 = scmp.ne.s32.totalorder %s342, %s356
      %p358 = scmp.eq.s32.totalorder %s44, 0
      %p359 = por %p357, %p358
      %s361 = sadd.s32 %s360, 1
      %p364 = scmp.eq.s32.totalorder %s38, 1
      %p365 = scmp.ne.s32.totalorder %s360, %s362
      %p366 = scmp.eq.s32.totalorder %s38, 0
      %p367 = por %p365, %p366
      %p368 = scmp.ne.s32.totalorder %s360, %s362
      %p369 = scmp.eq.s32.totalorder %s43, 1
      %p370 = por %p368, %p369
      %p371 = scmp.ne.s32.totalorder %s362, %s363
      %p372 = scmp.eq.s32.totalorder %s43, 0
      %p373 = por %p371, %p372
      %p374 = scmp.ne.s32.totalorder %s362, %s363
      %p375 = scmp.eq.s32.totalorder %s44, 1
      %p376 = por %p374, %p375
      %p378 = scmp.ne.s32.totalorder %s363, %s377
      %p379 = scmp.eq.s32.totalorder %s44, 0
      %p380 = por %p378, %p379
      %s382 = sadd.s32 %s381, 1
      %p385 = scmp.eq.s32.totalorder %s38, 1
      %p386 = scmp.ne.s32.totalorder %s381, %s383
      %p387 = scmp.eq.s32.totalorder %s38, 0
      %p388 = por %p386, %p387
      %p389 = scmp.ne.s32.totalorder %s381, %s383
      %p390 = scmp.eq.s32.totalorder %s43, 1
      %p391 = por %p389, %p390
      %p392 = scmp.ne.s32.totalorder %s383, %s384
      %p393 = scmp.eq.s32.totalorder %s43, 0
      %p394 = por %p392, %p393
      %p395 = scmp.ne.s32.totalorder %s383, %s384
      %p396 = scmp.eq.s32.totalorder %s44, 1
      %p397 = por %p395, %p396
      %p399 = scmp.ne.s32.totalorder %s384, %s398
      %p400 = scmp.eq.s32.totalorder %s44, 0
      %p401 = por %p399, %p400
      %s403 = sadd.s32 %s402, 1
      %p406 = scmp.eq.s32.totalorder %s38, 1
      %p407 = scmp.ne.s32.totalorder %s402, %s404
      %p408 = scmp.eq.s32.totalorder %s38, 0
      %p409 = por %p407, %p408
      %p410 = scmp.ne.s32.totalorder %s402, %s404
      %p411 = scmp.eq.s32.totalorder %s43, 1
      %p412 = por %p410, %p411
      %p413 = scmp.ne.s32.totalorder %s404, %s405
      %p414 = scmp.eq.s32.totalorder %s43, 0
      %p415 = por %p413, %p414
      %p416 = scmp.ne.s32.totalorder %s404, %s405
      %p417 = scmp.eq.s32.totalorder %s44, 1
      %p418 = por %p416, %p417
      %p420 = scmp.ne.s32.totalorder %s405, %s419
      %p421 = scmp.eq.s32.totalorder %s44, 0
      %p422 = por %p420, %p421
      %s424 = sadd.s32 %s423, 1
      %p427 = scmp.eq.s32.totalorder %s38, 1
      %p428 = scmp.ne.s32.totalorder %s423, %s425
      %p429 = scmp.eq.s32.totalorder %s38, 0
      %p430 = por %p428, %p429
      %p431 = scmp.ne.s32.totalorder %s423, %s425
      %p432 = scmp.eq.s32.totalorder %s43, 1
      %p433 = por %p431, %p432
      %p434 = scmp.ne.s32.totalorder %s425, %s426
      %p435 = scmp.eq.s32.totalorder %s43, 0
      %p436 = por %p434, %p435
      %p437 = scmp.ne.s32.totalorder %s425, %s426
      %p438 = scmp.eq.s32.totalorder %s44, 1
      %p439 = por %p437, %p438
      %p441 = scmp.ne.s32.totalorder %s426, %s440
      %p442 = scmp.eq.s32.totalorder %s44, 0
      %p443 = por %p441, %p442
      %s445 = sadd.s32 %s444, 1
      %p448 = scmp.eq.s32.totalorder %s38, 1
      %p449 = scmp.ne.s32.totalorder %s444, %s446
      %p450 = scmp.eq.s32.totalorder %s38, 0
      %p451 = por %p449, %p450
      %p452 = scmp.ne.s32.totalorder %s444, %s446
      %p453 = scmp.eq.s32.totalorder %s43, 1
      %p454 = por %p452, %p453
      %p455 = scmp.ne.s32.totalorder %s446, %s447
      %p456 = scmp.eq.s32.totalorder %s43, 0
      %p457 = por %p455, %p456
      %p458 = scmp.ne.s32.totalorder %s446, %s447
      %p459 = scmp.eq.s32.totalorder %s44, 1
      %p460 = por %p458, %p459
      %p462 = scmp.ne.s32.totalorder %s447, %s461
      %p463 = scmp.eq.s32.totalorder %s44, 0
      %p464 = por %p462, %p463
      %s466 = sadd.s32 %s465, 1
      %p469 = scmp.eq.s32.totalorder %s38, 1
      %p470 = scmp.ne.s32.totalorder %s465, %s467
      %p471 = scmp.eq.s32.totalorder %s38, 0
      %p472 = por %p470, %p471
      %p473 = scmp.ne.s32.totalorder %s465, %s467
      %p474 = scmp.eq.s32.totalorder %s43, 1
      %p475 = por %p473, %p474
      %p476 = scmp.ne.s32.totalorder %s467, %s468
      %p477 = scmp.eq.s32.totalorder %s43, 0
      %p478 = por %p476, %p477
      %p479 = scmp.ne.s32.totalorder %s467, %s468
      %p480 = scmp.eq.s32.totalorder %s44, 1
      %p481 = por %p479, %p480
      %p483 = scmp.ne.s32.totalorder %s468, %s482
      %p484 = scmp.eq.s32.totalorder %s44, 0
      %p485 = por %p483, %p484
      %s487 = sadd.s32 %s486, 1
      %p490 = scmp.eq.s32.totalorder %s38, 1
      %p491 = scmp.ne.s32.totalorder %s486, %s488
      %p492 = scmp.eq.s32.totalorder %s38, 0
      %p493 = por %p491, %p492
      %p494 = scmp.ne.s32.totalorder %s486, %s488
      %p495 = scmp.eq.s32.totalorder %s43, 1
      %p496 = por %p494, %p495
      %p497 = scmp.ne.s32.totalorder %s488, %s489
      %p498 = scmp.eq.s32.totalorder %s43, 0
      %p499 = por %p497, %p498
      %p500 = scmp.ne.s32.totalorder %s488, %s489
      %p501 = scmp.eq.s32.totalorder %s44, 1
      %p502 = por %p500, %p501
      %p504 = scmp.ne.s32.totalorder %s489, %s503
      %p505 = scmp.eq.s32.totalorder %s44, 0
      %p506 = por %p504, %p505
      %s508 = sadd.s32 %s507, 1
      %p511 = scmp.eq.s32.totalorder %s38, 1
      %p512 = scmp.ne.s32.totalorder %s507, %s509
      %p513 = scmp.eq.s32.totalorder %s38, 0
      %p514 = por %p512, %p513
      %p515 = scmp.ne.s32.totalorder %s507, %s509
      %p516 = scmp.eq.s32.totalorder %s43, 1
      %p517 = por %p515, %p516
      %p518 = scmp.ne.s32.totalorder %s509, %s510
      %p519 = scmp.eq.s32.totalorder %s43, 0
      %p520 = por %p518, %p519
      %p521 = scmp.ne.s32.totalorder %s509, %s510
      %p522 = scmp.eq.s32.totalorder %s44, 1
      %p523 = por %p521, %p522
      %p525 = scmp.ne.s32.totalorder %s510, %s524
      %p526 = scmp.eq.s32.totalorder %s44, 0
      %p527 = por %p525, %p526
      %s529 = sadd.s32 %s528, 1
      %p532 = scmp.eq.s32.totalorder %s38, 1
      %p533 = scmp.ne.s32.totalorder %s528, %s530
      %p534 = scmp.eq.s32.totalorder %s38, 0
      %p535 = por %p533, %p534
      %p536 = scmp.ne.s32.totalorder %s528, %s530
      %p537 = scmp.eq.s32.totalorder %s43, 1
      %p538 = por %p536, %p537
      %p539 = scmp.ne.s32.totalorder %s530, %s531
      %p540 = scmp.eq.s32.totalorder %s43, 0
      %p541 = por %p539, %p540
      %p542 = scmp.ne.s32.totalorder %s530, %s531
      %p543 = scmp.eq.s32.totalorder %s44, 1
      %p544 = por %p542, %p543
      %p546 = scmp.ne.s32.totalorder %s531, %s545
      %p547 = scmp.eq.s32.totalorder %s44, 0
      %p548 = por %p546, %p547
      %s550 = sadd.s32 %s549, 1
      %p553 = scmp.eq.s32.totalorder %s38, 1
      %p554 = scmp.ne.s32.totalorder %s549, %s551
      %p555 = scmp.eq.s32.totalorder %s38, 0
      %p556 = por %p554, %p555
      %p557 = scmp.ne.s32.totalorder %s549, %s551
      %p558 = scmp.eq.s32.totalorder %s43, 1
      %p559 = por %p557, %p558
      %p560 = scmp.ne.s32.totalorder %s551, %s552
      %p561 = scmp.eq.s32.totalorder %s43, 0
      %p562 = por %p560, %p561
      %p563 = scmp.ne.s32.totalorder %s551, %s552
      %p564 = scmp.eq.s32.totalorder %s44, 1
      %p565 = por %p563, %p564
      %p567 = scmp.ne.s32.totalorder %s552, %s566
      %p568 = scmp.eq.s32.totalorder %s44, 0
      %p569 = por %p567, %p568
      %s571 = sadd.s32 %s570, 1
      %p574 = scmp.eq.s32.totalorder %s38, 1
      %p575 = scmp.ne.s32.totalorder %s570, %s572
      %p576 = scmp.eq.s32.totalorder %s38, 0
      %p577 = por %p575, %p576
      %p578 = scmp.ne.s32.totalorder %s570, %s572
      %p579 = scmp.eq.s32.totalorder %s43, 1
      %p580 = por %p578, %p579
      %p581 = scmp.ne.s32.totalorder %s572, %s573
      %p582 = scmp.eq.s32.totalorder %s43, 0
      %p583 = por %p581, %p582
      %p584 = scmp.ne.s32.totalorder %s572, %s573
      %p585 = scmp.eq.s32.totalorder %s44, 1
      %p586 = por %p584, %p585
      %p588 = scmp.ne.s32.totalorder %s573, %s587
      %p589 = scmp.eq.s32.totalorder %s44, 0
      %p590 = por %p588, %p589
      %s591 = ssub.s32 %s38, %s45
      %p592 = scmp.eq.s32.totalorder %s591, 0
      %s594 = sadd.s32 %s593, 1
      %s595 = scalar_select %p592, %s593, %s594
      %p598 = pneg %p592
      %p599 = scmp.eq.s32.totalorder %s38, 1
      %p600 = por %p598, %p599
      %p601 = scmp.ne.s32.totalorder %s593, %s596
      %p602 = scmp.eq.s32.totalorder %s38, 0
      %p603 = por %p601, %p602
      %p604 = scmp.ne.s32.totalorder %s593, %s596
      %p605 = scmp.eq.s32.totalorder %s43, 1
      %p606 = por %p604, %p605
      %p607 = scmp.ne.s32.totalorder %s596, %s597
      %p608 = scmp.eq.s32.totalorder %s43, 0
      %p609 = por %p607, %p608
      %p610 = scmp.ne.s32.totalorder %s596, %s597
      %p611 = scmp.eq.s32.totalorder %s44, 1
      %p612 = por %p610, %p611
      %p614 = scmp.ne.s32.totalorder %s597, %s613
      %p615 = scmp.eq.s32.totalorder %s44, 0
      %p616 = por %p614, %p615
      %p617 = scmp.le.s32.totalorder 1, %s38
      %p618 = scmp.lt.s32.totalorder %s38, 3
      %p619 = pnand %p617, %p618
      %p620 = pneg %p619
      // Predicated region
      $region9: #{tpu_custom_call.1} parent=5 // pred_check
        _
      $region10: #{tpu_custom_call.1} parent=5 // pred_check_branch
        %622 = sbr.rel (%p619) target = $region12
      $region11: #{tpu_custom_call.1} parent=5 // pred_region
        %s623 = ssub.s32 %s38, 1
        // Predicated region
        $region13: #{tpu_custom_call.1} parent=11 // pred_check
          %p624 = pneg %p59
        $region14: #{tpu_custom_call.1} parent=11 // pred_check_branch
          %626 = sbr.rel (%p624) target = $region16
        $region15: #{tpu_custom_call.1} parent=11 // pred_region
          %s628 = ssub.s32 16, 16
          %629 = vsyncadd [#allocation5], %s628
          %s631 = sshll.u32 %s0, 4
          %s632 = int_to_ptr.vmem [resolvable:$true] %s631
          %634 = dma.vmem_to_smem %s632, 16, [#allocation2], [#allocation5]
        $region16: #{tpu_custom_call.1} parent=11 // pred_fallthru
          _
        // Predicated region
        $region17: #{tpu_custom_call.1} parent=11 // pred_check
          %p635 = pneg %p184
        $region18: #{tpu_custom_call.1} parent=11 // pred_check_branch
          %637 = sbr.rel (%p635) target = $region20
        $region19: #{tpu_custom_call.1} parent=11 // pred_region
          _
        $region20: #{tpu_custom_call.1} parent=11 // pred_fallthru
          _
        // Predicated region
        $region21: #{tpu_custom_call.1} parent=11 // pred_check
          %p638 = pneg %p205
        $region22: #{tpu_custom_call.1} parent=11 // pred_check_branch
          %640 = sbr.rel (%p638) target = $region24
        $region23: #{tpu_custom_call.1} parent=11 // pred_region
          _
        $region24: #{tpu_custom_call.1} parent=11 // pred_fallthru
          _
        // Predicated region
        $region25: #{tpu_custom_call.1} parent=11 // pred_check
          %p641 = pneg %p226
        $region26: #{tpu_custom_call.1} parent=11 // pred_check_branch
          %643 = sbr.rel (%p641) target = $region28
        $region27: #{tpu_custom_call.1} parent=11 // pred_region
          _
        $region28: #{tpu_custom_call.1} parent=11 // pred_fallthru
          _
        // Predicated region
        $region29: #{tpu_custom_call.1} parent=11 // pred_check
          %p644 = pneg %p247
        $region30: #{tpu_custom_call.1} parent=11 // pred_check_branch
          %646 = sbr.rel (%p644) target = $region32
        $region31: #{tpu_custom_call.1} parent=11 // pred_region
          _
        $region32: #{tpu_custom_call.1} parent=11 // pred_fallthru
          _
        // Predicated region
        $region33: #{tpu_custom_call.1} parent=11 // pred_check
          %p647 = pneg %p268
        $region34: #{tpu_custom_call.1} parent=11 // pred_check_branch
          %649 = sbr.rel (%p647) target = $region36
        $region35: #{tpu_custom_call.1} parent=11 // pred_region
          _
        $region36: #{tpu_custom_call.1} parent=11 // pred_fallthru
          _
        // Predicated region
        $region37: #{tpu_custom_call.1} parent=11 // pred_check
          %p650 = pneg %p289
        $region38: #{tpu_custom_call.1} parent=11 // pred_check_branch
          %652 = sbr.rel (%p650) target = $region40
        $region39: #{tpu_custom_call.1} parent=11 // pred_region
          _
        $region40: #{tpu_custom_call.1} parent=11 // pred_fallthru
          _
        // Predicated region
        $region41: #{tpu_custom_call.1} parent=11 // pred_check
          %p653 = pneg %p310
        $region42: #{tpu_custom_call.1} parent=11 // pred_check_branch
          %655 = sbr.rel (%p653) target = $region44
        $region43: #{tpu_custom_call.1} parent=11 // pred_region
          _
        $region44: #{tpu_custom_call.1} parent=11 // pred_fallthru
          _
        // Predicated region
        $region45: #{tpu_custom_call.1} parent=11 // pred_check
          %p656 = pneg %p331
        $region46: #{tpu_custom_call.1} parent=11 // pred_check_branch
          %658 = sbr.rel (%p656) target = $region48
        $region47: #{tpu_custom_call.1} parent=11 // pred_region
          _
        $region48: #{tpu_custom_call.1} parent=11 // pred_fallthru
          _
        // Predicated region
        $region49: #{tpu_custom_call.1} parent=11 // pred_check
          %p659 = pneg %p352
        $region50: #{tpu_custom_call.1} parent=11 // pred_check_branch
          %661 = sbr.rel (%p659) target = $region52
        $region51: #{tpu_custom_call.1} parent=11 // pred_region
          _
        $region52: #{tpu_custom_call.1} parent=11 // pred_fallthru
          _
        // Predicated region
        $region53: #{tpu_custom_call.1} parent=11 // pred_check
          %p662 = pneg %p373
        $region54: #{tpu_custom_call.1} parent=11 // pred_check_branch
          %664 = sbr.rel (%p662) target = $region56
        $region55: #{tpu_custom_call.1} parent=11 // pred_region
          _
        $region56: #{tpu_custom_call.1} parent=11 // pred_fallthru
          _
        // Predicated region
        $region57: #{tpu_custom_call.1} parent=11 // pred_check
          %p665 = pneg %p394
        $region58: #{tpu_custom_call.1} parent=11 // pred_check_branch
          %667 = sbr.rel (%p665) target = $region60
        $region59: #{tpu_custom_call.1} parent=11 // pred_region
          _
        $region60: #{tpu_custom_call.1} parent=11 // pred_fallthru
          _
        // Predicated region
        $region61: #{tpu_custom_call.1} parent=11 // pred_check
          %p668 = pneg %p415
        $region62: #{tpu_custom_call.1} parent=11 // pred_check_branch
          %670 = sbr.rel (%p668) target = $region64
        $region63: #{tpu_custom_call.1} parent=11 // pred_region
          _
        $region64: #{tpu_custom_call.1} parent=11 // pred_fallthru
          _
        // Predicated region
        $region65: #{tpu_custom_call.1} parent=11 // pred_check
          %p671 = pneg %p436
        $region66: #{tpu_custom_call.1} parent=11 // pred_check_branch
          %673 = sbr.rel (%p671) target = $region68
        $region67: #{tpu_custom_call.1} parent=11 // pred_region
          _
        $region68: #{tpu_custom_call.1} parent=11 // pred_fallthru
          _
        // Predicated region
        $region69: #{tpu_custom_call.1} parent=11 // pred_check
          %p674 = pneg %p457
        $region70: #{tpu_custom_call.1} parent=11 // pred_check_branch
          %676 = sbr.rel (%p674) target = $region72
        $region71: #{tpu_custom_call.1} parent=11 // pred_region
          _
        $region72: #{tpu_custom_call.1} parent=11 // pred_fallthru
          _
        // Predicated region
        $region73: #{tpu_custom_call.1} parent=11 // pred_check
          %p677 = pneg %p478
        $region74: #{tpu_custom_call.1} parent=11 // pred_check_branch
          %679 = sbr.rel (%p677) target = $region76
        $region75: #{tpu_custom_call.1} parent=11 // pred_region
          _
        $region76: #{tpu_custom_call.1} parent=11 // pred_fallthru
          _
        // Predicated region
        $region77: #{tpu_custom_call.1} parent=11 // pred_check
          %p680 = pneg %p499
        $region78: #{tpu_custom_call.1} parent=11 // pred_check_branch
          %682 = sbr.rel (%p680) target = $region80
        $region79: #{tpu_custom_call.1} parent=11 // pred_region
          _
        $region80: #{tpu_custom_call.1} parent=11 // pred_fallthru
          _
        // Predicated region
        $region81: #{tpu_custom_call.1} parent=11 // pred_check
          %p683 = pneg %p520
        $region82: #{tpu_custom_call.1} parent=11 // pred_check_branch
          %685 = sbr.rel (%p683) target = $region84
        $region83: #{tpu_custom_call.1} parent=11 // pred_region
          _
        $region84: #{tpu_custom_call.1} parent=11 // pred_fallthru
          _
        // Predicated region
        $region85: #{tpu_custom_call.1} parent=11 // pred_check
          %p686 = pneg %p541
        $region86: #{tpu_custom_call.1} parent=11 // pred_check_branch
          %688 = sbr.rel (%p686) target = $region88
        $region87: #{tpu_custom_call.1} parent=11 // pred_region
          _
        $region88: #{tpu_custom_call.1} parent=11 // pred_fallthru
          _
        // Predicated region
        $region89: #{tpu_custom_call.1} parent=11 // pred_check
          %p689 = pneg %p562
        $region90: #{tpu_custom_call.1} parent=11 // pred_check_branch
          %691 = sbr.rel (%p689) target = $region92
        $region91: #{tpu_custom_call.1} parent=11 // pred_region
          _
        $region92: #{tpu_custom_call.1} parent=11 // pred_fallthru
          _
        // Predicated region
        $region93: #{tpu_custom_call.1} parent=11 // pred_check
          %p692 = pneg %p583
        $region94: #{tpu_custom_call.1} parent=11 // pred_check_branch
          %694 = sbr.rel (%p692) target = $region96
        $region95: #{tpu_custom_call.1} parent=11 // pred_region
          _
        $region96: #{tpu_custom_call.1} parent=11 // pred_fallthru
          _
      $region12: #{tpu_custom_call.1} parent=5 // pred_fallthru
        _
      %p695 = scmp.lt.s32.totalorder %s38, 2
      // Predicated region
      $region97: #{tpu_custom_call.1} parent=5 // pred_check
        %p696 = pneg %p695
      $region98: #{tpu_custom_call.1} parent=5 // pred_check_branch
        %698 = sbr.rel (%p696) target = $region100
      $region99: #{tpu_custom_call.1} parent=5 // pred_region
        // Predicated region
        $region101: #{tpu_custom_call.1} parent=99 // pred_check
          %p699 = pneg %p79
        $region102: #{tpu_custom_call.1} parent=99 // pred_check_branch
          %701 = sbr.rel (%p699) target = $region104
        $region103: #{tpu_custom_call.1} parent=99 // pred_region
          %s702 = sand.u32 %s69, 1
          %s703 = scalar_lea.sflag [#allocation3], %s702
          %s704 = sand.u32 %s69, 1
          %s705 = smul.addr %s704, 8
          %s706 = scalar_lea.vmem [#allocation6], %s705
          %s708 = ssub.s32 128, 128
          %709 = vsyncadd %s703, %s708
          %s710 = smul.addr %s38, 128
          %s711 = scalar_lea.hbm %s1, %s710
          %s713 = sshll.u32 %s706, 4
          %s714 = int_to_ptr.vmem [resolvable:$true] %s713
          %716 = dma.hbm_to_vmem [thread:$0]  %s711, 128, %s714, %s703
        $region104: #{tpu_custom_call.1} parent=99 // pred_fallthru
          _
        // Predicated region
        $region105: #{tpu_custom_call.1} parent=99 // pred_check
          %p717 = pneg %p105
        $region106: #{tpu_custom_call.1} parent=99 // pred_check_branch
          %719 = sbr.rel (%p717) target = $region108
        $region107: #{tpu_custom_call.1} parent=99 // pred_region
          %p720 = scmp.lt.s32.totalorder %s38, 1
          %s721 = scalar_select %p720, %s38, 1
          %s722 = smul.addr %s721, 8
          %s723 = scalar_lea.vmem %s2, %s722
        $region108: #{tpu_custom_call.1} parent=99 // pred_fallthru
          _
        // Predicated region
        $region109: #{tpu_custom_call.1} parent=99 // pred_check
          %p724 = pneg %p131
        $region110: #{tpu_custom_call.1} parent=99 // pred_check_branch
          %726 = sbr.rel (%p724) target = $region112
        $region111: #{tpu_custom_call.1} parent=99 // pred_region
          %p727 = scmp.lt.s32.totalorder %s38, 1
          %s728 = scalar_select %p727, %s38, 1
          %s729 = smul.addr %s728, 8
          %s730 = scalar_lea.vmem %s3, %s729
        $region112: #{tpu_custom_call.1} parent=99 // pred_fallthru
          _
        // Predicated region
        $region113: #{tpu_custom_call.1} parent=99 // pred_check
          %p731 = pneg %p157
        $region114: #{tpu_custom_call.1} parent=99 // pred_check_branch
          %733 = sbr.rel (%p731) target = $region116
        $region115: #{tpu_custom_call.1} parent=99 // pred_region
          %p734 = scmp.lt.s32.totalorder %s38, 1
          %s735 = scalar_select %p734, %s38, 1
          %s736 = scalar_lea.vmem %s4, %s735
        $region116: #{tpu_custom_call.1} parent=99 // pred_fallthru
          _
      $region100: #{tpu_custom_call.1} parent=5 // pred_fallthru
        _
      %p737 = scmp.le.s32.totalorder 1, %s38
      %p738 = scmp.lt.s32.totalorder %s38, 3
      %p739 = pnand %p737, %p738
      %p740 = pneg %p739
      // Predicated region
      $region117: #{tpu_custom_call.1} parent=5 // pred_check
        _
      $region118: #{tpu_custom_call.1} parent=5 // pred_check_branch
        %742 = sbr.rel (%p739) target = $region120
      $region119: #{tpu_custom_call.1} parent=5 // pred_region
        %s743 = ssub.s32 %s38, 1
        // Predicated region
        $region121: #{tpu_custom_call.1} parent=119 // pred_check
          %p744 = pneg %p59
        $region122: #{tpu_custom_call.1} parent=119 // pred_check_branch
          %746 = sbr.rel (%p744) target = $region124
        $region123: #{tpu_custom_call.1} parent=119 // pred_region
          %747 = dma.done [#allocation5], 16
        $region124: #{tpu_custom_call.1} parent=119 // pred_fallthru
          _
        %s748 = sand.u32 %s72, 1
        %s749 = scalar_lea.sflag [#allocation3], %s748
        %s750 = sand.u32 %s72, 1
        %s751 = smul.addr %s750, 8
        %s752 = scalar_lea.vmem [#allocation6], %s751
        // Predicated region
        $region125: #{tpu_custom_call.1} parent=119 // pred_check
          %p753 = pneg %p85
        $region126: #{tpu_custom_call.1} parent=119 // pred_check_branch
          %755 = sbr.rel (%p753) target = $region128
        $region127: #{tpu_custom_call.1} parent=119 // pred_region
          %756 = dma.done %s749, 128
        $region128: #{tpu_custom_call.1} parent=119 // pred_fallthru
          _
        %757 = sfence
        %p758 = pneg %p59
        %p759 = pneg %p56
        %s760 = sand.u32 %s72, 1
        %s761 = scalar_lea.sflag [#allocation3], %s760
        %s762 = sand.u32 %s72, 1
        %s763 = smul.addr %s762, 8
        %s764 = scalar_lea.vmem [#allocation6], %s763
        %p765 = pneg %p85
        %p766 = pneg %p82
        %p767 = scmp.lt.s32.totalorder %s43, 1
        %s768 = scalar_select %p767, %s43, 1
        %s769 = smul.addr %s768, 8
        %s770 = scalar_lea.vmem %s2, %s769
        %p771 = pneg %p111
        %p772 = pneg %p108
        %p773 = scmp.lt.s32.totalorder %s43, 1
        %s774 = scalar_select %p773, %s43, 1
        %s775 = smul.addr %s774, 8
        %s776 = scalar_lea.vmem %s3, %s775
        %p777 = pneg %p137
        %p778 = pneg %p134
        %p779 = scmp.lt.s32.totalorder %s43, 1
        %s780 = scalar_select %p779, %s43, 1
        %s781 = scalar_lea.vmem %s4, %s780
        %p782 = pneg %p163
        %p783 = pneg %p160
        %p784 = pneg %p184
        %p785 = pneg %p181
        %p786 = pneg %p205
        %p787 = pneg %p202
        %p788 = pneg %p226
        %p789 = pneg %p223
        %p790 = pneg %p247
        %p791 = pneg %p244
        %p792 = pneg %p268
        %p793 = pneg %p265
        %p794 = pneg %p289
        %p795 = pneg %p286
        %p796 = pneg %p310
        %p797 = pneg %p307
        %p798 = pneg %p331
        %p799 = pneg %p328
        %p800 = pneg %p352
        %p801 = pneg %p349
        %p802 = pneg %p373
        %p803 = pneg %p370
        %p804 = pneg %p394
        %p805 = pneg %p391
        %p806 = pneg %p415
        %p807 = pneg %p412
        %p808 = pneg %p436
        %p809 = pneg %p433
        %p810 = pneg %p457
        %p811 = pneg %p454
        %p812 = pneg %p478
        %p813 = pneg %p475
        %p814 = pneg %p499
        %p815 = pneg %p496
        %p816 = pneg %p520
        %p817 = pneg %p517
        %p818 = pneg %p541
        %p819 = pneg %p538
        %p820 = pneg %p562
        %p821 = pneg %p559
        %p822 = pneg %p583
        %p823 = pneg %p580
        %p824 = pneg %p609
        %p825 = pneg %p606
        %s826 = sand.u32 %s596, 1
        %s827 = scalar_lea.sflag [#allocation4], %s826
        %s828 = sand.u32 %s596, 1
        %s829 = smul.addr %s828, 8
        %s830 = scalar_lea.vmem [#allocation7], %s829
        %p831 = scmp.lt.s32.totalorder %s43, 1
        %s832 = scalar_select %p831, %s43, 1
        %s833 = smul.addr %s832, 8
        %s834 = scalar_lea.vmem %s2, %s833
        %p835 = scmp.lt.s32.totalorder %s43, 1
        %s836 = scalar_select %p835, %s43, 1
        %s837 = smul.addr %s836, 8
        %s838 = scalar_lea.vmem %s3, %s837
        %p839 = scmp.lt.s32.totalorder %s43, 1
        %s840 = scalar_select %p839, %s43, 1
        %s841 = scalar_lea.vmem %s4, %s840
        %v843 = vld [vmem:[%s752] sm:$0xff]
        %v844 = vld [vmem:[%s834] sm:$0xff]
        %v845 = vld [vmem:[%s838] sm:$0xff]
        %v846 = vld [vmem:[%s841] sm:$0x1]
        %s847 = sld [smem:[#allocation2]]
        %s848 = sld [smem:[#allocation2 + $0x1]]
        %vm849 = vcmask 261120
        %v850 = vsel %vm849, %v843, 0.0
        %851 = vadd.xlane.f32.xlu0 %v850
        %v852 = vpop.xlane.xlu0 %851
        %v853 = vrcp.pop 32.0
        %v854 = vmul.f32 %v852, %v853
        %v855 = vsub.f32 %v843, %v854
        %v856 = vmul.f32 %v855, %v855
        %v857 = vsel %vm849, %v856, 0.0
        %858 = vadd.xlane.f32.xlu0 %v857
        %v859 = vpop.xlane.xlu0 %858
        %v860 = vmul.f32 %v859, 0.032258064
        %v861 = vrsqrt.pop %v860
        %v862 = vmul.f32 %v860, %v861
        %vm863 = vcmp.eq.f32.partialorder %v860, inf
        %v864 = vsel %vm863, %v860, %v862
        %vm865 = vcmp.eq.f32.partialorder %v860, 0.0
        %v866 = vand.u32 %v860, 2147483648
        %v867 = vsel %vm865, %v866, %v864
        %v868 = vadd.f32 %v867, 1e-06
        %v869 = vrcp.pop %v868
        %v870 = vstv %s847
        %v871 = vmul.f32 %v870, %v869
        %v872 = vmul.f32 %v855, %v871
        %v873 = vstv %s848
        %v874 = vadd.f32 %v872, %v873
        %v875 = vld [vmem:[%s5] sm:$0xf]
        %v876 = vld [vmem:[%s5 + $0x4] sm:$0xf]
        %v877 = vld [vmem:[%s5 + $0x8] sm:$0xf]
        %v878 = vld [vmem:[%s5 + $0xc] sm:$0xf]
        %v879 = vld [vmem:[%s5 + $0x10] sm:$0xf]
        %v880 = vld [vmem:[%s5 + $0x14] sm:$0xf]
        %v881 = vld [vmem:[%s5 + $0x18] sm:$0xf]
        %v882 = vld [vmem:[%s5 + $0x1c] sm:$0xf]
        %v883 = vld [vmem:[%s5 + $0x20] sm:$0xf]
        %v884 = vld [vmem:[%s5 + $0x24] sm:$0xf]
        %v885 = vld [vmem:[%s5 + $0x28] sm:$0xf]
        %v886 = vld [vmem:[%s5 + $0x2c] sm:$0xf]
        %v887 = vld [vmem:[%s5 + $0x30] sm:$0xf]
        %v888 = vld [vmem:[%s5 + $0x34] sm:$0xf]
        %v889 = vld [vmem:[%s5 + $0x38] sm:$0xf]
        %v890 = vld [vmem:[%s5 + $0x3c] sm:$0xf]
        %v891 = vld [vmem:[%s6] sm:$0x1]
        %v892 = vld [vmem:[%s6 + $0x1] sm:$0x1]
        %v893 = vld [vmem:[%s6 + $0x2] sm:$0x1]
        %v894 = vld [vmem:[%s6 + $0x3] sm:$0x1]
        %v895 = vld [vmem:[%s7] sm:$0xf]
        %v896 = vld [vmem:[%s7 + $0x4] sm:$0xf]
        %v897 = vld [vmem:[%s7 + $0x8] sm:$0xf]
        %v898 = vld [vmem:[%s7 + $0xc] sm:$0xf]
        %v899 = vld [vmem:[%s7 + $0x10] sm:$0xf]
        %v900 = vld [vmem:[%s7 + $0x14] sm:$0xf]
        %v901 = vld [vmem:[%s7 + $0x18] sm:$0xf]
        %v902 = vld [vmem:[%s7 + $0x1c] sm:$0xf]
        %v903 = vld [vmem:[%s7 + $0x20] sm:$0xf]
        %v904 = vld [vmem:[%s7 + $0x24] sm:$0xf]
        %v905 = vld [vmem:[%s7 + $0x28] sm:$0xf]
        %v906 = vld [vmem:[%s7 + $0x2c] sm:$0xf]
        %v907 = vld [vmem:[%s7 + $0x30] sm:$0xf]
        %v908 = vld [vmem:[%s7 + $0x34] sm:$0xf]
        %v909 = vld [vmem:[%s7 + $0x38] sm:$0xf]
        %v910 = vld [vmem:[%s7 + $0x3c] sm:$0xf]
        %v911 = vld [vmem:[%s8] sm:$0x1]
        %v912 = vld [vmem:[%s8 + $0x1] sm:$0x1]
        %v913 = vld [vmem:[%s8 + $0x2] sm:$0x1]
        %v914 = vld [vmem:[%s8 + $0x3] sm:$0x1]
        %v915 = vld [vmem:[%s9] sm:$0xf]
        %v916 = vld [vmem:[%s9 + $0x4] sm:$0xf]
        %v917 = vld [vmem:[%s9 + $0x8] sm:$0xf]
        %v918 = vld [vmem:[%s9 + $0xc] sm:$0xf]
        %v919 = vld [vmem:[%s9 + $0x10] sm:$0xf]
        %v920 = vld [vmem:[%s9 + $0x14] sm:$0xf]
        %v921 = vld [vmem:[%s9 + $0x18] sm:$0xf]
        %v922 = vld [vmem:[%s9 + $0x1c] sm:$0xf]
        %v923 = vld [vmem:[%s9 + $0x20] sm:$0xf]
        %v924 = vld [vmem:[%s9 + $0x24] sm:$0xf]
        %v925 = vld [vmem:[%s9 + $0x28] sm:$0xf]
        %v926 = vld [vmem:[%s9 + $0x2c] sm:$0xf]
        %v927 = vld [vmem:[%s9 + $0x30] sm:$0xf]
        %v928 = vld [vmem:[%s9 + $0x34] sm:$0xf]
        %v929 = vld [vmem:[%s9 + $0x38] sm:$0xf]
        %v930 = vld [vmem:[%s9 + $0x3c] sm:$0xf]
        %v931 = vld [vmem:[%s10] sm:$0x1]
        %v932 = vld [vmem:[%s10 + $0x1] sm:$0x1]
        %v933 = vld [vmem:[%s10 + $0x2] sm:$0x1]
        %v934 = vld [vmem:[%s10 + $0x3] sm:$0x1]
        %v935 = vld [vmem:[%s11] sm:$0xf]
        %v936 = vld [vmem:[%s11 + $0x4] sm:$0xf]
        %v937 = vld [vmem:[%s11 + $0x8] sm:$0xf]
        %v938 = vld [vmem:[%s11 + $0xc] sm:$0xf]
        %v939 = vld [vmem:[%s12] sm:$0x1]
        %v940 = vpack.c.bf16 %v874, %v874
        %v945 = vlaneseq
        %v946 = vshrl.u32 %v945, 7
        %v947 = vsub.s32 0, %v946
        %v948 = vrot.slane %v891, %v947
        %v949 = vlaneseq
        %v950 = vshrl.u32 %v949, 7
        %v951 = vsub.s32 0, %v950
        %v952 = vrot.slane %v892, %v951
        %v953 = vlaneseq
        %v954 = vshrl.u32 %v953, 7
        %v955 = vsub.s32 0, %v954
        %v956 = vrot.slane %v893, %v955
        %v957 = vlaneseq
        %v958 = vshrl.u32 %v957, 7
        %v959 = vsub.s32 0, %v958
        %v960 = vrot.slane %v894, %v959
        %v969 = vunpack.c.l.b16 %v875
        %v970 = vunpack.c.l.b16 %v876
        %v971 = vunpack.c.l.b16 %v877
        %v972 = vunpack.c.l.b16 %v878
        %v973 = vpack.c.b16 %v970, %v969
        %v974 = vpack.c.b16 %v972, %v971
        %v978 = vsel %vm849, %v940, 0
        %980 = vmatprep.subr.bf16.mxu0 0
        %981 = vmatpush1.bf16.msra.mxu0 %v973
        %982 = vmatprep.subr.bf16.mxu0 0
        %983 = vmatpush1.bf16.msra.mxu0 %v974
        %984 = vmatprep.subr.bf16.mxu0 0
        %985 = vmatpush1.bf16.msra.mxu0 0
        %986 = vmatprep.subr.bf16.mxu0 0
        %987 = vmatpush1.bf16.msra.mxu0 0
        %988 = vmatprep.subr.bf16.mxu0 0
        %989 = vmatpush1.bf16.msra.mxu0 0
        %990 = vmatprep.subr.bf16.mxu0 0
        %991 = vmatpush1.bf16.msra.mxu0 0
        %992 = vmatprep.subr.bf16.mxu0 0
        %993 = vmatpush1.bf16.msra.mxu0 0
        %994 = vmatprep.subr.bf16.mxu0 0
        %995 = vmatpush1.bf16.msra.mxu0 0
        %996 = vmatprep.subr.bf16.mxu0 0
        %997 = vmatpush1.bf16.msra.mxu0 0
        %998 = vmatprep.subr.bf16.mxu0 0
        %999 = vmatpush1.bf16.msra.mxu0 0
        %1000 = vmatprep.subr.bf16.mxu0 0
        %1001 = vmatpush1.bf16.msra.mxu0 0
        %1002 = vmatprep.subr.bf16.mxu0 0
        %1003 = vmatpush1.bf16.msra.mxu0 0
        %1004 = vmatprep.subr.bf16.mxu0 0
        %1005 = vmatpush1.bf16.msra.mxu0 0
        %1006 = vmatprep.subr.bf16.mxu0 0
        %1007 = vmatpush1.bf16.msra.mxu0 0
        %1008 = vmatprep.subr.bf16.mxu0 0
        %1009 = vmatpush1.bf16.msra.mxu0 0
        %1010 = vmatprep.subr.bf16.mxu0 0
        %1011 = vmatpush1.bf16.msra.mxu0 0
        %1012 = vmatprep.mubr.bf16.mxu0 0
        %1013 = vmatmul.mubr.bf16.gmra.mrb[0].mxu0 %v978
        %v1014 = vpop.f32.mrb[0].mxu0
        %v1015 = vadd.f32 %v948, %v1014
        %v1016 = vpop.f32.mrb[0].mxu0
        %v1017 = vpop.f32.mrb[0].mxu0
        %v1018 = vpop.f32.mrb[0].mxu0
        %1019 = vdwg.mxu0
        %v1024 = vunpack.c.l.b16 %v879
        %v1025 = vunpack.c.l.b16 %v880
        %v1026 = vunpack.c.l.b16 %v881
        %v1027 = vunpack.c.l.b16 %v882
        %v1028 = vpack.c.b16 %v1025, %v1024
        %v1029 = vpack.c.b16 %v1027, %v1026
        %1032 = vmatprep.subr.bf16.mxu0 0
        %1033 = vmatpush1.bf16.msra.mxu0 %v1028
        %1034 = vmatprep.subr.bf16.mxu0 0
        %1035 = vmatpush1.bf16.msra.mxu0 %v1029
        %1036 = vmatprep.subr.bf16.mxu0 0
        %1037 = vmatpush1.bf16.msra.mxu0 0
        %1038 = vmatprep.subr.bf16.mxu0 0
        %1039 = vmatpush1.bf16.msra.mxu0 0
        %1040 = vmatprep.subr.bf16.mxu0 0
        %1041 = vmatpush1.bf16.msra.mxu0 0
        %1042 = vmatprep.subr.bf16.mxu0 0
        %1043 = vmatpush1.bf16.msra.mxu0 0
        %1044 = vmatprep.subr.bf16.mxu0 0
        %1045 = vmatpush1.bf16.msra.mxu0 0
        %1046 = vmatprep.subr.bf16.mxu0 0
        %1047 = vmatpush1.bf16.msra.mxu0 0
        %1048 = vmatprep.subr.bf16.mxu0 0
        %1049 = vmatpush1.bf16.msra.mxu0 0
        %1050 = vmatprep.subr.bf16.mxu0 0
        %1051 = vmatpush1.bf16.msra.mxu0 0
        %1052 = vmatprep.subr.bf16.mxu0 0
        %1053 = vmatpush1.bf16.msra.mxu0 0
        %1054 = vmatprep.subr.bf16.mxu0 0
        %1055 = vmatpush1.bf16.msra.mxu0 0
        %1056 = vmatprep.subr.bf16.mxu0 0
        %1057 = vmatpush1.bf16.msra.mxu0 0
        %1058 = vmatprep.subr.bf16.mxu0 0
        %1059 = vmatpush1.bf16.msra.mxu0 0
        %1060 = vmatprep.subr.bf16.mxu0 0
        %1061 = vmatpush1.bf16.msra.mxu0 0
        %1062 = vmatprep.subr.bf16.mxu0 0
        %1063 = vmatpush1.bf16.msra.mxu0 0
        %1064 = vmatprep.mubr.bf16.mxu0 0
        %1065 = vmatmul.mubr.bf16.gmra.mrb[0].mxu0 %v978
        %v1066 = vpop.f32.mrb[0].mxu0
        %v1067 = vadd.f32 %v952, %v1066
        %v1068 = vpop.f32.mrb[0].mxu0
        %v1069 = vpop.f32.mrb[0].mxu0
        %v1070 = vpop.f32.mrb[0].mxu0
        %1071 = vdwg.mxu0
        %v1076 = vunpack.c.l.b16 %v883
        %v1077 = vunpack.c.l.b16 %v884
        %v1078 = vunpack.c.l.b16 %v885
        %v1079 = vunpack.c.l.b16 %v886
        %v1080 = vpack.c.b16 %v1077, %v1076
        %v1081 = vpack.c.b16 %v1079, %v1078
        %1084 = vmatprep.subr.bf16.mxu0 0
        %1085 = vmatpush1.bf16.msra.mxu0 %v1080
        %1086 = vmatprep.subr.bf16.mxu0 0
        %1087 = vmatpush1.bf16.msra.mxu0 %v1081
        %1088 = vmatprep.subr.bf16.mxu0 0
        %1089 = vmatpush1.bf16.msra.mxu0 0
        %1090 = vmatprep.subr.bf16.mxu0 0
        %1091 = vmatpush1.bf16.msra.mxu0 0
        %1092 = vmatprep.subr.bf16.mxu0 0
        %1093 = vmatpush1.bf16.msra.mxu0 0
        %1094 = vmatprep.subr.bf16.mxu0 0
        %1095 = vmatpush1.bf16.msra.mxu0 0
        %1096 = vmatprep.subr.bf16.mxu0 0
        %1097 = vmatpush1.bf16.msra.mxu0 0
        %1098 = vmatprep.subr.bf16.mxu0 0
        %1099 = vmatpush1.bf16.msra.mxu0 0
        %1100 = vmatprep.subr.bf16.mxu0 0
        %1101 = vmatpush1.bf16.msra.mxu0 0
        %1102 = vmatprep.subr.bf16.mxu0 0
        %1103 = vmatpush1.bf16.msra.mxu0 0
        %1104 = vmatprep.subr.bf16.mxu0 0
        %1105 = vmatpush1.bf16.msra.mxu0 0
        %1106 = vmatprep.subr.bf16.mxu0 0
        %1107 = vmatpush1.bf16.msra.mxu0 0
        %1108 = vmatprep.subr.bf16.mxu0 0
        %1109 = vmatpush1.bf16.msra.mxu0 0
        %1110 = vmatprep.subr.bf16.mxu0 0
        %1111 = vmatpush1.bf16.msra.mxu0 0
        %1112 = vmatprep.subr.bf16.mxu0 0
        %1113 = vmatpush1.bf16.msra.mxu0 0
        %1114 = vmatprep.subr.bf16.mxu0 0
        %1115 = vmatpush1.bf16.msra.mxu0 0
        %1116 = vmatprep.mubr.bf16.mxu0 0
        %1117 = vmatmul.mubr.bf16.gmra.mrb[0].mxu0 %v978
        %v1118 = vpop.f32.mrb[0].mxu0
        %v1119 = vadd.f32 %v956, %v1118
        %v1120 = vpop.f32.mrb[0].mxu0
        %v1121 = vpop.f32.mrb[0].mxu0
        %v1122 = vpop.f32.mrb[0].mxu0
        %1123 = vdwg.mxu0
        %v1128 = vunpack.c.l.b16 %v887
        %v1129 = vunpack.c.l.b16 %v888
        %v1130 = vunpack.c.l.b16 %v889
        %v1131 = vunpack.c.l.b16 %v890
        %v1132 = vpack.c.b16 %v1129, %v1128
        %v1133 = vpack.c.b16 %v1131, %v1130
        %1136 = vmatprep.subr.bf16.mxu0 0
        %1137 = vmatpush1.bf16.msra.mxu0 %v1132
        %1138 = vmatprep.subr.bf16.mxu0 0
        %1139 = vmatpush1.bf16.msra.mxu0 %v1133
        %1140 = vmatprep.subr.bf16.mxu0 0
        %1141 = vmatpush1.bf16.msra.mxu0 0
        %1142 = vmatprep.subr.bf16.mxu0 0
        %1143 = vmatpush1.bf16.msra.mxu0 0
        %1144 = vmatprep.subr.bf16.mxu0 0
        %1145 = vmatpush1.bf16.msra.mxu0 0
        %1146 = vmatprep.subr.bf16.mxu0 0
        %1147 = vmatpush1.bf16.msra.mxu0 0
        %1148 = vmatprep.subr.bf16.mxu0 0
        %1149 = vmatpush1.bf16.msra.mxu0 0
        %1150 = vmatprep.subr.bf16.mxu0 0
        %1151 = vmatpush1.bf16.msra.mxu0 0
        %1152 = vmatprep.subr.bf16.mxu0 0
        %1153 = vmatpush1.bf16.msra.mxu0 0
        %1154 = vmatprep.subr.bf16.mxu0 0
        %1155 = vmatpush1.bf16.msra.mxu0 0
        %1156 = vmatprep.subr.bf16.mxu0 0
        %1157 = vmatpush1.bf16.msra.mxu0 0
        %1158 = vmatprep.subr.bf16.mxu0 0
        %1159 = vmatpush1.bf16.msra.mxu0 0
        %1160 = vmatprep.subr.bf16.mxu0 0
        %1161 = vmatpush1.bf16.msra.mxu0 0
        %1162 = vmatprep.subr.bf16.mxu0 0
        %1163 = vmatpush1.bf16.msra.mxu0 0
        %1164 = vmatprep.subr.bf16.mxu0 0
        %1165 = vmatpush1.bf16.msra.mxu0 0
        %1166 = vmatprep.subr.bf16.mxu0 0
        %1167 = vmatpush1.bf16.msra.mxu0 0
        %1168 = vmatprep.mubr.bf16.mxu0 0
        %1169 = vmatmul.mubr.bf16.gmra.mrb[0].mxu0 %v978
        %v1170 = vpop.f32.mrb[0].mxu0
        %v1171 = vadd.f32 %v960, %v1170
        %v1172 = vpop.f32.mrb[0].mxu0
        %v1173 = vpop.f32.mrb[0].mxu0
        %v1174 = vpop.f32.mrb[0].mxu0
        %1175 = vdwg.mxu0
        %v1180 = vlaneseq
        %v1181 = vshrl.u32 %v1180, 7
        %v1182 = vsub.s32 0, %v1181
        %v1183 = vrot.slane %v911, %v1182
        %v1184 = vlaneseq
        %v1185 = vshrl.u32 %v1184, 7
        %v1186 = vsub.s32 0, %v1185
        %v1187 = vrot.slane %v912, %v1186
        %v1188 = vlaneseq
        %v1189 = vshrl.u32 %v1188, 7
        %v1190 = vsub.s32 0, %v1189
        %v1191 = vrot.slane %v913, %v1190
        %v1192 = vlaneseq
        %v1193 = vshrl.u32 %v1192, 7
        %v1194 = vsub.s32 0, %v1193
        %v1195 = vrot.slane %v914, %v1194
        %v1204 = vunpack.c.l.b16 %v895
        %v1205 = vunpack.c.l.b16 %v896
        %v1206 = vunpack.c.l.b16 %v897
        %v1207 = vunpack.c.l.b16 %v898
        %v1208 = vpack.c.b16 %v1205, %v1204
        %v1209 = vpack.c.b16 %v1207, %v1206
        %1212 = vmatprep.subr.bf16.mxu0 0
        %1213 = vmatpush1.bf16.msra.mxu0 %v1208
        %1214 = vmatprep.subr.bf16.mxu0 0
        %1215 = vmatpush1.bf16.msra.mxu0 %v1209
        %1216 = vmatprep.subr.bf16.mxu0 0
        %1217 = vmatpush1.bf16.msra.mxu0 0
        %1218 = vmatprep.subr.bf16.mxu0 0
        %1219 = vmatpush1.bf16.msra.mxu0 0
        %1220 = vmatprep.subr.bf16.mxu0 0
        %1221 = vmatpush1.bf16.msra.mxu0 0
        %1222 = vmatprep.subr.bf16.mxu0 0
        %1223 = vmatpush1.bf16.msra.mxu0 0
        %1224 = vmatprep.subr.bf16.mxu0 0
        %1225 = vmatpush1.bf16.msra.mxu0 0
        %1226 = vmatprep.subr.bf16.mxu0 0
        %1227 = vmatpush1.bf16.msra.mxu0 0
        %1228 = vmatprep.subr.bf16.mxu0 0
        %1229 = vmatpush1.bf16.msra.mxu0 0
        %1230 = vmatprep.subr.bf16.mxu0 0
        %1231 = vmatpush1.bf16.msra.mxu0 0
        %1232 = vmatprep.subr.bf16.mxu0 0
        %1233 = vmatpush1.bf16.msra.mxu0 0
        %1234 = vmatprep.subr.bf16.mxu0 0
        %1235 = vmatpush1.bf16.msra.mxu0 0
        %1236 = vmatprep.subr.bf16.mxu0 0
        %1237 = vmatpush1.bf16.msra.mxu0 0
        %1238 = vmatprep.subr.bf16.mxu0 0
        %1239 = vmatpush1.bf16.msra.mxu0 0
        %1240 = vmatprep.subr.bf16.mxu0 0
        %1241 = vmatpush1.bf16.msra.mxu0 0
        %1242 = vmatprep.subr.bf16.mxu0 0
        %1243 = vmatpush1.bf16.msra.mxu0 0
        %1244 = vmatprep.mubr.bf16.mxu0 0
        %1245 = vmatmul.mubr.bf16.gmra.mrb[0].mxu0 %v978
        %v1246 = vpop.f32.mrb[0].mxu0
        %v1247 = vadd.f32 %v1183, %v1246
        %v1248 = vpop.f32.mrb[0].mxu0
        %v1249 = vpop.f32.mrb[0].mxu0
        %v1250 = vpop.f32.mrb[0].mxu0
        %1251 = vdwg.mxu0
        %v1256 = vunpack.c.l.b16 %v899
        %v1257 = vunpack.c.l.b16 %v900
        %v1258 = vunpack.c.l.b16 %v901
        %v1259 = vunpack.c.l.b16 %v902
        %v1260 = vpack.c.b16 %v1257, %v1256
        %v1261 = vpack.c.b16 %v1259, %v1258
        %1264 = vmatprep.subr.bf16.mxu0 0
        %1265 = vmatpush1.bf16.msra.mxu0 %v1260
        %1266 = vmatprep.subr.bf16.mxu0 0
        %1267 = vmatpush1.bf16.msra.mxu0 %v1261
        %1268 = vmatprep.subr.bf16.mxu0 0
        %1269 = vmatpush1.bf16.msra.mxu0 0
        %1270 = vmatprep.subr.bf16.mxu0 0
        %1271 = vmatpush1.bf16.msra.mxu0 0
        %1272 = vmatprep.subr.bf16.mxu0 0
        %1273 = vmatpush1.bf16.msra.mxu0 0
        %1274 = vmatprep.subr.bf16.mxu0 0
        %1275 = vmatpush1.bf16.msra.mxu0 0
        %1276 = vmatprep.subr.bf16.mxu0 0
        %1277 = vmatpush1.bf16.msra.mxu0 0
        %1278 = vmatprep.subr.bf16.mxu0 0
        %1279 = vmatpush1.bf16.msra.mxu0 0
        %1280 = vmatprep.subr.bf16.mxu0 0
        %1281 = vmatpush1.bf16.msra.mxu0 0
        %1282 = vmatprep.subr.bf16.mxu0 0
        %1283 = vmatpush1.bf16.msra.mxu0 0
        %1284 = vmatprep.subr.bf16.mxu0 0
        %1285 = vmatpush1.bf16.msra.mxu0 0
        %1286 = vmatprep.subr.bf16.mxu0 0
        %1287 = vmatpush1.bf16.msra.mxu0 0
        %1288 = vmatprep.subr.bf16.mxu0 0
        %1289 = vmatpush1.bf16.msra.mxu0 0
        %1290 = vmatprep.subr.bf16.mxu0 0
        %1291 = vmatpush1.bf16.msra.mxu0 0
        %1292 = vmatprep.subr.bf16.mxu0 0
        %1293 = vmatpush1.bf16.msra.mxu0 0
        %1294 = vmatprep.subr.bf16.mxu0 0
        %1295 = vmatpush1.bf16.msra.mxu0 0
        %1296 = vmatprep.mubr.bf16.mxu0 0
        %1297 = vmatmul.mubr.bf16.gmra.mrb[0].mxu0 %v978
        %v1298 = vpop.f32.mrb[0].mxu0
        %v1299 = vadd.f32 %v1187, %v1298
        %v1300 = vpop.f32.mrb[0].mxu0
        %v1301 = vpop.f32.mrb[0].mxu0
        %v1302 = vpop.f32.mrb[0].mxu0
        %1303 = vdwg.mxu0
        %v1308 = vunpack.c.l.b16 %v903
        %v1309 = vunpack.c.l.b16 %v904
        %v1310 = vunpack.c.l.b16 %v905
        %v1311 = vunpack.c.l.b16 %v906
        %v1312 = vpack.c.b16 %v1309, %v1308
        %v1313 = vpack.c.b16 %v1311, %v1310
        %1316 = vmatprep.subr.bf16.mxu0 0
        %1317 = vmatpush1.bf16.msra.mxu0 %v1312
        %1318 = vmatprep.subr.bf16.mxu0 0
        %1319 = vmatpush1.bf16.msra.mxu0 %v1313
        %1320 = vmatprep.subr.bf16.mxu0 0
        %1321 = vmatpush1.bf16.msra.mxu0 0
        %1322 = vmatprep.subr.bf16.mxu0 0
        %1323 = vmatpush1.bf16.msra.mxu0 0
        %1324 = vmatprep.subr.bf16.mxu0 0
        %1325 = vmatpush1.bf16.msra.mxu0 0
        %1326 = vmatprep.subr.bf16.mxu0 0
        %1327 = vmatpush1.bf16.msra.mxu0 0
        %1328 = vmatprep.subr.bf16.mxu0 0
        %1329 = vmatpush1.bf16.msra.mxu0 0
        %1330 = vmatprep.subr.bf16.mxu0 0
        %1331 = vmatpush1.bf16.msra.mxu0 0
        %1332 = vmatprep.subr.bf16.mxu0 0
        %1333 = vmatpush1.bf16.msra.mxu0 0
        %1334 = vmatprep.subr.bf16.mxu0 0
        %1335 = vmatpush1.bf16.msra.mxu0 0
        %1336 = vmatprep.subr.bf16.mxu0 0
        %1337 = vmatpush1.bf16.msra.mxu0 0
        %1338 = vmatprep.subr.bf16.mxu0 0
        %1339 = vmatpush1.bf16.msra.mxu0 0
        %1340 = vmatprep.subr.bf16.mxu0 0
        %1341 = vmatpush1.bf16.msra.mxu0 0
        %1342 = vmatprep.subr.bf16.mxu0 0
        %1343 = vmatpush1.bf16.msra.mxu0 0
        %1344 = vmatprep.subr.bf16.mxu0 0
        %1345 = vmatpush1.bf16.msra.mxu0 0
        %1346 = vmatprep.subr.bf16.mxu0 0
        %1347 = vmatpush1.bf16.msra.mxu0 0
        %1348 = vmatprep.mubr.bf16.mxu0 0
        %1349 = vmatmul.mubr.bf16.gmra.mrb[0].mxu0 %v978
        %v1350 = vpop.f32.mrb[0].mxu0
        %v1351 = vadd.f32 %v1191, %v1350
        %v1352 = vpop.f32.mrb[0].mxu0
        %v1353 = vpop.f32.mrb[0].mxu0
        %v1354 = vpop.f32.mrb[0].mxu0
        %1355 = vdwg.mxu0
        %v1360 = vunpack.c.l.b16 %v907
        %v1361 = vunpack.c.l.b16 %v908
        %v1362 = vunpack.c.l.b16 %v909
        %v1363 = vunpack.c.l.b16 %v910
        %v1364 = vpack.c.b16 %v1361, %v1360
        %v1365 = vpack.c.b16 %v1363, %v1362
        %1368 = vmatprep.subr.bf16.mxu0 0
        %1369 = vmatpush1.bf16.msra.mxu0 %v1364
        %1370 = vmatprep.subr.bf16.mxu0 0
        %1371 = vmatpush1.bf16.msra.mxu0 %v1365
        %1372 = vmatprep.subr.bf16.mxu0 0
        %1373 = vmatpush1.bf16.msra.mxu0 0
        %1374 = vmatprep.subr.bf16.mxu0 0
        %1375 = vmatpush1.bf16.msra.mxu0 0
        %1376 = vmatprep.subr.bf16.mxu0 0
        %1377 = vmatpush1.bf16.msra.mxu0 0
        %1378 = vmatprep.subr.bf16.mxu0 0
        %1379 = vmatpush1.bf16.msra.mxu0 0
        %1380 = vmatprep.subr.bf16.mxu0 0
        %1381 = vmatpush1.bf16.msra.mxu0 0
        %1382 = vmatprep.subr.bf16.mxu0 0
        %1383 = vmatpush1.bf16.msra.mxu0 0
        %1384 = vmatprep.subr.bf16.mxu0 0
        %1385 = vmatpush1.bf16.msra.mxu0 0
        %1386 = vmatprep.subr.bf16.mxu0 0
        %1387 = vmatpush1.bf16.msra.mxu0 0
        %1388 = vmatprep.subr.bf16.mxu0 0
        %1389 = vmatpush1.bf16.msra.mxu0 0
        %1390 = vmatprep.subr.bf16.mxu0 0
        %1391 = vmatpush1.bf16.msra.mxu0 0
        %1392 = vmatprep.subr.bf16.mxu0 0
        %1393 = vmatpush1.bf16.msra.mxu0 0
        %1394 = vmatprep.subr.bf16.mxu0 0
        %1395 = vmatpush1.bf16.msra.mxu0 0
        %1396 = vmatprep.subr.bf16.mxu0 0
        %1397 = vmatpush1.bf16.msra.mxu0 0
        %1398 = vmatprep.subr.bf16.mxu0 0
        %1399 = vmatpush1.bf16.msra.mxu0 0
        %1400 = vmatprep.mubr.bf16.mxu0 0
        %1401 = vmatmul.mubr.bf16.gmra.mrb[0].mxu0 %v978
        %v1402 = vpop.f32.mrb[0].mxu0
        %v1403 = vadd.f32 %v1195, %v1402
        %v1404 = vpop.f32.mrb[0].mxu0
        %v1405 = vpop.f32.mrb[0].mxu0
        %v1406 = vpop.f32.mrb[0].mxu0
        %1407 = vdwg.mxu0
        %v1412 = vlaneseq
        %v1413 = vshrl.u32 %v1412, 7
        %v1414 = vsub.s32 0, %v1413
        %v1415 = vrot.slane %v931, %v1414
        %v1416 = vlaneseq
        %v1417 = vshrl.u32 %v1416, 7
        %v1418 = vsub.s32 0, %v1417
        %v1419 = vrot.slane %v932, %v1418
        %v1420 = vlaneseq
        %v1421 = vshrl.u32 %v1420, 7
        %v1422 = vsub.s32 0, %v1421
        %v1423 = vrot.slane %v933, %v1422
        %v1424 = vlaneseq
        %v1425 = vshrl.u32 %v1424, 7
        %v1426 = vsub.s32 0, %v1425
        %v1427 = vrot.slane %v934, %v1426
        %v1436 = vunpack.c.l.b16 %v915
        %v1437 = vunpack.c.l.b16 %v916
        %v1438 = vunpack.c.l.b16 %v917
        %v1439 = vunpack.c.l.b16 %v918
        %v1440 = vpack.c.b16 %v1437, %v1436
        %v1441 = vpack.c.b16 %v1439, %v1438
        %1444 = vmatprep.subr.bf16.mxu0 0
        %1445 = vmatpush1.bf16.msra.mxu0 %v1440
        %1446 = vmatprep.subr.bf16.mxu0 0
        %1447 = vmatpush1.bf16.msra.mxu0 %v1441
        %1448 = vmatprep.subr.bf16.mxu0 0
        %1449 = vmatpush1.bf16.msra.mxu0 0
        %1450 = vmatprep.subr.bf16.mxu0 0
        %1451 = vmatpush1.bf16.msra.mxu0 0
        %1452 = vmatprep.subr.bf16.mxu0 0
        %1453 = vmatpush1.bf16.msra.mxu0 0
        %1454 = vmatprep.subr.bf16.mxu0 0
        %1455 = vmatpush1.bf16.msra.mxu0 0
        %1456 = vmatprep.subr.bf16.mxu0 0
        %1457 = vmatpush1.bf16.msra.mxu0 0
        %1458 = vmatprep.subr.bf16.mxu0 0
        %1459 = vmatpush1.bf16.msra.mxu0 0
        %1460 = vmatprep.subr.bf16.mxu0 0
        %1461 = vmatpush1.bf16.msra.mxu0 0
        %1462 = vmatprep.subr.bf16.mxu0 0
        %1463 = vmatpush1.bf16.msra.mxu0 0
        %1464 = vmatprep.subr.bf16.mxu0 0
        %1465 = vmatpush1.bf16.msra.mxu0 0
        %1466 = vmatprep.subr.bf16.mxu0 0
        %1467 = vmatpush1.bf16.msra.mxu0 0
        %1468 = vmatprep.subr.bf16.mxu0 0
        %1469 = vmatpush1.bf16.msra.mxu0 0
        %1470 = vmatprep.subr.bf16.mxu0 0
        %1471 = vmatpush1.bf16.msra.mxu0 0
        %1472 = vmatprep.subr.bf16.mxu0 0
        %1473 = vmatpush1.bf16.msra.mxu0 0
        %1474 = vmatprep.subr.bf16.mxu0 0
        %1475 = vmatpush1.bf16.msra.mxu0 0
        %1476 = vmatprep.mubr.bf16.mxu0 0
        %1477 = vmatmul.mubr.bf16.gmra.mrb[0].mxu0 %v978
        %v1478 = vpop.f32.mrb[0].mxu0
        %v1479 = vadd.f32 %v1415, %v1478
        %v1480 = vpop.f32.mrb[0].mxu0
        %v1481 = vpop.f32.mrb[0].mxu0
        %v1482 = vpop.f32.mrb[0].mxu0
        %1483 = vdwg.mxu0
        %v1488 = vunpack.c.l.b16 %v919
        %v1489 = vunpack.c.l.b16 %v920
        %v1490 = vunpack.c.l.b16 %v921
        %v1491 = vunpack.c.l.b16 %v922
        %v1492 = vpack.c.b16 %v1489, %v1488
        %v1493 = vpack.c.b16 %v1491, %v1490
        %1496 = vmatprep.subr.bf16.mxu0 0
        %1497 = vmatpush1.bf16.msra.mxu0 %v1492
        %1498 = vmatprep.subr.bf16.mxu0 0
        %1499 = vmatpush1.bf16.msra.mxu0 %v1493
        %1500 = vmatprep.subr.bf16.mxu0 0
        %1501 = vmatpush1.bf16.msra.mxu0 0
        %1502 = vmatprep.subr.bf16.mxu0 0
        %1503 = vmatpush1.bf16.msra.mxu0 0
        %1504 = vmatprep.subr.bf16.mxu0 0
        %1505 = vmatpush1.bf16.msra.mxu0 0
        %1506 = vmatprep.subr.bf16.mxu0 0
        %1507 = vmatpush1.bf16.msra.mxu0 0
        %1508 = vmatprep.subr.bf16.mxu0 0
        %1509 = vmatpush1.bf16.msra.mxu0 0
        %1510 = vmatprep.subr.bf16.mxu0 0
        %1511 = vmatpush1.bf16.msra.mxu0 0
        %1512 = vmatprep.subr.bf16.mxu0 0
        %1513 = vmatpush1.bf16.msra.mxu0 0
        %1514 = vmatprep.subr.bf16.mxu0 0
        %1515 = vmatpush1.bf16.msra.mxu0 0
        %1516 = vmatprep.subr.bf16.mxu0 0
        %1517 = vmatpush1.bf16.msra.mxu0 0
        %1518 = vmatprep.subr.bf16.mxu0 0
        %1519 = vmatpush1.bf16.msra.mxu0 0
        %1520 = vmatprep.subr.bf16.mxu0 0
        %1521 = vmatpush1.bf16.msra.mxu0 0
        %1522 = vmatprep.subr.bf16.mxu0 0
        %1523 = vmatpush1.bf16.msra.mxu0 0
        %1524 = vmatprep.subr.bf16.mxu0 0
        %1525 = vmatpush1.bf16.msra.mxu0 0
        %1526 = vmatprep.subr.bf16.mxu0 0
        %1527 = vmatpush1.bf16.msra.mxu0 0
        %1528 = vmatprep.mubr.bf16.mxu0 0
        %1529 = vmatmul.mubr.bf16.gmra.mrb[0].mxu0 %v978
        %v1530 = vpop.f32.mrb[0].mxu0
        %v1531 = vadd.f32 %v1419, %v1530
        %v1532 = vpop.f32.mrb[0].mxu0
        %v1533 = vpop.f32.mrb[0].mxu0
        %v1534 = vpop.f32.mrb[0].mxu0
        %1535 = vdwg.mxu0
        %v1540 = vunpack.c.l.b16 %v923
        %v1541 = vunpack.c.l.b16 %v924
        %v1542 = vunpack.c.l.b16 %v925
        %v1543 = vunpack.c.l.b16 %v926
        %v1544 = vpack.c.b16 %v1541, %v1540
        %v1545 = vpack.c.b16 %v1543, %v1542
        %1548 = vmatprep.subr.bf16.mxu0 0
        %1549 = vmatpush1.bf16.msra.mxu0 %v1544
        %1550 = vmatprep.subr.bf16.mxu0 0
        %1551 = vmatpush1.bf16.msra.mxu0 %v1545
        %1552 = vmatprep.subr.bf16.mxu0 0
        %1553 = vmatpush1.bf16.msra.mxu0 0
        %1554 = vmatprep.subr.bf16.mxu0 0
        %1555 = vmatpush1.bf16.msra.mxu0 0
        %1556 = vmatprep.subr.bf16.mxu0 0
        %1557 = vmatpush1.bf16.msra.mxu0 0
        %1558 = vmatprep.subr.bf16.mxu0 0
        %1559 = vmatpush1.bf16.msra.mxu0 0
        %1560 = vmatprep.subr.bf16.mxu0 0
        %1561 = vmatpush1.bf16.msra.mxu0 0
        %1562 = vmatprep.subr.bf16.mxu0 0
        %1563 = vmatpush1.bf16.msra.mxu0 0
        %1564 = vmatprep.subr.bf16.mxu0 0
        %1565 = vmatpush1.bf16.msra.mxu0 0
        %1566 = vmatprep.subr.bf16.mxu0 0
        %1567 = vmatpush1.bf16.msra.mxu0 0
        %1568 = vmatprep.subr.bf16.mxu0 0
        %1569 = vmatpush1.bf16.msra.mxu0 0
        %1570 = vmatprep.subr.bf16.mxu0 0
        %1571 = vmatpush1.bf16.msra.mxu0 0
        %1572 = vmatprep.subr.bf16.mxu0 0
        %1573 = vmatpush1.bf16.msra.mxu0 0
        %1574 = vmatprep.subr.bf16.mxu0 0
        %1575 = vmatpush1.bf16.msra.mxu0 0
        %1576 = vmatprep.subr.bf16.mxu0 0
        %1577 = vmatpush1.bf16.msra.mxu0 0
        %1578 = vmatprep.subr.bf16.mxu0 0
        %1579 = vmatpush1.bf16.msra.mxu0 0
        %1580 = vmatprep.mubr.bf16.mxu0 0
        %1581 = vmatmul.mubr.bf16.gmra.mrb[0].mxu0 %v978
        %v1582 = vpop.f32.mrb[0].mxu0
        %v1583 = vadd.f32 %v1423, %v1582
        %v1584 = vpop.f32.mrb[0].mxu0
        %v1585 = vpop.f32.mrb[0].mxu0
        %v1586 = vpop.f32.mrb[0].mxu0
        %1587 = vdwg.mxu0
        %v1592 = vunpack.c.l.b16 %v927
        %v1593 = vunpack.c.l.b16 %v928
        %v1594 = vunpack.c.l.b16 %v929
        %v1595 = vunpack.c.l.b16 %v930
        %v1596 = vpack.c.b16 %v1593, %v1592
        %v1597 = vpack.c.b16 %v1595, %v1594
        %1600 = vmatprep.subr.bf16.mxu0 0
        %1601 = vmatpush1.bf16.msra.mxu0 %v1596
        %1602 = vmatprep.subr.bf16.mxu0 0
        %1603 = vmatpush1.bf16.msra.mxu0 %v1597
        %1604 = vmatprep.subr.bf16.mxu0 0
        %1605 = vmatpush1.bf16.msra.mxu0 0
        %1606 = vmatprep.subr.bf16.mxu0 0
        %1607 = vmatpush1.bf16.msra.mxu0 0
        %1608 = vmatprep.subr.bf16.mxu0 0
        %1609 = vmatpush1.bf16.msra.mxu0 0
        %1610 = vmatprep.subr.bf16.mxu0 0
        %1611 = vmatpush1.bf16.msra.mxu0 0
        %1612 = vmatprep.subr.bf16.mxu0 0
        %1613 = vmatpush1.bf16.msra.mxu0 0
        %1614 = vmatprep.subr.bf16.mxu0 0
        %1615 = vmatpush1.bf16.msra.mxu0 0
        %1616 = vmatprep.subr.bf16.mxu0 0
        %1617 = vmatpush1.bf16.msra.mxu0 0
        %1618 = vmatprep.subr.bf16.mxu0 0
        %1619 = vmatpush1.bf16.msra.mxu0 0
        %1620 = vmatprep.subr.bf16.mxu0 0
        %1621 = vmatpush1.bf16.msra.mxu0 0
        %1622 = vmatprep.subr.bf16.mxu0 0
        %1623 = vmatpush1.bf16.msra.mxu0 0
        %1624 = vmatprep.subr.bf16.mxu0 0
        %1625 = vmatpush1.bf16.msra.mxu0 0
        %1626 = vmatprep.subr.bf16.mxu0 0
        %1627 = vmatpush1.bf16.msra.mxu0 0
        %1628 = vmatprep.subr.bf16.mxu0 0
        %1629 = vmatpush1.bf16.msra.mxu0 0
        %1630 = vmatprep.subr.bf16.mxu0 0
        %1631 = vmatpush1.bf16.msra.mxu0 0
        %1632 = vmatprep.mubr.bf16.mxu0 0
        %1633 = vmatmul.mubr.bf16.gmra.mrb[0].mxu0 %v978
        %v1634 = vpop.f32.mrb[0].mxu0
        %v1635 = vadd.f32 %v1427, %v1634
        %v1636 = vpop.f32.mrb[0].mxu0
        %v1637 = vpop.f32.mrb[0].mxu0
        %v1638 = vpop.f32.mrb[0].mxu0
        %1639 = vdwg.mxu0
        %v1640 = vpack.c.bf16 %v1015, %v1015
        %v1641 = vpack.c.bf16 %v1067, %v1067
        %v1642 = vpack.c.bf16 %v1119, %v1119
        %v1643 = vpack.c.bf16 %v1171, %v1171
        %v1644 = vpack.c.bf16 %v1247, %v1247
        %v1645 = vpack.c.bf16 %v1299, %v1299
        %v1646 = vpack.c.bf16 %v1351, %v1351
        %v1647 = vpack.c.bf16 %v1403, %v1403
        %vm1648 = vcmask 64512
        %v1650 = vsel %vm1648, %v1640, 0
        %v1653 = vsel %vm1648, %v1644, 0
        %1655 = vmatprep.subr.bf16.mxu0 0
        %1656 = vmatpush1.bf16.xpose.msra.mxu0 %v1653
        %1657 = vmatprep.subr.bf16.mxu0 0
        %1658 = vmatpush1.bf16.xpose.msra.mxu0 0
        %1659 = vmatprep.subr.bf16.mxu0 0
        %1660 = vmatpush1.bf16.xpose.msra.mxu0 0
        %1661 = vmatprep.subr.bf16.mxu0 0
        %1662 = vmatpush1.bf16.xpose.msra.mxu0 0
        %1663 = vmatprep.subr.bf16.mxu0 0
        %1664 = vmatpush1.bf16.xpose.msra.mxu0 0
        %1665 = vmatprep.subr.bf16.mxu0 0
        %1666 = vmatpush1.bf16.xpose.msra.mxu0 0
        %1667 = vmatprep.subr.bf16.mxu0 0
        %1668 = vmatpush1.bf16.xpose.msra.mxu0 0
        %1669 = vmatprep.subr.bf16.mxu0 0
        %1670 = vmatpush1.bf16.xpose.msra.mxu0 0
        %1671 = vmatprep.subr.bf16.mxu0 0
        %1672 = vmatpush1.bf16.xpose.msra.mxu0 0
        %1673 = vmatprep.subr.bf16.mxu0 0
        %1674 = vmatpush1.bf16.xpose.msra.mxu0 0
        %1675 = vmatprep.subr.bf16.mxu0 0
        %1676 = vmatpush1.bf16.xpose.msra.mxu0 0
        %1677 = vmatprep.subr.bf16.mxu0 0
        %1678 = vmatpush1.bf16.xpose.msra.mxu0 0
        %1679 = vmatprep.subr.bf16.mxu0 0
        %1680 = vmatpush1.bf16.xpose.msra.mxu0 0
        %1681 = vmatprep.subr.bf16.mxu0 0
        %1682 = vmatpush1.bf16.xpose.msra.mxu0 0
        %1683 = vmatprep.subr.bf16.mxu0 0
        %1684 = vmatpush1.bf16.xpose.msra.mxu0 0
        %1685 = vmatprep.subr.bf16.mxu0 0
        %1686 = vmatpush1.bf16.xpose.msra.mxu0 0
        %1687 = vmatprep.mubr.bf16.mxu0 0
        %1688 = vmatmul.mubr.bf16.gmra.mrb[0].mxu0 %v1650
        %v1689 = vpop.f32.mrb[0].mxu0
        %v1690 = vadd.f32 0.0, %v1689
        %v1691 = vpop.f32.mrb[0].mxu0
        %v1692 = vpop.f32.mrb[0].mxu0
        %v1693 = vpop.f32.mrb[0].mxu0
        %1694 = vdwg.mxu0
        %v1696 = vsel %vm1648, %v1641, 0
        %v1699 = vsel %vm1648, %v1645, 0
        %1701 = vmatprep.subr.bf16.mxu0 0
        %1702 = vmatpush1.bf16.xpose.msra.mxu0 %v1699
        %1703 = vmatprep.subr.bf16.mxu0 0
        %1704 = vmatpush1.bf16.xpose.msra.mxu0 0
        %1705 = vmatprep.subr.bf16.mxu0 0
        %1706 = vmatpush1.bf16.xpose.msra.mxu0 0
        %1707 = vmatprep.subr.bf16.mxu0 0
        %1708 = vmatpush1.bf16.xpose.msra.mxu0 0
        %1709 = vmatprep.subr.bf16.mxu0 0
        %1710 = vmatpush1.bf16.xpose.msra.mxu0 0
        %1711 = vmatprep.subr.bf16.mxu0 0
        %1712 = vmatpush1.bf16.xpose.msra.mxu0 0
        %1713 = vmatprep.subr.bf16.mxu0 0
        %1714 = vmatpush1.bf16.xpose.msra.mxu0 0
        %1715 = vmatprep.subr.bf16.mxu0 0
        %1716 = vmatpush1.bf16.xpose.msra.mxu0 0
        %1717 = vmatprep.subr.bf16.mxu0 0
        %1718 = vmatpush1.bf16.xpose.msra.mxu0 0
        %1719 = vmatprep.subr.bf16.mxu0 0
        %1720 = vmatpush1.bf16.xpose.msra.mxu0 0
        %1721 = vmatprep.subr.bf16.mxu0 0
        %1722 = vmatpush1.bf16.xpose.msra.mxu0 0
        %1723 = vmatprep.subr.bf16.mxu0 0
        %1724 = vmatpush1.bf16.xpose.msra.mxu0 0
        %1725 = vmatprep.subr.bf16.mxu0 0
        %1726 = vmatpush1.bf16.xpose.msra.mxu0 0
        %1727 = vmatprep.subr.bf16.mxu0 0
        %1728 = vmatpush1.bf16.xpose.msra.mxu0 0
        %1729 = vmatprep.subr.bf16.mxu0 0
        %1730 = vmatpush1.bf16.xpose.msra.mxu0 0
        %1731 = vmatprep.subr.bf16.mxu0 0
        %1732 = vmatpush1.bf16.xpose.msra.mxu0 0
        %1733 = vmatprep.mubr.bf16.mxu0 0
        %1734 = vmatmul.mubr.bf16.gmra.mrb[0].mxu0 %v1696
        %v1735 = vpop.f32.mrb[0].mxu0
        %v1736 = vadd.f32 0.0, %v1735
        %v1737 = vpop.f32.mrb[0].mxu0
        %v1738 = vpop.f32.mrb[0].mxu0
        %v1739 = vpop.f32.mrb[0].mxu0
        %1740 = vdwg.mxu0
        %v1742 = vsel %vm1648, %v1642, 0
        %v1745 = vsel %vm1648, %v1646, 0
        %1747 = vmatprep.subr.bf16.mxu0 0
        %1748 = vmatpush1.bf16.xpose.msra.mxu0 %v1745
        %1749 = vmatprep.subr.bf16.mxu0 0
        %1750 = vmatpush1.bf16.xpose.msra.mxu0 0
        %1751 = vmatprep.subr.bf16.mxu0 0
        %1752 = vmatpush1.bf16.xpose.msra.mxu0 0
        %1753 = vmatprep.subr.bf16.mxu0 0
        %1754 = vmatpush1.bf16.xpose.msra.mxu0 0
        %1755 = vmatprep.subr.bf16.mxu0 0
        %1756 = vmatpush1.bf16.xpose.msra.mxu0 0
        %1757 = vmatprep.subr.bf16.mxu0 0
        %1758 = vmatpush1.bf16.xpose.msra.mxu0 0
        %1759 = vmatprep.subr.bf16.mxu0 0
        %1760 = vmatpush1.bf16.xpose.msra.mxu0 0
        %1761 = vmatprep.subr.bf16.mxu0 0
        %1762 = vmatpush1.bf16.xpose.msra.mxu0 0
        %1763 = vmatprep.subr.bf16.mxu0 0
        %1764 = vmatpush1.bf16.xpose.msra.mxu0 0
        %1765 = vmatprep.subr.bf16.mxu0 0
        %1766 = vmatpush1.bf16.xpose.msra.mxu0 0
        %1767 = vmatprep.subr.bf16.mxu0 0
        %1768 = vmatpush1.bf16.xpose.msra.mxu0 0
        %1769 = vmatprep.subr.bf16.mxu0 0
        %1770 = vmatpush1.bf16.xpose.msra.mxu0 0
        %1771 = vmatprep.subr.bf16.mxu0 0
        %1772 = vmatpush1.bf16.xpose.msra.mxu0 0
        %1773 = vmatprep.subr.bf16.mxu0 0
        %1774 = vmatpush1.bf16.xpose.msra.mxu0 0
        %1775 = vmatprep.subr.bf16.mxu0 0
        %1776 = vmatpush1.bf16.xpose.msra.mxu0 0
        %1777 = vmatprep.subr.bf16.mxu0 0
        %1778 = vmatpush1.bf16.xpose.msra.mxu0 0
        %1779 = vmatprep.mubr.bf16.mxu0 0
        %1780 = vmatmul.mubr.bf16.gmra.mrb[0].mxu0 %v1742
        %v1781 = vpop.f32.mrb[0].mxu0
        %v1782 = vadd.f32 0.0, %v1781
        %v1783 = vpop.f32.mrb[0].mxu0
        %v1784 = vpop.f32.mrb[0].mxu0
        %v1785 = vpop.f32.mrb[0].mxu0
        %1786 = vdwg.mxu0
        %v1788 = vsel %vm1648, %v1643, 0
        %v1791 = vsel %vm1648, %v1647, 0
        %1793 = vmatprep.subr.bf16.mxu0 0
        %1794 = vmatpush1.bf16.xpose.msra.mxu0 %v1791
        %1795 = vmatprep.subr.bf16.mxu0 0
        %1796 = vmatpush1.bf16.xpose.msra.mxu0 0
        %1797 = vmatprep.subr.bf16.mxu0 0
        %1798 = vmatpush1.bf16.xpose.msra.mxu0 0
        %1799 = vmatprep.subr.bf16.mxu0 0
        %1800 = vmatpush1.bf16.xpose.msra.mxu0 0
        %1801 = vmatprep.subr.bf16.mxu0 0
        %1802 = vmatpush1.bf16.xpose.msra.mxu0 0
        %1803 = vmatprep.subr.bf16.mxu0 0
        %1804 = vmatpush1.bf16.xpose.msra.mxu0 0
        %1805 = vmatprep.subr.bf16.mxu0 0
        %1806 = vmatpush1.bf16.xpose.msra.mxu0 0
        %1807 = vmatprep.subr.bf16.mxu0 0
        %1808 = vmatpush1.bf16.xpose.msra.mxu0 0
        %1809 = vmatprep.subr.bf16.mxu0 0
        %1810 = vmatpush1.bf16.xpose.msra.mxu0 0
        %1811 = vmatprep.subr.bf16.mxu0 0
        %1812 = vmatpush1.bf16.xpose.msra.mxu0 0
        %1813 = vmatprep.subr.bf16.mxu0 0
        %1814 = vmatpush1.bf16.xpose.msra.mxu0 0
        %1815 = vmatprep.subr.bf16.mxu0 0
        %1816 = vmatpush1.bf16.xpose.msra.mxu0 0
        %1817 = vmatprep.subr.bf16.mxu0 0
        %1818 = vmatpush1.bf16.xpose.msra.mxu0 0
        %1819 = vmatprep.subr.bf16.mxu0 0
        %1820 = vmatpush1.bf16.xpose.msra.mxu0 0
        %1821 = vmatprep.subr.bf16.mxu0 0
        %1822 = vmatpush1.bf16.xpose.msra.mxu0 0
        %1823 = vmatprep.subr.bf16.mxu0 0
        %1824 = vmatpush1.bf16.xpose.msra.mxu0 0
        %1825 = vmatprep.mubr.bf16.mxu0 0
        %1826 = vmatmul.mubr.bf16.gmra.mrb[0].mxu0 %v1788
        %v1827 = vpop.f32.mrb[0].mxu0
        %v1828 = vadd.f32 0.0, %v1827
        %v1829 = vpop.f32.mrb[0].mxu0
        %v1830 = vpop.f32.mrb[0].mxu0
        %v1831 = vpop.f32.mrb[0].mxu0
        %1832 = vdwg.mxu0
        %vm1833 = vcmp.eq.f32.partialorder %v845, 0.0
        %v1834 = vsel %vm1833, 1, 0
        %vm1835 = vcmp.eq.s32.totalorder %v1834, 1
        %v1836 = vsel %vm1835, -1e+09, %v1690
        %v1837 = vsel %vm1835, -1e+09, %v1736
        %v1838 = vsel %vm1835, -1e+09, %v1782
        %v1839 = vsel %vm1835, -1e+09, %v1828
        %v1840 = vsel %vm1648, %v1836, -inf
        %1841 = vmax.xlane.f32.xlu0 %v1840
        %v1842 = vpop.xlane.xlu0 %1841
        %v1843 = vsel %vm1648, %v1837, -inf
        %1844 = vmax.xlane.f32.xlu0 %v1843
        %v1845 = vpop.xlane.xlu0 %1844
        %v1846 = vsel %vm1648, %v1838, -inf
        %1847 = vmax.xlane.f32.xlu0 %v1846
        %v1848 = vpop.xlane.xlu0 %1847
        %v1849 = vsel %vm1648, %v1839, -inf
        %1850 = vmax.xlane.f32.xlu0 %v1849
        %v1851 = vpop.xlane.xlu0 %1850
        %v1852 = vsub.f32 %v1836, %v1842
        %v1853 = vsub.f32 %v1837, %v1845
        %v1854 = vsub.f32 %v1838, %v1848
        %v1855 = vsub.f32 %v1839, %v1851
        %v1856 = vmul.f32 %v1852, 1.442695
        %v1857 = vpow.pop %v1856
        %v1858 = vmul.f32 %v1853, 1.442695
        %v1859 = vpow.pop %v1858
        %v1860 = vmul.f32 %v1854, 1.442695
        %v1861 = vpow.pop %v1860
        %v1862 = vmul.f32 %v1855, 1.442695
        %v1863 = vpow.pop %v1862
        %v1864 = vsel %vm1648, %v1857, 0.0
        %1865 = vadd.xlane.f32.xlu0 %v1864
        %v1866 = vpop.xlane.xlu0 %1865
        %v1867 = vsel %vm1648, %v1859, 0.0
        %1868 = vadd.xlane.f32.xlu0 %v1867
        %v1869 = vpop.xlane.xlu0 %1868
        %v1870 = vsel %vm1648, %v1861, 0.0
        %1871 = vadd.xlane.f32.xlu0 %v1870
        %v1872 = vpop.xlane.xlu0 %1871
        %v1873 = vsel %vm1648, %v1863, 0.0
        %1874 = vadd.xlane.f32.xlu0 %v1873
        %v1875 = vpop.xlane.xlu0 %1874
        %v1876 = vrcp.pop %v1866
        %v1877 = vrcp.pop %v1869
        %v1878 = vrcp.pop %v1872
        %v1879 = vrcp.pop %v1875
        %v1880 = vmul.f32 %v1857, %v1876
        %v1881 = vmul.f32 %v1859, %v1877
        %v1882 = vmul.f32 %v1861, %v1878
        %v1883 = vmul.f32 %v1863, %v1879
        %v1884 = vpack.c.bf16 %v1880, %v1880
        %v1885 = vpack.c.bf16 %v1881, %v1881
        %v1886 = vpack.c.bf16 %v1882, %v1882
        %v1887 = vpack.c.bf16 %v1883, %v1883
        %v1888 = vpack.c.bf16 %v1479, %v1479
        %v1889 = vpack.c.bf16 %v1531, %v1531
        %v1890 = vpack.c.bf16 %v1583, %v1583
        %v1891 = vpack.c.bf16 %v1635, %v1635
        %v1893 = vsel %vm1648, %v1884, 0
        %vm1895 = vcmask 1043456
        %v1897 = vsel %vm1895, %v1888, 0
        %1899 = vmatprep.subr.bf16.mxu0 0
        %1900 = vmatpush1.bf16.msra.mxu0 %v1897
        %1901 = vmatprep.subr.bf16.mxu0 0
        %1902 = vmatpush1.bf16.msra.mxu0 0
        %1903 = vmatprep.subr.bf16.mxu0 0
        %1904 = vmatpush1.bf16.msra.mxu0 0
        %1905 = vmatprep.subr.bf16.mxu0 0
        %1906 = vmatpush1.bf16.msra.mxu0 0
        %1907 = vmatprep.subr.bf16.mxu0 0
        %1908 = vmatpush1.bf16.msra.mxu0 0
        %1909 = vmatprep.subr.bf16.mxu0 0
        %1910 = vmatpush1.bf16.msra.mxu0 0
        %1911 = vmatprep.subr.bf16.mxu0 0
        %1912 = vmatpush1.bf16.msra.mxu0 0
        %1913 = vmatprep.subr.bf16.mxu0 0
        %1914 = vmatpush1.bf16.msra.mxu0 0
        %1915 = vmatprep.subr.bf16.mxu0 0
        %1916 = vmatpush1.bf16.msra.mxu0 0
        %1917 = vmatprep.subr.bf16.mxu0 0
        %1918 = vmatpush1.bf16.msra.mxu0 0
        %1919 = vmatprep.subr.bf16.mxu0 0
        %1920 = vmatpush1.bf16.msra.mxu0 0
        %1921 = vmatprep.subr.bf16.mxu0 0
        %1922 = vmatpush1.bf16.msra.mxu0 0
        %1923 = vmatprep.subr.bf16.mxu0 0
        %1924 = vmatpush1.bf16.msra.mxu0 0
        %1925 = vmatprep.subr.bf16.mxu0 0
        %1926 = vmatpush1.bf16.msra.mxu0 0
        %1927 = vmatprep.subr.bf16.mxu0 0
        %1928 = vmatpush1.bf16.msra.mxu0 0
        %1929 = vmatprep.subr.bf16.mxu0 0
        %1930 = vmatpush1.bf16.msra.mxu0 0
        %1931 = vmatprep.mubr.bf16.mxu0 0
        %1932 = vmatmul.mubr.bf16.gmra.mrb[0].mxu0 %v1893
        %v1933 = vpop.f32.mrb[0].mxu0
        %v1934 = vadd.f32 0.0, %v1933
        %v1935 = vpop.f32.mrb[0].mxu0
        %v1936 = vpop.f32.mrb[0].mxu0
        %v1937 = vpop.f32.mrb[0].mxu0
        %1938 = vdwg.mxu0
        %v1940 = vsel %vm1648, %v1885, 0
        %v1943 = vsel %vm1895, %v1889, 0
        %1945 = vmatprep.subr.bf16.mxu0 0
        %1946 = vmatpush1.bf16.msra.mxu0 %v1943
        %1947 = vmatprep.subr.bf16.mxu0 0
        %1948 = vmatpush1.bf16.msra.mxu0 0
        %1949 = vmatprep.subr.bf16.mxu0 0
        %1950 = vmatpush1.bf16.msra.mxu0 0
        %1951 = vmatprep.subr.bf16.mxu0 0
        %1952 = vmatpush1.bf16.msra.mxu0 0
        %1953 = vmatprep.subr.bf16.mxu0 0
        %1954 = vmatpush1.bf16.msra.mxu0 0
        %1955 = vmatprep.subr.bf16.mxu0 0
        %1956 = vmatpush1.bf16.msra.mxu0 0
        %1957 = vmatprep.subr.bf16.mxu0 0
        %1958 = vmatpush1.bf16.msra.mxu0 0
        %1959 = vmatprep.subr.bf16.mxu0 0
        %1960 = vmatpush1.bf16.msra.mxu0 0
        %1961 = vmatprep.subr.bf16.mxu0 0
        %1962 = vmatpush1.bf16.msra.mxu0 0
        %1963 = vmatprep.subr.bf16.mxu0 0
        %1964 = vmatpush1.bf16.msra.mxu0 0
        %1965 = vmatprep.subr.bf16.mxu0 0
        %1966 = vmatpush1.bf16.msra.mxu0 0
        %1967 = vmatprep.subr.bf16.mxu0 0
        %1968 = vmatpush1.bf16.msra.mxu0 0
        %1969 = vmatprep.subr.bf16.mxu0 0
        %1970 = vmatpush1.bf16.msra.mxu0 0
        %1971 = vmatprep.subr.bf16.mxu0 0
        %1972 = vmatpush1.bf16.msra.mxu0 0
        %1973 = vmatprep.subr.bf16.mxu0 0
        %1974 = vmatpush1.bf16.msra.mxu0 0
        %1975 = vmatprep.subr.bf16.mxu0 0
        %1976 = vmatpush1.bf16.msra.mxu0 0
        %1977 = vmatprep.mubr.bf16.mxu0 0
        %1978 = vmatmul.mubr.bf16.gmra.mrb[0].mxu0 %v1940
        %v1979 = vpop.f32.mrb[0].mxu0
        %v1980 = vadd.f32 0.0, %v1979
        %v1981 = vpop.f32.mrb[0].mxu0
        %v1982 = vpop.f32.mrb[0].mxu0
        %v1983 = vpop.f32.mrb[0].mxu0
        %1984 = vdwg.mxu0
        %v1986 = vsel %vm1648, %v1886, 0
        %v1989 = vsel %vm1895, %v1890, 0
        %1991 = vmatprep.subr.bf16.mxu0 0
        %1992 = vmatpush1.bf16.msra.mxu0 %v1989
        %1993 = vmatprep.subr.bf16.mxu0 0
        %1994 = vmatpush1.bf16.msra.mxu0 0
        %1995 = vmatprep.subr.bf16.mxu0 0
        %1996 = vmatpush1.bf16.msra.mxu0 0
        %1997 = vmatprep.subr.bf16.mxu0 0
        %1998 = vmatpush1.bf16.msra.mxu0 0
        %1999 = vmatprep.subr.bf16.mxu0 0
        %2000 = vmatpush1.bf16.msra.mxu0 0
        %2001 = vmatprep.subr.bf16.mxu0 0
        %2002 = vmatpush1.bf16.msra.mxu0 0
        %2003 = vmatprep.subr.bf16.mxu0 0
        %2004 = vmatpush1.bf16.msra.mxu0 0
        %2005 = vmatprep.subr.bf16.mxu0 0
        %2006 = vmatpush1.bf16.msra.mxu0 0
        %2007 = vmatprep.subr.bf16.mxu0 0
        %2008 = vmatpush1.bf16.msra.mxu0 0
        %2009 = vmatprep.subr.bf16.mxu0 0
        %2010 = vmatpush1.bf16.msra.mxu0 0
        %2011 = vmatprep.subr.bf16.mxu0 0
        %2012 = vmatpush1.bf16.msra.mxu0 0
        %2013 = vmatprep.subr.bf16.mxu0 0
        %2014 = vmatpush1.bf16.msra.mxu0 0
        %2015 = vmatprep.subr.bf16.mxu0 0
        %2016 = vmatpush1.bf16.msra.mxu0 0
        %2017 = vmatprep.subr.bf16.mxu0 0
        %2018 = vmatpush1.bf16.msra.mxu0 0
        %2019 = vmatprep.subr.bf16.mxu0 0
        %2020 = vmatpush1.bf16.msra.mxu0 0
        %2021 = vmatprep.subr.bf16.mxu0 0
        %2022 = vmatpush1.bf16.msra.mxu0 0
        %2023 = vmatprep.mubr.bf16.mxu0 0
        %2024 = vmatmul.mubr.bf16.gmra.mrb[0].mxu0 %v1986
        %v2025 = vpop.f32.mrb[0].mxu0
        %v2026 = vadd.f32 0.0, %v2025
        %v2027 = vpop.f32.mrb[0].mxu0
        %v2028 = vpop.f32.mrb[0].mxu0
        %v2029 = vpop.f32.mrb[0].mxu0
        %2030 = vdwg.mxu0
        %v2032 = vsel %vm1648, %v1887, 0
        %v2035 = vsel %vm1895, %v1891, 0
        %2037 = vmatprep.subr.bf16.mxu0 0
        %2038 = vmatpush1.bf16.msra.mxu0 %v2035
        %2039 = vmatprep.subr.bf16.mxu0 0
        %2040 = vmatpush1.bf16.msra.mxu0 0
        %2041 = vmatprep.subr.bf16.mxu0 0
        %2042 = vmatpush1.bf16.msra.mxu0 0
        %2043 = vmatprep.subr.bf16.mxu0 0
        %2044 = vmatpush1.bf16.msra.mxu0 0
        %2045 = vmatprep.subr.bf16.mxu0 0
        %2046 = vmatpush1.bf16.msra.mxu0 0
        %2047 = vmatprep.subr.bf16.mxu0 0
        %2048 = vmatpush1.bf16.msra.mxu0 0
        %2049 = vmatprep.subr.bf16.mxu0 0
        %2050 = vmatpush1.bf16.msra.mxu0 0
        %2051 = vmatprep.subr.bf16.mxu0 0
        %2052 = vmatpush1.bf16.msra.mxu0 0
        %2053 = vmatprep.subr.bf16.mxu0 0
        %2054 = vmatpush1.bf16.msra.mxu0 0
        %2055 = vmatprep.subr.bf16.mxu0 0
        %2056 = vmatpush1.bf16.msra.mxu0 0
        %2057 = vmatprep.subr.bf16.mxu0 0
        %2058 = vmatpush1.bf16.msra.mxu0 0
        %2059 = vmatprep.subr.bf16.mxu0 0
        %2060 = vmatpush1.bf16.msra.mxu0 0
        %2061 = vmatprep.subr.bf16.mxu0 0
        %2062 = vmatpush1.bf16.msra.mxu0 0
        %2063 = vmatprep.subr.bf16.mxu0 0
        %2064 = vmatpush1.bf16.msra.mxu0 0
        %2065 = vmatprep.subr.bf16.mxu0 0
        %2066 = vmatpush1.bf16.msra.mxu0 0
        %2067 = vmatprep.subr.bf16.mxu0 0
        %2068 = vmatpush1.bf16.msra.mxu0 0
        %2069 = vmatprep.mubr.bf16.mxu0 0
        %2070 = vmatmul.mubr.bf16.gmra.mrb[0].mxu0 %v2032
        %v2071 = vpop.f32.mrb[0].mxu0
        %v2072 = vadd.f32 0.0, %v2071
        %v2073 = vpop.f32.mrb[0].mxu0
        %v2074 = vpop.f32.mrb[0].mxu0
        %v2075 = vpop.f32.mrb[0].mxu0
        %2076 = vdwg.mxu0
        %v2077 = vpack.c.bf16 %v1934, %v1934
        %v2078 = vpack.c.bf16 %v1980, %v1980
        %v2079 = vpack.c.bf16 %v2026, %v2026
        %v2080 = vpack.c.bf16 %v2072, %v2072
        %v2082 = vsel %vm1648, %v2077, 0
        %v2085 = vsel %vm1895, %v935, 0
        %2087 = vmatprep.subr.bf16.mxu0 0
        %2088 = vmatpush1.bf16.msra.mxu0 %v2085
        %2089 = vmatprep.subr.bf16.mxu0 0
        %2090 = vmatpush1.bf16.msra.mxu0 0
        %2091 = vmatprep.subr.bf16.mxu0 0
        %2092 = vmatpush1.bf16.msra.mxu0 0
        %2093 = vmatprep.subr.bf16.mxu0 0
        %2094 = vmatpush1.bf16.msra.mxu0 0
        %2095 = vmatprep.subr.bf16.mxu0 0
        %2096 = vmatpush1.bf16.msra.mxu0 0
        %2097 = vmatprep.subr.bf16.mxu0 0
        %2098 = vmatpush1.bf16.msra.mxu0 0
        %2099 = vmatprep.subr.bf16.mxu0 0
        %2100 = vmatpush1.bf16.msra.mxu0 0
        %2101 = vmatprep.subr.bf16.mxu0 0
        %2102 = vmatpush1.bf16.msra.mxu0 0
        %2103 = vmatprep.subr.bf16.mxu0 0
        %2104 = vmatpush1.bf16.msra.mxu0 0
        %2105 = vmatprep.subr.bf16.mxu0 0
        %2106 = vmatpush1.bf16.msra.mxu0 0
        %2107 = vmatprep.subr.bf16.mxu0 0
        %2108 = vmatpush1.bf16.msra.mxu0 0
        %2109 = vmatprep.subr.bf16.mxu0 0
        %2110 = vmatpush1.bf16.msra.mxu0 0
        %2111 = vmatprep.subr.bf16.mxu0 0
        %2112 = vmatpush1.bf16.msra.mxu0 0
        %2113 = vmatprep.subr.bf16.mxu0 0
        %2114 = vmatpush1.bf16.msra.mxu0 0
        %2115 = vmatprep.subr.bf16.mxu0 0
        %2116 = vmatpush1.bf16.msra.mxu0 0
        %2117 = vmatprep.subr.bf16.mxu0 0
        %2118 = vmatpush1.bf16.msra.mxu0 0
        %2119 = vmatprep.mubr.bf16.mxu0 0
        %2120 = vmatmul.mubr.bf16.gmra.mrb[0].mxu0 %v2082
        %v2121 = vpop.f32.mrb[0].mxu0
        %v2122 = vadd.f32 0.0, %v2121
        %v2123 = vpop.f32.mrb[0].mxu0
        %v2124 = vpop.f32.mrb[0].mxu0
        %v2125 = vpop.f32.mrb[0].mxu0
        %2126 = vdwg.mxu0
        %v2128 = vsel %vm1648, %v2078, 0
        %v2131 = vsel %vm1895, %v936, 0
        %2133 = vmatprep.subr.bf16.mxu0 0
        %2134 = vmatpush1.bf16.msra.mxu0 %v2131
        %2135 = vmatprep.subr.bf16.mxu0 0
        %2136 = vmatpush1.bf16.msra.mxu0 0
        %2137 = vmatprep.subr.bf16.mxu0 0
        %2138 = vmatpush1.bf16.msra.mxu0 0
        %2139 = vmatprep.subr.bf16.mxu0 0
        %2140 = vmatpush1.bf16.msra.mxu0 0
        %2141 = vmatprep.subr.bf16.mxu0 0
        %2142 = vmatpush1.bf16.msra.mxu0 0
        %2143 = vmatprep.subr.bf16.mxu0 0
        %2144 = vmatpush1.bf16.msra.mxu0 0
        %2145 = vmatprep.subr.bf16.mxu0 0
        %2146 = vmatpush1.bf16.msra.mxu0 0
        %2147 = vmatprep.subr.bf16.mxu0 0
        %2148 = vmatpush1.bf16.msra.mxu0 0
        %2149 = vmatprep.subr.bf16.mxu0 0
        %2150 = vmatpush1.bf16.msra.mxu0 0
        %2151 = vmatprep.subr.bf16.mxu0 0
        %2152 = vmatpush1.bf16.msra.mxu0 0
        %2153 = vmatprep.subr.bf16.mxu0 0
        %2154 = vmatpush1.bf16.msra.mxu0 0
        %2155 = vmatprep.subr.bf16.mxu0 0
        %2156 = vmatpush1.bf16.msra.mxu0 0
        %2157 = vmatprep.subr.bf16.mxu0 0
        %2158 = vmatpush1.bf16.msra.mxu0 0
        %2159 = vmatprep.subr.bf16.mxu0 0
        %2160 = vmatpush1.bf16.msra.mxu0 0
        %2161 = vmatprep.subr.bf16.mxu0 0
        %2162 = vmatpush1.bf16.msra.mxu0 0
        %2163 = vmatprep.subr.bf16.mxu0 0
        %2164 = vmatpush1.bf16.msra.mxu0 0
        %2165 = vmatprep.mubr.bf16.mxu0 0
        %2166 = vmatmul.mubr.bf16.gmra.mrb[0].mxu0 %v2128
        %v2167 = vpop.f32.mrb[0].mxu0
        %v2168 = vadd.f32 0.0, %v2167
        %v2169 = vpop.f32.mrb[0].mxu0
        %v2170 = vpop.f32.mrb[0].mxu0
        %v2171 = vpop.f32.mrb[0].mxu0
        %2172 = vdwg.mxu0
        %v2174 = vsel %vm1648, %v2079, 0
        %v2177 = vsel %vm1895, %v937, 0
        %2179 = vmatprep.subr.bf16.mxu0 0
        %2180 = vmatpush1.bf16.msra.mxu0 %v2177
        %2181 = vmatprep.subr.bf16.mxu0 0
        %2182 = vmatpush1.bf16.msra.mxu0 0
        %2183 = vmatprep.subr.bf16.mxu0 0
        %2184 = vmatpush1.bf16.msra.mxu0 0
        %2185 = vmatprep.subr.bf16.mxu0 0
        %2186 = vmatpush1.bf16.msra.mxu0 0
        %2187 = vmatprep.subr.bf16.mxu0 0
        %2188 = vmatpush1.bf16.msra.mxu0 0
        %2189 = vmatprep.subr.bf16.mxu0 0
        %2190 = vmatpush1.bf16.msra.mxu0 0
        %2191 = vmatprep.subr.bf16.mxu0 0
        %2192 = vmatpush1.bf16.msra.mxu0 0
        %2193 = vmatprep.subr.bf16.mxu0 0
        %2194 = vmatpush1.bf16.msra.mxu0 0
        %2195 = vmatprep.subr.bf16.mxu0 0
        %2196 = vmatpush1.bf16.msra.mxu0 0
        %2197 = vmatprep.subr.bf16.mxu0 0
        %2198 = vmatpush1.bf16.msra.mxu0 0
        %2199 = vmatprep.subr.bf16.mxu0 0
        %2200 = vmatpush1.bf16.msra.mxu0 0
        %2201 = vmatprep.subr.bf16.mxu0 0
        %2202 = vmatpush1.bf16.msra.mxu0 0
        %2203 = vmatprep.subr.bf16.mxu0 0
        %2204 = vmatpush1.bf16.msra.mxu0 0
        %2205 = vmatprep.subr.bf16.mxu0 0
        %2206 = vmatpush1.bf16.msra.mxu0 0
        %2207 = vmatprep.subr.bf16.mxu0 0
        %2208 = vmatpush1.bf16.msra.mxu0 0
        %2209 = vmatprep.subr.bf16.mxu0 0
        %2210 = vmatpush1.bf16.msra.mxu0 0
        %2211 = vmatprep.mubr.bf16.mxu0 0
        %2212 = vmatmul.mubr.bf16.gmra.mrb[0].mxu0 %v2174
        %v2213 = vpop.f32.mrb[0].mxu0
        %v2214 = vadd.f32 0.0, %v2213
        %v2215 = vpop.f32.mrb[0].mxu0
        %v2216 = vpop.f32.mrb[0].mxu0
        %v2217 = vpop.f32.mrb[0].mxu0
        %2218 = vdwg.mxu0
        %v2220 = vsel %vm1648, %v2080, 0
        %v2223 = vsel %vm1895, %v938, 0
        %2225 = vmatprep.subr.bf16.mxu0 0
        %2226 = vmatpush1.bf16.msra.mxu0 %v2223
        %2227 = vmatprep.subr.bf16.mxu0 0
        %2228 = vmatpush1.bf16.msra.mxu0 0
        %2229 = vmatprep.subr.bf16.mxu0 0
        %2230 = vmatpush1.bf16.msra.mxu0 0
        %2231 = vmatprep.subr.bf16.mxu0 0
        %2232 = vmatpush1.bf16.msra.mxu0 0
        %2233 = vmatprep.subr.bf16.mxu0 0
        %2234 = vmatpush1.bf16.msra.mxu0 0
        %2235 = vmatprep.subr.bf16.mxu0 0
        %2236 = vmatpush1.bf16.msra.mxu0 0
        %2237 = vmatprep.subr.bf16.mxu0 0
        %2238 = vmatpush1.bf16.msra.mxu0 0
        %2239 = vmatprep.subr.bf16.mxu0 0
        %2240 = vmatpush1.bf16.msra.mxu0 0
        %2241 = vmatprep.subr.bf16.mxu0 0
        %2242 = vmatpush1.bf16.msra.mxu0 0
        %2243 = vmatprep.subr.bf16.mxu0 0
        %2244 = vmatpush1.bf16.msra.mxu0 0
        %2245 = vmatprep.subr.bf16.mxu0 0
        %2246 = vmatpush1.bf16.msra.mxu0 0
        %2247 = vmatprep.subr.bf16.mxu0 0
        %2248 = vmatpush1.bf16.msra.mxu0 0
        %2249 = vmatprep.subr.bf16.mxu0 0
        %2250 = vmatpush1.bf16.msra.mxu0 0
        %2251 = vmatprep.subr.bf16.mxu0 0
        %2252 = vmatpush1.bf16.msra.mxu0 0
        %2253 = vmatprep.subr.bf16.mxu0 0
        %2254 = vmatpush1.bf16.msra.mxu0 0
        %2255 = vmatprep.subr.bf16.mxu0 0
        %2256 = vmatpush1.bf16.msra.mxu0 0
        %2257 = vmatprep.mubr.bf16.mxu0 0
        %2258 = vmatmul.mubr.bf16.gmra.mrb[0].mxu0 %v2220
        %v2259 = vpop.f32.mrb[0].mxu0
        %v2260 = vadd.f32 0.0, %v2259
        %v2261 = vpop.f32.mrb[0].mxu0
        %v2262 = vpop.f32.mrb[0].mxu0
        %v2263 = vpop.f32.mrb[0].mxu0
        %2264 = vdwg.mxu0
        %v2265 = vsel %vm849, %v2122, 0.0
        %v2266 = vsel %vm849, %v2168, 0.0
        %v2267 = vadd.f32 %v2265, %v2266
        %v2268 = vsel %vm849, %v2214, 0.0
        %v2269 = vadd.f32 %v2267, %v2268
        %v2270 = vsel %vm849, %v2260, 0.0
        %v2271 = vadd.f32 %v2269, %v2270
        %v2273 = vlaneseq
        %v2274 = vshrl.u32 %v2273, 7
        %v2275 = vsub.s32 0, %v2274
        %v2276 = vrot.slane %v939, %v2275
        %v2278 = vadd.f32 %v2271, %v2276
        %v2279 = vadd.f32 %v843, %v2278
        %s2280 = sld [smem:[#allocation2 + $0x2]]
        %s2281 = sld [smem:[#allocation2 + $0x3]]
        %v2282 = vsel %vm849, %v2279, 0.0
        %2283 = vadd.xlane.f32.xlu0 %v2282
        %v2284 = vpop.xlane.xlu0 %2283
        %v2285 = vmul.f32 %v2284, %v853
        %v2286 = vsub.f32 %v2279, %v2285
        %v2287 = vmul.f32 %v2286, %v2286
        %v2288 = vsel %vm849, %v2287, 0.0
        %2289 = vadd.xlane.f32.xlu0 %v2288
        %v2290 = vpop.xlane.xlu0 %2289
        %v2291 = vmul.f32 %v2290, 0.032258064
        %v2292 = vrsqrt.pop %v2291
        %v2293 = vmul.f32 %v2291, %v2292
        %vm2294 = vcmp.eq.f32.partialorder %v2291, inf
        %v2295 = vsel %vm2294, %v2291, %v2293
        %vm2296 = vcmp.eq.f32.partialorder %v2291, 0.0
        %v2297 = vand.u32 %v2291, 2147483648
        %v2298 = vsel %vm2296, %v2297, %v2295
        %v2299 = vadd.f32 %v2298, 1e-06
        %v2300 = vrcp.pop %v2299
        %v2301 = vstv %s2280
        %v2302 = vmul.f32 %v2301, %v2300
        %v2303 = vmul.f32 %v2286, %v2302
        %v2304 = vstv %s2281
        %v2305 = vadd.f32 %v2303, %v2304
        %v2306 = vld [vmem:[%s13] sm:$0xf]
        %v2307 = vld [vmem:[%s13 + $0x4] sm:$0xf]
        %v2308 = vld [vmem:[%s13 + $0x8] sm:$0xf]
        %v2309 = vld [vmem:[%s13 + $0xc] sm:$0xf]
        %v2310 = vld [vmem:[%s13 + $0x10] sm:$0xf]
        %v2311 = vld [vmem:[%s13 + $0x14] sm:$0xf]
        %v2312 = vld [vmem:[%s13 + $0x18] sm:$0xf]
        %v2313 = vld [vmem:[%s13 + $0x1c] sm:$0xf]
        %v2314 = vld [vmem:[%s13 + $0x20] sm:$0xf]
        %v2315 = vld [vmem:[%s13 + $0x24] sm:$0xf]
        %v2316 = vld [vmem:[%s13 + $0x28] sm:$0xf]
        %v2317 = vld [vmem:[%s13 + $0x2c] sm:$0xf]
        %v2318 = vld [vmem:[%s13 + $0x30] sm:$0xf]
        %v2319 = vld [vmem:[%s13 + $0x34] sm:$0xf]
        %v2320 = vld [vmem:[%s13 + $0x38] sm:$0xf]
        %v2321 = vld [vmem:[%s13 + $0x3c] sm:$0xf]
        %v2322 = vld [vmem:[%s14] sm:$0x1]
        %v2323 = vld [vmem:[%s14 + $0x1] sm:$0x1]
        %v2324 = vld [vmem:[%s14 + $0x2] sm:$0x1]
        %v2325 = vld [vmem:[%s14 + $0x3] sm:$0x1]
        %v2326 = vld [vmem:[%s15] sm:$0xf]
        %v2327 = vld [vmem:[%s15 + $0x4] sm:$0xf]
        %v2328 = vld [vmem:[%s15 + $0x8] sm:$0xf]
        %v2329 = vld [vmem:[%s15 + $0xc] sm:$0xf]
        %v2330 = vld [vmem:[%s15 + $0x10] sm:$0xf]
        %v2331 = vld [vmem:[%s15 + $0x14] sm:$0xf]
        %v2332 = vld [vmem:[%s15 + $0x18] sm:$0xf]
        %v2333 = vld [vmem:[%s15 + $0x1c] sm:$0xf]
        %v2334 = vld [vmem:[%s15 + $0x20] sm:$0xf]
        %v2335 = vld [vmem:[%s15 + $0x24] sm:$0xf]
        %v2336 = vld [vmem:[%s15 + $0x28] sm:$0xf]
        %v2337 = vld [vmem:[%s15 + $0x2c] sm:$0xf]
        %v2338 = vld [vmem:[%s15 + $0x30] sm:$0xf]
        %v2339 = vld [vmem:[%s15 + $0x34] sm:$0xf]
        %v2340 = vld [vmem:[%s15 + $0x38] sm:$0xf]
        %v2341 = vld [vmem:[%s15 + $0x3c] sm:$0xf]
        %v2342 = vld [vmem:[%s16] sm:$0x1]
        %v2343 = vld [vmem:[%s16 + $0x1] sm:$0x1]
        %v2344 = vld [vmem:[%s16 + $0x2] sm:$0x1]
        %v2345 = vld [vmem:[%s16 + $0x3] sm:$0x1]
        %v2346 = vld [vmem:[%s17] sm:$0xf]
        %v2347 = vld [vmem:[%s17 + $0x4] sm:$0xf]
        %v2348 = vld [vmem:[%s17 + $0x8] sm:$0xf]
        %v2349 = vld [vmem:[%s17 + $0xc] sm:$0xf]
        %v2350 = vld [vmem:[%s17 + $0x10] sm:$0xf]
        %v2351 = vld [vmem:[%s17 + $0x14] sm:$0xf]
        %v2352 = vld [vmem:[%s17 + $0x18] sm:$0xf]
        %v2353 = vld [vmem:[%s17 + $0x1c] sm:$0xf]
        %v2354 = vld [vmem:[%s17 + $0x20] sm:$0xf]
        %v2355 = vld [vmem:[%s17 + $0x24] sm:$0xf]
        %v2356 = vld [vmem:[%s17 + $0x28] sm:$0xf]
        %v2357 = vld [vmem:[%s17 + $0x2c] sm:$0xf]
        %v2358 = vld [vmem:[%s17 + $0x30] sm:$0xf]
        %v2359 = vld [vmem:[%s17 + $0x34] sm:$0xf]
        %v2360 = vld [vmem:[%s17 + $0x38] sm:$0xf]
        %v2361 = vld [vmem:[%s17 + $0x3c] sm:$0xf]
        %v2362 = vld [vmem:[%s18] sm:$0x1]
        %v2363 = vld [vmem:[%s18 + $0x1] sm:$0x1]
        %v2364 = vld [vmem:[%s18 + $0x2] sm:$0x1]
        %v2365 = vld [vmem:[%s18 + $0x3] sm:$0x1]
        %v2366 = vld [vmem:[%s19] sm:$0xf]
        %v2367 = vld [vmem:[%s19 + $0x4] sm:$0xf]
        %v2368 = vld [vmem:[%s19 + $0x8] sm:$0xf]
        %v2369 = vld [vmem:[%s19 + $0xc] sm:$0xf]
        %v2370 = vld [vmem:[%s20] sm:$0x1]
        %v2371 = vpack.c.bf16 %v2305, %v2305
        %v2372 = vpack.c.bf16 %v844, %v844
        %v2377 = vlaneseq
        %v2378 = vshrl.u32 %v2377, 7
        %v2379 = vsub.s32 0, %v2378
        %v2380 = vrot.slane %v2322, %v2379
        %v2381 = vlaneseq
        %v2382 = vshrl.u32 %v2381, 7
        %v2383 = vsub.s32 0, %v2382
        %v2384 = vrot.slane %v2323, %v2383
        %v2385 = vlaneseq
        %v2386 = vshrl.u32 %v2385, 7
        %v2387 = vsub.s32 0, %v2386
        %v2388 = vrot.slane %v2324, %v2387
        %v2389 = vlaneseq
        %v2390 = vshrl.u32 %v2389, 7
        %v2391 = vsub.s32 0, %v2390
        %v2392 = vrot.slane %v2325, %v2391
        %v2401 = vunpack.c.l.b16 %v2306
        %v2402 = vunpack.c.l.b16 %v2307
        %v2403 = vunpack.c.l.b16 %v2308
        %v2404 = vunpack.c.l.b16 %v2309
        %v2405 = vpack.c.b16 %v2402, %v2401
        %v2406 = vpack.c.b16 %v2404, %v2403
        %v2410 = vsel %vm849, %v2371, 0
        %2412 = vmatprep.subr.bf16.mxu0 0
        %2413 = vmatpush1.bf16.msra.mxu0 %v2405
        %2414 = vmatprep.subr.bf16.mxu0 0
        %2415 = vmatpush1.bf16.msra.mxu0 %v2406
        %2416 = vmatprep.subr.bf16.mxu0 0
        %2417 = vmatpush1.bf16.msra.mxu0 0
        %2418 = vmatprep.subr.bf16.mxu0 0
        %2419 = vmatpush1.bf16.msra.mxu0 0
        %2420 = vmatprep.subr.bf16.mxu0 0
        %2421 = vmatpush1.bf16.msra.mxu0 0
        %2422 = vmatprep.subr.bf16.mxu0 0
        %2423 = vmatpush1.bf16.msra.mxu0 0
        %2424 = vmatprep.subr.bf16.mxu0 0
        %2425 = vmatpush1.bf16.msra.mxu0 0
        %2426 = vmatprep.subr.bf16.mxu0 0
        %2427 = vmatpush1.bf16.msra.mxu0 0
        %2428 = vmatprep.subr.bf16.mxu0 0
        %2429 = vmatpush1.bf16.msra.mxu0 0
        %2430 = vmatprep.subr.bf16.mxu0 0
        %2431 = vmatpush1.bf16.msra.mxu0 0
        %2432 = vmatprep.subr.bf16.mxu0 0
        %2433 = vmatpush1.bf16.msra.mxu0 0
        %2434 = vmatprep.subr.bf16.mxu0 0
        %2435 = vmatpush1.bf16.msra.mxu0 0
        %2436 = vmatprep.subr.bf16.mxu0 0
        %2437 = vmatpush1.bf16.msra.mxu0 0
        %2438 = vmatprep.subr.bf16.mxu0 0
        %2439 = vmatpush1.bf16.msra.mxu0 0
        %2440 = vmatprep.subr.bf16.mxu0 0
        %2441 = vmatpush1.bf16.msra.mxu0 0
        %2442 = vmatprep.subr.bf16.mxu0 0
        %2443 = vmatpush1.bf16.msra.mxu0 0
        %2444 = vmatprep.mubr.bf16.mxu0 0
        %2445 = vmatmul.mubr.bf16.gmra.mrb[0].mxu0 %v2410
        %v2446 = vpop.f32.mrb[0].mxu0
        %v2447 = vadd.f32 %v2380, %v2446
        %v2448 = vpop.f32.mrb[0].mxu0
        %v2449 = vpop.f32.mrb[0].mxu0
        %v2450 = vpop.f32.mrb[0].mxu0
        %2451 = vdwg.mxu0
        %v2456 = vunpack.c.l.b16 %v2310
        %v2457 = vunpack.c.l.b16 %v2311
        %v2458 = vunpack.c.l.b16 %v2312
        %v2459 = vunpack.c.l.b16 %v2313
        %v2460 = vpack.c.b16 %v2457, %v2456
        %v2461 = vpack.c.b16 %v2459, %v2458
        %2464 = vmatprep.subr.bf16.mxu0 0
        %2465 = vmatpush1.bf16.msra.mxu0 %v2460
        %2466 = vmatprep.subr.bf16.mxu0 0
        %2467 = vmatpush1.bf16.msra.mxu0 %v2461
        %2468 = vmatprep.subr.bf16.mxu0 0
        %2469 = vmatpush1.bf16.msra.mxu0 0
        %2470 = vmatprep.subr.bf16.mxu0 0
        %2471 = vmatpush1.bf16.msra.mxu0 0
        %2472 = vmatprep.subr.bf16.mxu0 0
        %2473 = vmatpush1.bf16.msra.mxu0 0
        %2474 = vmatprep.subr.bf16.mxu0 0
        %2475 = vmatpush1.bf16.msra.mxu0 0
        %2476 = vmatprep.subr.bf16.mxu0 0
        %2477 = vmatpush1.bf16.msra.mxu0 0
        %2478 = vmatprep.subr.bf16.mxu0 0
        %2479 = vmatpush1.bf16.msra.mxu0 0
        %2480 = vmatprep.subr.bf16.mxu0 0
        %2481 = vmatpush1.bf16.msra.mxu0 0
        %2482 = vmatprep.subr.bf16.mxu0 0
        %2483 = vmatpush1.bf16.msra.mxu0 0
        %2484 = vmatprep.subr.bf16.mxu0 0
        %2485 = vmatpush1.bf16.msra.mxu0 0
        %2486 = vmatprep.subr.bf16.mxu0 0
        %2487 = vmatpush1.bf16.msra.mxu0 0
        %2488 = vmatprep.subr.bf16.mxu0 0
        %2489 = vmatpush1.bf16.msra.mxu0 0
        %2490 = vmatprep.subr.bf16.mxu0 0
        %2491 = vmatpush1.bf16.msra.mxu0 0
        %2492 = vmatprep.subr.bf16.mxu0 0
        %2493 = vmatpush1.bf16.msra.mxu0 0
        %2494 = vmatprep.subr.bf16.mxu0 0
        %2495 = vmatpush1.bf16.msra.mxu0 0
        %2496 = vmatprep.mubr.bf16.mxu0 0
        %2497 = vmatmul.mubr.bf16.gmra.mrb[0].mxu0 %v2410
        %v2498 = vpop.f32.mrb[0].mxu0
        %v2499 = vadd.f32 %v2384, %v2498
        %v2500 = vpop.f32.mrb[0].mxu0
        %v2501 = vpop.f32.mrb[0].mxu0
        %v2502 = vpop.f32.mrb[0].mxu0
        %2503 = vdwg.mxu0
        %v2508 = vunpack.c.l.b16 %v2314
        %v2509 = vunpack.c.l.b16 %v2315
        %v2510 = vunpack.c.l.b16 %v2316
        %v2511 = vunpack.c.l.b16 %v2317
        %v2512 = vpack.c.b16 %v2509, %v2508
        %v2513 = vpack.c.b16 %v2511, %v2510
        %2516 = vmatprep.subr.bf16.mxu0 0
        %2517 = vmatpush1.bf16.msra.mxu0 %v2512
        %2518 = vmatprep.subr.bf16.mxu0 0
        %2519 = vmatpush1.bf16.msra.mxu0 %v2513
        %2520 = vmatprep.subr.bf16.mxu0 0
        %2521 = vmatpush1.bf16.msra.mxu0 0
        %2522 = vmatprep.subr.bf16.mxu0 0
        %2523 = vmatpush1.bf16.msra.mxu0 0
        %2524 = vmatprep.subr.bf16.mxu0 0
        %2525 = vmatpush1.bf16.msra.mxu0 0
        %2526 = vmatprep.subr.bf16.mxu0 0
        %2527 = vmatpush1.bf16.msra.mxu0 0
        %2528 = vmatprep.subr.bf16.mxu0 0
        %2529 = vmatpush1.bf16.msra.mxu0 0
        %2530 = vmatprep.subr.bf16.mxu0 0
        %2531 = vmatpush1.bf16.msra.mxu0 0
        %2532 = vmatprep.subr.bf16.mxu0 0
        %2533 = vmatpush1.bf16.msra.mxu0 0
        %2534 = vmatprep.subr.bf16.mxu0 0
        %2535 = vmatpush1.bf16.msra.mxu0 0
        %2536 = vmatprep.subr.bf16.mxu0 0
        %2537 = vmatpush1.bf16.msra.mxu0 0
        %2538 = vmatprep.subr.bf16.mxu0 0
        %2539 = vmatpush1.bf16.msra.mxu0 0
        %2540 = vmatprep.subr.bf16.mxu0 0
        %2541 = vmatpush1.bf16.msra.mxu0 0
        %2542 = vmatprep.subr.bf16.mxu0 0
        %2543 = vmatpush1.bf16.msra.mxu0 0
        %2544 = vmatprep.subr.bf16.mxu0 0
        %2545 = vmatpush1.bf16.msra.mxu0 0
        %2546 = vmatprep.subr.bf16.mxu0 0
        %2547 = vmatpush1.bf16.msra.mxu0 0
        %2548 = vmatprep.mubr.bf16.mxu0 0
        %2549 = vmatmul.mubr.bf16.gmra.mrb[0].mxu0 %v2410
        %v2550 = vpop.f32.mrb[0].mxu0
        %v2551 = vadd.f32 %v2388, %v2550
        %v2552 = vpop.f32.mrb[0].mxu0
        %v2553 = vpop.f32.mrb[0].mxu0
        %v2554 = vpop.f32.mrb[0].mxu0
        %2555 = vdwg.mxu0
        %v2560 = vunpack.c.l.b16 %v2318
        %v2561 = vunpack.c.l.b16 %v2319
        %v2562 = vunpack.c.l.b16 %v2320
        %v2563 = vunpack.c.l.b16 %v2321
        %v2564 = vpack.c.b16 %v2561, %v2560
        %v2565 = vpack.c.b16 %v2563, %v2562
        %2568 = vmatprep.subr.bf16.mxu0 0
        %2569 = vmatpush1.bf16.msra.mxu0 %v2564
        %2570 = vmatprep.subr.bf16.mxu0 0
        %2571 = vmatpush1.bf16.msra.mxu0 %v2565
        %2572 = vmatprep.subr.bf16.mxu0 0
        %2573 = vmatpush1.bf16.msra.mxu0 0
        %2574 = vmatprep.subr.bf16.mxu0 0
        %2575 = vmatpush1.bf16.msra.mxu0 0
        %2576 = vmatprep.subr.bf16.mxu0 0
        %2577 = vmatpush1.bf16.msra.mxu0 0
        %2578 = vmatprep.subr.bf16.mxu0 0
        %2579 = vmatpush1.bf16.msra.mxu0 0
        %2580 = vmatprep.subr.bf16.mxu0 0
        %2581 = vmatpush1.bf16.msra.mxu0 0
        %2582 = vmatprep.subr.bf16.mxu0 0
        %2583 = vmatpush1.bf16.msra.mxu0 0
        %2584 = vmatprep.subr.bf16.mxu0 0
        %2585 = vmatpush1.bf16.msra.mxu0 0
        %2586 = vmatprep.subr.bf16.mxu0 0
        %2587 = vmatpush1.bf16.msra.mxu0 0
        %2588 = vmatprep.subr.bf16.mxu0 0
        %2589 = vmatpush1.bf16.msra.mxu0 0
        %2590 = vmatprep.subr.bf16.mxu0 0
        %2591 = vmatpush1.bf16.msra.mxu0 0
        %2592 = vmatprep.subr.bf16.mxu0 0
        %2593 = vmatpush1.bf16.msra.mxu0 0
        %2594 = vmatprep.subr.bf16.mxu0 0
        %2595 = vmatpush1.bf16.msra.mxu0 0
        %2596 = vmatprep.subr.bf16.mxu0 0
        %2597 = vmatpush1.bf16.msra.mxu0 0
        %2598 = vmatprep.subr.bf16.mxu0 0
        %2599 = vmatpush1.bf16.msra.mxu0 0
        %2600 = vmatprep.mubr.bf16.mxu0 0
        %2601 = vmatmul.mubr.bf16.gmra.mrb[0].mxu0 %v2410
        %v2602 = vpop.f32.mrb[0].mxu0
        %v2603 = vadd.f32 %v2392, %v2602
        %v2604 = vpop.f32.mrb[0].mxu0
        %v2605 = vpop.f32.mrb[0].mxu0
        %v2606 = vpop.f32.mrb[0].mxu0
        %2607 = vdwg.mxu0
        %v2612 = vlaneseq
        %v2613 = vshrl.u32 %v2612, 7
        %v2614 = vsub.s32 0, %v2613
        %v2615 = vrot.slane %v2342, %v2614
        %v2616 = vlaneseq
        %v2617 = vshrl.u32 %v2616, 7
        %v2618 = vsub.s32 0, %v2617
        %v2619 = vrot.slane %v2343, %v2618
        %v2620 = vlaneseq
        %v2621 = vshrl.u32 %v2620, 7
        %v2622 = vsub.s32 0, %v2621
        %v2623 = vrot.slane %v2344, %v2622
        %v2624 = vlaneseq
        %v2625 = vshrl.u32 %v2624, 7
        %v2626 = vsub.s32 0, %v2625
        %v2627 = vrot.slane %v2345, %v2626
        %v2636 = vunpack.c.l.b16 %v2326
        %v2637 = vunpack.c.l.b16 %v2327
        %v2638 = vunpack.c.l.b16 %v2328
        %v2639 = vunpack.c.l.b16 %v2329
        %v2640 = vpack.c.b16 %v2637, %v2636
        %v2641 = vpack.c.b16 %v2639, %v2638
        %v2645 = vsel %vm849, %v2372, 0
        %2647 = vmatprep.subr.bf16.mxu0 0
        %2648 = vmatpush1.bf16.msra.mxu0 %v2640
        %2649 = vmatprep.subr.bf16.mxu0 0
        %2650 = vmatpush1.bf16.msra.mxu0 %v2641
        %2651 = vmatprep.subr.bf16.mxu0 0
        %2652 = vmatpush1.bf16.msra.mxu0 0
        %2653 = vmatprep.subr.bf16.mxu0 0
        %2654 = vmatpush1.bf16.msra.mxu0 0
        %2655 = vmatprep.subr.bf16.mxu0 0
        %2656 = vmatpush1.bf16.msra.mxu0 0
        %2657 = vmatprep.subr.bf16.mxu0 0
        %2658 = vmatpush1.bf16.msra.mxu0 0
        %2659 = vmatprep.subr.bf16.mxu0 0
        %2660 = vmatpush1.bf16.msra.mxu0 0
        %2661 = vmatprep.subr.bf16.mxu0 0
        %2662 = vmatpush1.bf16.msra.mxu0 0
        %2663 = vmatprep.subr.bf16.mxu0 0
        %2664 = vmatpush1.bf16.msra.mxu0 0
        %2665 = vmatprep.subr.bf16.mxu0 0
        %2666 = vmatpush1.bf16.msra.mxu0 0
        %2667 = vmatprep.subr.bf16.mxu0 0
        %2668 = vmatpush1.bf16.msra.mxu0 0
        %2669 = vmatprep.subr.bf16.mxu0 0
        %2670 = vmatpush1.bf16.msra.mxu0 0
        %2671 = vmatprep.subr.bf16.mxu0 0
        %2672 = vmatpush1.bf16.msra.mxu0 0
        %2673 = vmatprep.subr.bf16.mxu0 0
        %2674 = vmatpush1.bf16.msra.mxu0 0
        %2675 = vmatprep.subr.bf16.mxu0 0
        %2676 = vmatpush1.bf16.msra.mxu0 0
        %2677 = vmatprep.subr.bf16.mxu0 0
        %2678 = vmatpush1.bf16.msra.mxu0 0
        %2679 = vmatprep.mubr.bf16.mxu0 0
        %2680 = vmatmul.mubr.bf16.gmra.mrb[0].mxu0 %v2645
        %v2681 = vpop.f32.mrb[0].mxu0
        %v2682 = vadd.f32 %v2615, %v2681
        %v2683 = vpop.f32.mrb[0].mxu0
        %v2684 = vpop.f32.mrb[0].mxu0
        %v2685 = vpop.f32.mrb[0].mxu0
        %2686 = vdwg.mxu0
        %v2691 = vunpack.c.l.b16 %v2330
        %v2692 = vunpack.c.l.b16 %v2331
        %v2693 = vunpack.c.l.b16 %v2332
        %v2694 = vunpack.c.l.b16 %v2333
        %v2695 = vpack.c.b16 %v2692, %v2691
        %v2696 = vpack.c.b16 %v2694, %v2693
        %2699 = vmatprep.subr.bf16.mxu0 0
        %2700 = vmatpush1.bf16.msra.mxu0 %v2695
        %2701 = vmatprep.subr.bf16.mxu0 0
        %2702 = vmatpush1.bf16.msra.mxu0 %v2696
        %2703 = vmatprep.subr.bf16.mxu0 0
        %2704 = vmatpush1.bf16.msra.mxu0 0
        %2705 = vmatprep.subr.bf16.mxu0 0
        %2706 = vmatpush1.bf16.msra.mxu0 0
        %2707 = vmatprep.subr.bf16.mxu0 0
        %2708 = vmatpush1.bf16.msra.mxu0 0
        %2709 = vmatprep.subr.bf16.mxu0 0
        %2710 = vmatpush1.bf16.msra.mxu0 0
        %2711 = vmatprep.subr.bf16.mxu0 0
        %2712 = vmatpush1.bf16.msra.mxu0 0
        %2713 = vmatprep.subr.bf16.mxu0 0
        %2714 = vmatpush1.bf16.msra.mxu0 0
        %2715 = vmatprep.subr.bf16.mxu0 0
        %2716 = vmatpush1.bf16.msra.mxu0 0
        %2717 = vmatprep.subr.bf16.mxu0 0
        %2718 = vmatpush1.bf16.msra.mxu0 0
        %2719 = vmatprep.subr.bf16.mxu0 0
        %2720 = vmatpush1.bf16.msra.mxu0 0
        %2721 = vmatprep.subr.bf16.mxu0 0
        %2722 = vmatpush1.bf16.msra.mxu0 0
        %2723 = vmatprep.subr.bf16.mxu0 0
        %2724 = vmatpush1.bf16.msra.mxu0 0
        %2725 = vmatprep.subr.bf16.mxu0 0
        %2726 = vmatpush1.bf16.msra.mxu0 0
        %2727 = vmatprep.subr.bf16.mxu0 0
        %2728 = vmatpush1.bf16.msra.mxu0 0
        %2729 = vmatprep.subr.bf16.mxu0 0
        %2730 = vmatpush1.bf16.msra.mxu0 0
        %2731 = vmatprep.mubr.bf16.mxu0 0
        %2732 = vmatmul.mubr.bf16.gmra.mrb[0].mxu0 %v2645
        %v2733 = vpop.f32.mrb[0].mxu0
        %v2734 = vadd.f32 %v2619, %v2733
        %v2735 = vpop.f32.mrb[0].mxu0
        %v2736 = vpop.f32.mrb[0].mxu0
        %v2737 = vpop.f32.mrb[0].mxu0
        %2738 = vdwg.mxu0
        %v2743 = vunpack.c.l.b16 %v2334
        %v2744 = vunpack.c.l.b16 %v2335
        %v2745 = vunpack.c.l.b16 %v2336
        %v2746 = vunpack.c.l.b16 %v2337
        %v2747 = vpack.c.b16 %v2744, %v2743
        %v2748 = vpack.c.b16 %v2746, %v2745
        %2751 = vmatprep.subr.bf16.mxu0 0
        %2752 = vmatpush1.bf16.msra.mxu0 %v2747
        %2753 = vmatprep.subr.bf16.mxu0 0
        %2754 = vmatpush1.bf16.msra.mxu0 %v2748
        %2755 = vmatprep.subr.bf16.mxu0 0
        %2756 = vmatpush1.bf16.msra.mxu0 0
        %2757 = vmatprep.subr.bf16.mxu0 0
        %2758 = vmatpush1.bf16.msra.mxu0 0
        %2759 = vmatprep.subr.bf16.mxu0 0
        %2760 = vmatpush1.bf16.msra.mxu0 0
        %2761 = vmatprep.subr.bf16.mxu0 0
        %2762 = vmatpush1.bf16.msra.mxu0 0
        %2763 = vmatprep.subr.bf16.mxu0 0
        %2764 = vmatpush1.bf16.msra.mxu0 0
        %2765 = vmatprep.subr.bf16.mxu0 0
        %2766 = vmatpush1.bf16.msra.mxu0 0
        %2767 = vmatprep.subr.bf16.mxu0 0
        %2768 = vmatpush1.bf16.msra.mxu0 0
        %2769 = vmatprep.subr.bf16.mxu0 0
        %2770 = vmatpush1.bf16.msra.mxu0 0
        %2771 = vmatprep.subr.bf16.mxu0 0
        %2772 = vmatpush1.bf16.msra.mxu0 0
        %2773 = vmatprep.subr.bf16.mxu0 0
        %2774 = vmatpush1.bf16.msra.mxu0 0
        %2775 = vmatprep.subr.bf16.mxu0 0
        %2776 = vmatpush1.bf16.msra.mxu0 0
        %2777 = vmatprep.subr.bf16.mxu0 0
        %2778 = vmatpush1.bf16.msra.mxu0 0
        %2779 = vmatprep.subr.bf16.mxu0 0
        %2780 = vmatpush1.bf16.msra.mxu0 0
        %2781 = vmatprep.subr.bf16.mxu0 0
        %2782 = vmatpush1.bf16.msra.mxu0 0
        %2783 = vmatprep.mubr.bf16.mxu0 0
        %2784 = vmatmul.mubr.bf16.gmra.mrb[0].mxu0 %v2645
        %v2785 = vpop.f32.mrb[0].mxu0
        %v2786 = vadd.f32 %v2623, %v2785
        %v2787 = vpop.f32.mrb[0].mxu0
        %v2788 = vpop.f32.mrb[0].mxu0
        %v2789 = vpop.f32.mrb[0].mxu0
        %2790 = vdwg.mxu0
        %v2795 = vunpack.c.l.b16 %v2338
        %v2796 = vunpack.c.l.b16 %v2339
        %v2797 = vunpack.c.l.b16 %v2340
        %v2798 = vunpack.c.l.b16 %v2341
        %v2799 = vpack.c.b16 %v2796, %v2795
        %v2800 = vpack.c.b16 %v2798, %v2797
        %2803 = vmatprep.subr.bf16.mxu0 0
        %2804 = vmatpush1.bf16.msra.mxu0 %v2799
        %2805 = vmatprep.subr.bf16.mxu0 0
        %2806 = vmatpush1.bf16.msra.mxu0 %v2800
        %2807 = vmatprep.subr.bf16.mxu0 0
        %2808 = vmatpush1.bf16.msra.mxu0 0
        %2809 = vmatprep.subr.bf16.mxu0 0
        %2810 = vmatpush1.bf16.msra.mxu0 0
        %2811 = vmatprep.subr.bf16.mxu0 0
        %2812 = vmatpush1.bf16.msra.mxu0 0
        %2813 = vmatprep.subr.bf16.mxu0 0
        %2814 = vmatpush1.bf16.msra.mxu0 0
        %2815 = vmatprep.subr.bf16.mxu0 0
        %2816 = vmatpush1.bf16.msra.mxu0 0
        %2817 = vmatprep.subr.bf16.mxu0 0
        %2818 = vmatpush1.bf16.msra.mxu0 0
        %2819 = vmatprep.subr.bf16.mxu0 0
        %2820 = vmatpush1.bf16.msra.mxu0 0
        %2821 = vmatprep.subr.bf16.mxu0 0
        %2822 = vmatpush1.bf16.msra.mxu0 0
        %2823 = vmatprep.subr.bf16.mxu0 0
        %2824 = vmatpush1.bf16.msra.mxu0 0
        %2825 = vmatprep.subr.bf16.mxu0 0
        %2826 = vmatpush1.bf16.msra.mxu0 0
        %2827 = vmatprep.subr.bf16.mxu0 0
        %2828 = vmatpush1.bf16.msra.mxu0 0
        %2829 = vmatprep.subr.bf16.mxu0 0
        %2830 = vmatpush1.bf16.msra.mxu0 0
        %2831 = vmatprep.subr.bf16.mxu0 0
        %2832 = vmatpush1.bf16.msra.mxu0 0
        %2833 = vmatprep.subr.bf16.mxu0 0
        %2834 = vmatpush1.bf16.msra.mxu0 0
        %2835 = vmatprep.mubr.bf16.mxu0 0
        %2836 = vmatmul.mubr.bf16.gmra.mrb[0].mxu0 %v2645
        %v2837 = vpop.f32.mrb[0].mxu0
        %v2838 = vadd.f32 %v2627, %v2837
        %v2839 = vpop.f32.mrb[0].mxu0
        %v2840 = vpop.f32.mrb[0].mxu0
        %v2841 = vpop.f32.mrb[0].mxu0
        %2842 = vdwg.mxu0
        %v2847 = vlaneseq
        %v2848 = vshrl.u32 %v2847, 7
        %v2849 = vsub.s32 0, %v2848
        %v2850 = vrot.slane %v2362, %v2849
        %v2851 = vlaneseq
        %v2852 = vshrl.u32 %v2851, 7
        %v2853 = vsub.s32 0, %v2852
        %v2854 = vrot.slane %v2363, %v2853
        %v2855 = vlaneseq
        %v2856 = vshrl.u32 %v2855, 7
        %v2857 = vsub.s32 0, %v2856
        %v2858 = vrot.slane %v2364, %v2857
        %v2859 = vlaneseq
        %v2860 = vshrl.u32 %v2859, 7
        %v2861 = vsub.s32 0, %v2860
        %v2862 = vrot.slane %v2365, %v2861
        %v2871 = vunpack.c.l.b16 %v2346
        %v2872 = vunpack.c.l.b16 %v2347
        %v2873 = vunpack.c.l.b16 %v2348
        %v2874 = vunpack.c.l.b16 %v2349
        %v2875 = vpack.c.b16 %v2872, %v2871
        %v2876 = vpack.c.b16 %v2874, %v2873
        %2879 = vmatprep.subr.bf16.mxu0 0
        %2880 = vmatpush1.bf16.msra.mxu0 %v2875
        %2881 = vmatprep.subr.bf16.mxu0 0
        %2882 = vmatpush1.bf16.msra.mxu0 %v2876
        %2883 = vmatprep.subr.bf16.mxu0 0
        %2884 = vmatpush1.bf16.msra.mxu0 0
        %2885 = vmatprep.subr.bf16.mxu0 0
        %2886 = vmatpush1.bf16.msra.mxu0 0
        %2887 = vmatprep.subr.bf16.mxu0 0
        %2888 = vmatpush1.bf16.msra.mxu0 0
        %2889 = vmatprep.subr.bf16.mxu0 0
        %2890 = vmatpush1.bf16.msra.mxu0 0
        %2891 = vmatprep.subr.bf16.mxu0 0
        %2892 = vmatpush1.bf16.msra.mxu0 0
        %2893 = vmatprep.subr.bf16.mxu0 0
        %2894 = vmatpush1.bf16.msra.mxu0 0
        %2895 = vmatprep.subr.bf16.mxu0 0
        %2896 = vmatpush1.bf16.msra.mxu0 0
        %2897 = vmatprep.subr.bf16.mxu0 0
        %2898 = vmatpush1.bf16.msra.mxu0 0
        %2899 = vmatprep.subr.bf16.mxu0 0
        %2900 = vmatpush1.bf16.msra.mxu0 0
        %2901 = vmatprep.subr.bf16.mxu0 0
        %2902 = vmatpush1.bf16.msra.mxu0 0
        %2903 = vmatprep.subr.bf16.mxu0 0
        %2904 = vmatpush1.bf16.msra.mxu0 0
        %2905 = vmatprep.subr.bf16.mxu0 0
        %2906 = vmatpush1.bf16.msra.mxu0 0
        %2907 = vmatprep.subr.bf16.mxu0 0
        %2908 = vmatpush1.bf16.msra.mxu0 0
        %2909 = vmatprep.subr.bf16.mxu0 0
        %2910 = vmatpush1.bf16.msra.mxu0 0
        %2911 = vmatprep.mubr.bf16.mxu0 0
        %2912 = vmatmul.mubr.bf16.gmra.mrb[0].mxu0 %v2645
        %v2913 = vpop.f32.mrb[0].mxu0
        %v2914 = vadd.f32 %v2850, %v2913
        %v2915 = vpop.f32.mrb[0].mxu0
        %v2916 = vpop.f32.mrb[0].mxu0
        %v2917 = vpop.f32.mrb[0].mxu0
        %2918 = vdwg.mxu0
        %v2923 = vunpack.c.l.b16 %v2350
        %v2924 = vunpack.c.l.b16 %v2351
        %v2925 = vunpack.c.l.b16 %v2352
        %v2926 = vunpack.c.l.b16 %v2353
        %v2927 = vpack.c.b16 %v2924, %v2923
        %v2928 = vpack.c.b16 %v2926, %v2925
        %2931 = vmatprep.subr.bf16.mxu0 0
        %2932 = vmatpush1.bf16.msra.mxu0 %v2927
        %2933 = vmatprep.subr.bf16.mxu0 0
        %2934 = vmatpush1.bf16.msra.mxu0 %v2928
        %2935 = vmatprep.subr.bf16.mxu0 0
        %2936 = vmatpush1.bf16.msra.mxu0 0
        %2937 = vmatprep.subr.bf16.mxu0 0
        %2938 = vmatpush1.bf16.msra.mxu0 0
        %2939 = vmatprep.subr.bf16.mxu0 0
        %2940 = vmatpush1.bf16.msra.mxu0 0
        %2941 = vmatprep.subr.bf16.mxu0 0
        %2942 = vmatpush1.bf16.msra.mxu0 0
        %2943 = vmatprep.subr.bf16.mxu0 0
        %2944 = vmatpush1.bf16.msra.mxu0 0
        %2945 = vmatprep.subr.bf16.mxu0 0
        %2946 = vmatpush1.bf16.msra.mxu0 0
        %2947 = vmatprep.subr.bf16.mxu0 0
        %2948 = vmatpush1.bf16.msra.mxu0 0
        %2949 = vmatprep.subr.bf16.mxu0 0
        %2950 = vmatpush1.bf16.msra.mxu0 0
        %2951 = vmatprep.subr.bf16.mxu0 0
        %2952 = vmatpush1.bf16.msra.mxu0 0
        %2953 = vmatprep.subr.bf16.mxu0 0
        %2954 = vmatpush1.bf16.msra.mxu0 0
        %2955 = vmatprep.subr.bf16.mxu0 0
        %2956 = vmatpush1.bf16.msra.mxu0 0
        %2957 = vmatprep.subr.bf16.mxu0 0
        %2958 = vmatpush1.bf16.msra.mxu0 0
        %2959 = vmatprep.subr.bf16.mxu0 0
        %2960 = vmatpush1.bf16.msra.mxu0 0
        %2961 = vmatprep.subr.bf16.mxu0 0
        %2962 = vmatpush1.bf16.msra.mxu0 0
        %2963 = vmatprep.mubr.bf16.mxu0 0
        %2964 = vmatmul.mubr.bf16.gmra.mrb[0].mxu0 %v2645
        %v2965 = vpop.f32.mrb[0].mxu0
        %v2966 = vadd.f32 %v2854, %v2965
        %v2967 = vpop.f32.mrb[0].mxu0
        %v2968 = vpop.f32.mrb[0].mxu0
        %v2969 = vpop.f32.mrb[0].mxu0
        %2970 = vdwg.mxu0
        %v2975 = vunpack.c.l.b16 %v2354
        %v2976 = vunpack.c.l.b16 %v2355
        %v2977 = vunpack.c.l.b16 %v2356
        %v2978 = vunpack.c.l.b16 %v2357
        %v2979 = vpack.c.b16 %v2976, %v2975
        %v2980 = vpack.c.b16 %v2978, %v2977
        %2983 = vmatprep.subr.bf16.mxu0 0
        %2984 = vmatpush1.bf16.msra.mxu0 %v2979
        %2985 = vmatprep.subr.bf16.mxu0 0
        %2986 = vmatpush1.bf16.msra.mxu0 %v2980
        %2987 = vmatprep.subr.bf16.mxu0 0
        %2988 = vmatpush1.bf16.msra.mxu0 0
        %2989 = vmatprep.subr.bf16.mxu0 0
        %2990 = vmatpush1.bf16.msra.mxu0 0
        %2991 = vmatprep.subr.bf16.mxu0 0
        %2992 = vmatpush1.bf16.msra.mxu0 0
        %2993 = vmatprep.subr.bf16.mxu0 0
        %2994 = vmatpush1.bf16.msra.mxu0 0
        %2995 = vmatprep.subr.bf16.mxu0 0
        %2996 = vmatpush1.bf16.msra.mxu0 0
        %2997 = vmatprep.subr.bf16.mxu0 0
        %2998 = vmatpush1.bf16.msra.mxu0 0
        %2999 = vmatprep.subr.bf16.mxu0 0
        %3000 = vmatpush1.bf16.msra.mxu0 0
        %3001 = vmatprep.subr.bf16.mxu0 0
        %3002 = vmatpush1.bf16.msra.mxu0 0
        %3003 = vmatprep.subr.bf16.mxu0 0
        %3004 = vmatpush1.bf16.msra.mxu0 0
        %3005 = vmatprep.subr.bf16.mxu0 0
        %3006 = vmatpush1.bf16.msra.mxu0 0
        %3007 = vmatprep.subr.bf16.mxu0 0
        %3008 = vmatpush1.bf16.msra.mxu0 0
        %3009 = vmatprep.subr.bf16.mxu0 0
        %3010 = vmatpush1.bf16.msra.mxu0 0
        %3011 = vmatprep.subr.bf16.mxu0 0
        %3012 = vmatpush1.bf16.msra.mxu0 0
        %3013 = vmatprep.subr.bf16.mxu0 0
        %3014 = vmatpush1.bf16.msra.mxu0 0
        %3015 = vmatprep.mubr.bf16.mxu0 0
        %3016 = vmatmul.mubr.bf16.gmra.mrb[0].mxu0 %v2645
        %v3017 = vpop.f32.mrb[0].mxu0
        %v3018 = vadd.f32 %v2858, %v3017
        %v3019 = vpop.f32.mrb[0].mxu0
        %v3020 = vpop.f32.mrb[0].mxu0
        %v3021 = vpop.f32.mrb[0].mxu0
        %3022 = vdwg.mxu0
        %v3027 = vunpack.c.l.b16 %v2358
        %v3028 = vunpack.c.l.b16 %v2359
        %v3029 = vunpack.c.l.b16 %v2360
        %v3030 = vunpack.c.l.b16 %v2361
        %v3031 = vpack.c.b16 %v3028, %v3027
        %v3032 = vpack.c.b16 %v3030, %v3029
        %3035 = vmatprep.subr.bf16.mxu0 0
        %3036 = vmatpush1.bf16.msra.mxu0 %v3031
        %3037 = vmatprep.subr.bf16.mxu0 0
        %3038 = vmatpush1.bf16.msra.mxu0 %v3032
        %3039 = vmatprep.subr.bf16.mxu0 0
        %3040 = vmatpush1.bf16.msra.mxu0 0
        %3041 = vmatprep.subr.bf16.mxu0 0
        %3042 = vmatpush1.bf16.msra.mxu0 0
        %3043 = vmatprep.subr.bf16.mxu0 0
        %3044 = vmatpush1.bf16.msra.mxu0 0
        %3045 = vmatprep.subr.bf16.mxu0 0
        %3046 = vmatpush1.bf16.msra.mxu0 0
        %3047 = vmatprep.subr.bf16.mxu0 0
        %3048 = vmatpush1.bf16.msra.mxu0 0
        %3049 = vmatprep.subr.bf16.mxu0 0
        %3050 = vmatpush1.bf16.msra.mxu0 0
        %3051 = vmatprep.subr.bf16.mxu0 0
        %3052 = vmatpush1.bf16.msra.mxu0 0
        %3053 = vmatprep.subr.bf16.mxu0 0
        %3054 = vmatpush1.bf16.msra.mxu0 0
        %3055 = vmatprep.subr.bf16.mxu0 0
        %3056 = vmatpush1.bf16.msra.mxu0 0
        %3057 = vmatprep.subr.bf16.mxu0 0
        %3058 = vmatpush1.bf16.msra.mxu0 0
        %3059 = vmatprep.subr.bf16.mxu0 0
        %3060 = vmatpush1.bf16.msra.mxu0 0
        %3061 = vmatprep.subr.bf16.mxu0 0
        %3062 = vmatpush1.bf16.msra.mxu0 0
        %3063 = vmatprep.subr.bf16.mxu0 0
        %3064 = vmatpush1.bf16.msra.mxu0 0
        %3065 = vmatprep.subr.bf16.mxu0 0
        %3066 = vmatpush1.bf16.msra.mxu0 0
        %3067 = vmatprep.mubr.bf16.mxu0 0
        %3068 = vmatmul.mubr.bf16.gmra.mrb[0].mxu0 %v2645
        %v3069 = vpop.f32.mrb[0].mxu0
        %v3070 = vadd.f32 %v2862, %v3069
        %v3071 = vpop.f32.mrb[0].mxu0
        %v3072 = vpop.f32.mrb[0].mxu0
        %v3073 = vpop.f32.mrb[0].mxu0
        %3074 = vdwg.mxu0
        %v3075 = vpack.c.bf16 %v2447, %v2447
        %v3076 = vpack.c.bf16 %v2499, %v2499
        %v3077 = vpack.c.bf16 %v2551, %v2551
        %v3078 = vpack.c.bf16 %v2603, %v2603
        %v3079 = vpack.c.bf16 %v2682, %v2682
        %v3080 = vpack.c.bf16 %v2734, %v2734
        %v3081 = vpack.c.bf16 %v2786, %v2786
        %v3082 = vpack.c.bf16 %v2838, %v2838
        %v3084 = vsel %vm1648, %v3075, 0
        %v3087 = vsel %vm1648, %v3079, 0
        %3089 = vmatprep.subr.bf16.mxu0 0
        %3090 = vmatpush1.bf16.xpose.msra.mxu0 %v3087
        %3091 = vmatprep.subr.bf16.mxu0 0
        %3092 = vmatpush1.bf16.xpose.msra.mxu0 0
        %3093 = vmatprep.subr.bf16.mxu0 0
        %3094 = vmatpush1.bf16.xpose.msra.mxu0 0
        %3095 = vmatprep.subr.bf16.mxu0 0
        %3096 = vmatpush1.bf16.xpose.msra.mxu0 0
        %3097 = vmatprep.subr.bf16.mxu0 0
        %3098 = vmatpush1.bf16.xpose.msra.mxu0 0
        %3099 = vmatprep.subr.bf16.mxu0 0
        %3100 = vmatpush1.bf16.xpose.msra.mxu0 0
        %3101 = vmatprep.subr.bf16.mxu0 0
        %3102 = vmatpush1.bf16.xpose.msra.mxu0 0
        %3103 = vmatprep.subr.bf16.mxu0 0
        %3104 = vmatpush1.bf16.xpose.msra.mxu0 0
        %3105 = vmatprep.subr.bf16.mxu0 0
        %3106 = vmatpush1.bf16.xpose.msra.mxu0 0
        %3107 = vmatprep.subr.bf16.mxu0 0
        %3108 = vmatpush1.bf16.xpose.msra.mxu0 0
        %3109 = vmatprep.subr.bf16.mxu0 0
        %3110 = vmatpush1.bf16.xpose.msra.mxu0 0
        %3111 = vmatprep.subr.bf16.mxu0 0
        %3112 = vmatpush1.bf16.xpose.msra.mxu0 0
        %3113 = vmatprep.subr.bf16.mxu0 0
        %3114 = vmatpush1.bf16.xpose.msra.mxu0 0
        %3115 = vmatprep.subr.bf16.mxu0 0
        %3116 = vmatpush1.bf16.xpose.msra.mxu0 0
        %3117 = vmatprep.subr.bf16.mxu0 0
        %3118 = vmatpush1.bf16.xpose.msra.mxu0 0
        %3119 = vmatprep.subr.bf16.mxu0 0
        %3120 = vmatpush1.bf16.xpose.msra.mxu0 0
        %3121 = vmatprep.mubr.bf16.mxu0 0
        %3122 = vmatmul.mubr.bf16.gmra.mrb[0].mxu0 %v3084
        %v3123 = vpop.f32.mrb[0].mxu0
        %v3124 = vadd.f32 0.0, %v3123
        %v3125 = vpop.f32.mrb[0].mxu0
        %v3126 = vpop.f32.mrb[0].mxu0
        %v3127 = vpop.f32.mrb[0].mxu0
        %3128 = vdwg.mxu0
        %v3130 = vsel %vm1648, %v3076, 0
        %v3133 = vsel %vm1648, %v3080, 0
        %3135 = vmatprep.subr.bf16.mxu0 0
        %3136 = vmatpush1.bf16.xpose.msra.mxu0 %v3133
        %3137 = vmatprep.subr.bf16.mxu0 0
        %3138 = vmatpush1.bf16.xpose.msra.mxu0 0
        %3139 = vmatprep.subr.bf16.mxu0 0
        %3140 = vmatpush1.bf16.xpose.msra.mxu0 0
        %3141 = vmatprep.subr.bf16.mxu0 0
        %3142 = vmatpush1.bf16.xpose.msra.mxu0 0
        %3143 = vmatprep.subr.bf16.mxu0 0
        %3144 = vmatpush1.bf16.xpose.msra.mxu0 0
        %3145 = vmatprep.subr.bf16.mxu0 0
        %3146 = vmatpush1.bf16.xpose.msra.mxu0 0
        %3147 = vmatprep.subr.bf16.mxu0 0
        %3148 = vmatpush1.bf16.xpose.msra.mxu0 0
        %3149 = vmatprep.subr.bf16.mxu0 0
        %3150 = vmatpush1.bf16.xpose.msra.mxu0 0
        %3151 = vmatprep.subr.bf16.mxu0 0
        %3152 = vmatpush1.bf16.xpose.msra.mxu0 0
        %3153 = vmatprep.subr.bf16.mxu0 0
        %3154 = vmatpush1.bf16.xpose.msra.mxu0 0
        %3155 = vmatprep.subr.bf16.mxu0 0
        %3156 = vmatpush1.bf16.xpose.msra.mxu0 0
        %3157 = vmatprep.subr.bf16.mxu0 0
        %3158 = vmatpush1.bf16.xpose.msra.mxu0 0
        %3159 = vmatprep.subr.bf16.mxu0 0
        %3160 = vmatpush1.bf16.xpose.msra.mxu0 0
        %3161 = vmatprep.subr.bf16.mxu0 0
        %3162 = vmatpush1.bf16.xpose.msra.mxu0 0
        %3163 = vmatprep.subr.bf16.mxu0 0
        %3164 = vmatpush1.bf16.xpose.msra.mxu0 0
        %3165 = vmatprep.subr.bf16.mxu0 0
        %3166 = vmatpush1.bf16.xpose.msra.mxu0 0
        %3167 = vmatprep.mubr.bf16.mxu0 0
        %3168 = vmatmul.mubr.bf16.gmra.mrb[0].mxu0 %v3130
        %v3169 = vpop.f32.mrb[0].mxu0
        %v3170 = vadd.f32 0.0, %v3169
        %v3171 = vpop.f32.mrb[0].mxu0
        %v3172 = vpop.f32.mrb[0].mxu0
        %v3173 = vpop.f32.mrb[0].mxu0
        %3174 = vdwg.mxu0
        %v3176 = vsel %vm1648, %v3077, 0
        %v3179 = vsel %vm1648, %v3081, 0
        %3181 = vmatprep.subr.bf16.mxu0 0
        %3182 = vmatpush1.bf16.xpose.msra.mxu0 %v3179
        %3183 = vmatprep.subr.bf16.mxu0 0
        %3184 = vmatpush1.bf16.xpose.msra.mxu0 0
        %3185 = vmatprep.subr.bf16.mxu0 0
        %3186 = vmatpush1.bf16.xpose.msra.mxu0 0
        %3187 = vmatprep.subr.bf16.mxu0 0
        %3188 = vmatpush1.bf16.xpose.msra.mxu0 0
        %3189 = vmatprep.subr.bf16.mxu0 0
        %3190 = vmatpush1.bf16.xpose.msra.mxu0 0
        %3191 = vmatprep.subr.bf16.mxu0 0
        %3192 = vmatpush1.bf16.xpose.msra.mxu0 0
        %3193 = vmatprep.subr.bf16.mxu0 0
        %3194 = vmatpush1.bf16.xpose.msra.mxu0 0
        %3195 = vmatprep.subr.bf16.mxu0 0
        %3196 = vmatpush1.bf16.xpose.msra.mxu0 0
        %3197 = vmatprep.subr.bf16.mxu0 0
        %3198 = vmatpush1.bf16.xpose.msra.mxu0 0
        %3199 = vmatprep.subr.bf16.mxu0 0
        %3200 = vmatpush1.bf16.xpose.msra.mxu0 0
        %3201 = vmatprep.subr.bf16.mxu0 0
        %3202 = vmatpush1.bf16.xpose.msra.mxu0 0
        %3203 = vmatprep.subr.bf16.mxu0 0
        %3204 = vmatpush1.bf16.xpose.msra.mxu0 0
        %3205 = vmatprep.subr.bf16.mxu0 0
        %3206 = vmatpush1.bf16.xpose.msra.mxu0 0
        %3207 = vmatprep.subr.bf16.mxu0 0
        %3208 = vmatpush1.bf16.xpose.msra.mxu0 0
        %3209 = vmatprep.subr.bf16.mxu0 0
        %3210 = vmatpush1.bf16.xpose.msra.mxu0 0
        %3211 = vmatprep.subr.bf16.mxu0 0
        %3212 = vmatpush1.bf16.xpose.msra.mxu0 0
        %3213 = vmatprep.mubr.bf16.mxu0 0
        %3214 = vmatmul.mubr.bf16.gmra.mrb[0].mxu0 %v3176
        %v3215 = vpop.f32.mrb[0].mxu0
        %v3216 = vadd.f32 0.0, %v3215
        %v3217 = vpop.f32.mrb[0].mxu0
        %v3218 = vpop.f32.mrb[0].mxu0
        %v3219 = vpop.f32.mrb[0].mxu0
        %3220 = vdwg.mxu0
        %v3222 = vsel %vm1648, %v3078, 0
        %v3225 = vsel %vm1648, %v3082, 0
        %3227 = vmatprep.subr.bf16.mxu0 0
        %3228 = vmatpush1.bf16.xpose.msra.mxu0 %v3225
        %3229 = vmatprep.subr.bf16.mxu0 0
        %3230 = vmatpush1.bf16.xpose.msra.mxu0 0
        %3231 = vmatprep.subr.bf16.mxu0 0
        %3232 = vmatpush1.bf16.xpose.msra.mxu0 0
        %3233 = vmatprep.subr.bf16.mxu0 0
        %3234 = vmatpush1.bf16.xpose.msra.mxu0 0
        %3235 = vmatprep.subr.bf16.mxu0 0
        %3236 = vmatpush1.bf16.xpose.msra.mxu0 0
        %3237 = vmatprep.subr.bf16.mxu0 0
        %3238 = vmatpush1.bf16.xpose.msra.mxu0 0
        %3239 = vmatprep.subr.bf16.mxu0 0
        %3240 = vmatpush1.bf16.xpose.msra.mxu0 0
        %3241 = vmatprep.subr.bf16.mxu0 0
        %3242 = vmatpush1.bf16.xpose.msra.mxu0 0
        %3243 = vmatprep.subr.bf16.mxu0 0
        %3244 = vmatpush1.bf16.xpose.msra.mxu0 0
        %3245 = vmatprep.subr.bf16.mxu0 0
        %3246 = vmatpush1.bf16.xpose.msra.mxu0 0
        %3247 = vmatprep.subr.bf16.mxu0 0
        %3248 = vmatpush1.bf16.xpose.msra.mxu0 0
        %3249 = vmatprep.subr.bf16.mxu0 0
        %3250 = vmatpush1.bf16.xpose.msra.mxu0 0
        %3251 = vmatprep.subr.bf16.mxu0 0
        %3252 = vmatpush1.bf16.xpose.msra.mxu0 0
        %3253 = vmatprep.subr.bf16.mxu0 0
        %3254 = vmatpush1.bf16.xpose.msra.mxu0 0
        %3255 = vmatprep.subr.bf16.mxu0 0
        %3256 = vmatpush1.bf16.xpose.msra.mxu0 0
        %3257 = vmatprep.subr.bf16.mxu0 0
        %3258 = vmatpush1.bf16.xpose.msra.mxu0 0
        %3259 = vmatprep.mubr.bf16.mxu0 0
        %3260 = vmatmul.mubr.bf16.gmra.mrb[0].mxu0 %v3222
        %v3261 = vpop.f32.mrb[0].mxu0
        %v3262 = vadd.f32 0.0, %v3261
        %v3263 = vpop.f32.mrb[0].mxu0
        %v3264 = vpop.f32.mrb[0].mxu0
        %v3265 = vpop.f32.mrb[0].mxu0
        %3266 = vdwg.mxu0
        %vm3267 = vcmp.eq.f32.partialorder %v846, 0.0
        %v3268 = vsel %vm3267, 1, 0
        %v3269 = vlaneseq
        %v3270 = vshrl.u32 %v3269, 7
        %v3271 = vsub.s32 0, %v3270
        %v3272 = vrot.slane %v3268, %v3271
        %vm3273 = vcmp.eq.s32.totalorder %v3272, 1
        %v3274 = vsel %vm3273, -1e+09, %v3124
        %v3275 = vsel %vm3273, -1e+09, %v3170
        %v3276 = vsel %vm3273, -1e+09, %v3216
        %v3277 = vsel %vm3273, -1e+09, %v3262
        %v3278 = vsel %vm1648, %v3274, -inf
        %3279 = vmax.xlane.f32.xlu0 %v3278
        %v3280 = vpop.xlane.xlu0 %3279
        %v3281 = vsel %vm1648, %v3275, -inf
        %3282 = vmax.xlane.f32.xlu0 %v3281
        %v3283 = vpop.xlane.xlu0 %3282
        %v3284 = vsel %vm1648, %v3276, -inf
        %3285 = vmax.xlane.f32.xlu0 %v3284
        %v3286 = vpop.xlane.xlu0 %3285
        %v3287 = vsel %vm1648, %v3277, -inf
        %3288 = vmax.xlane.f32.xlu0 %v3287
        %v3289 = vpop.xlane.xlu0 %3288
        %v3290 = vsub.f32 %v3274, %v3280
        %v3291 = vsub.f32 %v3275, %v3283
        %v3292 = vsub.f32 %v3276, %v3286
        %v3293 = vsub.f32 %v3277, %v3289
        %v3294 = vmul.f32 %v3290, 1.442695
        %v3295 = vpow.pop %v3294
        %v3296 = vmul.f32 %v3291, 1.442695
        %v3297 = vpow.pop %v3296
        %v3298 = vmul.f32 %v3292, 1.442695
        %v3299 = vpow.pop %v3298
        %v3300 = vmul.f32 %v3293, 1.442695
        %v3301 = vpow.pop %v3300
        %v3302 = vsel %vm1648, %v3295, 0.0
        %3303 = vadd.xlane.f32.xlu0 %v3302
        %v3304 = vpop.xlane.xlu0 %3303
        %v3305 = vsel %vm1648, %v3297, 0.0
        %3306 = vadd.xlane.f32.xlu0 %v3305
        %v3307 = vpop.xlane.xlu0 %3306
        %v3308 = vsel %vm1648, %v3299, 0.0
        %3309 = vadd.xlane.f32.xlu0 %v3308
        %v3310 = vpop.xlane.xlu0 %3309
        %v3311 = vsel %vm1648, %v3301, 0.0
        %3312 = vadd.xlane.f32.xlu0 %v3311
        %v3313 = vpop.xlane.xlu0 %3312
        %v3314 = vrcp.pop %v3304
        %v3315 = vrcp.pop %v3307
        %v3316 = vrcp.pop %v3310
        %v3317 = vrcp.pop %v3313
        %v3318 = vmul.f32 %v3295, %v3314
        %v3319 = vmul.f32 %v3297, %v3315
        %v3320 = vmul.f32 %v3299, %v3316
        %v3321 = vmul.f32 %v3301, %v3317
        %v3322 = vpack.c.bf16 %v3318, %v3318
        %v3323 = vpack.c.bf16 %v3319, %v3319
        %v3324 = vpack.c.bf16 %v3320, %v3320
        %v3325 = vpack.c.bf16 %v3321, %v3321
        %v3326 = vpack.c.bf16 %v2914, %v2914
        %v3327 = vpack.c.bf16 %v2966, %v2966
        %v3328 = vpack.c.bf16 %v3018, %v3018
        %v3329 = vpack.c.bf16 %v3070, %v3070
        %v3331 = vsel %vm1648, %v3322, 0
        %v3334 = vsel %vm1895, %v3326, 0
        %3336 = vmatprep.subr.bf16.mxu0 0
        %3337 = vmatpush1.bf16.msra.mxu0 %v3334
        %3338 = vmatprep.subr.bf16.mxu0 0
        %3339 = vmatpush1.bf16.msra.mxu0 0
        %3340 = vmatprep.subr.bf16.mxu0 0
        %3341 = vmatpush1.bf16.msra.mxu0 0
        %3342 = vmatprep.subr.bf16.mxu0 0
        %3343 = vmatpush1.bf16.msra.mxu0 0
        %3344 = vmatprep.subr.bf16.mxu0 0
        %3345 = vmatpush1.bf16.msra.mxu0 0
        %3346 = vmatprep.subr.bf16.mxu0 0
        %3347 = vmatpush1.bf16.msra.mxu0 0
        %3348 = vmatprep.subr.bf16.mxu0 0
        %3349 = vmatpush1.bf16.msra.mxu0 0
        %3350 = vmatprep.subr.bf16.mxu0 0
        %3351 = vmatpush1.bf16.msra.mxu0 0
        %3352 = vmatprep.subr.bf16.mxu0 0
        %3353 = vmatpush1.bf16.msra.mxu0 0
        %3354 = vmatprep.subr.bf16.mxu0 0
        %3355 = vmatpush1.bf16.msra.mxu0 0
        %3356 = vmatprep.subr.bf16.mxu0 0
        %3357 = vmatpush1.bf16.msra.mxu0 0
        %3358 = vmatprep.subr.bf16.mxu0 0
        %3359 = vmatpush1.bf16.msra.mxu0 0
        %3360 = vmatprep.subr.bf16.mxu0 0
        %3361 = vmatpush1.bf16.msra.mxu0 0
        %3362 = vmatprep.subr.bf16.mxu0 0
        %3363 = vmatpush1.bf16.msra.mxu0 0
        %3364 = vmatprep.subr.bf16.mxu0 0
        %3365 = vmatpush1.bf16.msra.mxu0 0
        %3366 = vmatprep.subr.bf16.mxu0 0
        %3367 = vmatpush1.bf16.msra.mxu0 0
        %3368 = vmatprep.mubr.bf16.mxu0 0
        %3369 = vmatmul.mubr.bf16.gmra.mrb[0].mxu0 %v3331
        %v3370 = vpop.f32.mrb[0].mxu0
        %v3371 = vadd.f32 0.0, %v3370
        %v3372 = vpop.f32.mrb[0].mxu0
        %v3373 = vpop.f32.mrb[0].mxu0
        %v3374 = vpop.f32.mrb[0].mxu0
        %3375 = vdwg.mxu0
        %v3377 = vsel %vm1648, %v3323, 0
        %v3380 = vsel %vm1895, %v3327, 0
        %3382 = vmatprep.subr.bf16.mxu0 0
        %3383 = vmatpush1.bf16.msra.mxu0 %v3380
        %3384 = vmatprep.subr.bf16.mxu0 0
        %3385 = vmatpush1.bf16.msra.mxu0 0
        %3386 = vmatprep.subr.bf16.mxu0 0
        %3387 = vmatpush1.bf16.msra.mxu0 0
        %3388 = vmatprep.subr.bf16.mxu0 0
        %3389 = vmatpush1.bf16.msra.mxu0 0
        %3390 = vmatprep.subr.bf16.mxu0 0
        %3391 = vmatpush1.bf16.msra.mxu0 0
        %3392 = vmatprep.subr.bf16.mxu0 0
        %3393 = vmatpush1.bf16.msra.mxu0 0
        %3394 = vmatprep.subr.bf16.mxu0 0
        %3395 = vmatpush1.bf16.msra.mxu0 0
        %3396 = vmatprep.subr.bf16.mxu0 0
        %3397 = vmatpush1.bf16.msra.mxu0 0
        %3398 = vmatprep.subr.bf16.mxu0 0
        %3399 = vmatpush1.bf16.msra.mxu0 0
        %3400 = vmatprep.subr.bf16.mxu0 0
        %3401 = vmatpush1.bf16.msra.mxu0 0
        %3402 = vmatprep.subr.bf16.mxu0 0
        %3403 = vmatpush1.bf16.msra.mxu0 0
        %3404 = vmatprep.subr.bf16.mxu0 0
        %3405 = vmatpush1.bf16.msra.mxu0 0
        %3406 = vmatprep.subr.bf16.mxu0 0
        %3407 = vmatpush1.bf16.msra.mxu0 0
        %3408 = vmatprep.subr.bf16.mxu0 0
        %3409 = vmatpush1.bf16.msra.mxu0 0
        %3410 = vmatprep.subr.bf16.mxu0 0
        %3411 = vmatpush1.bf16.msra.mxu0 0
        %3412 = vmatprep.subr.bf16.mxu0 0
        %3413 = vmatpush1.bf16.msra.mxu0 0
        %3414 = vmatprep.mubr.bf16.mxu0 0
        %3415 = vmatmul.mubr.bf16.gmra.mrb[0].mxu0 %v3377
        %v3416 = vpop.f32.mrb[0].mxu0
        %v3417 = vadd.f32 0.0, %v3416
        %v3418 = vpop.f32.mrb[0].mxu0
        %v3419 = vpop.f32.mrb[0].mxu0
        %v3420 = vpop.f32.mrb[0].mxu0
        %3421 = vdwg.mxu0
        %v3423 = vsel %vm1648, %v3324, 0
        %v3426 = vsel %vm1895, %v3328, 0
        %3428 = vmatprep.subr.bf16.mxu0 0
        %3429 = vmatpush1.bf16.msra.mxu0 %v3426
        %3430 = vmatprep.subr.bf16.mxu0 0
        %3431 = vmatpush1.bf16.msra.mxu0 0
        %3432 = vmatprep.subr.bf16.mxu0 0
        %3433 = vmatpush1.bf16.msra.mxu0 0
        %3434 = vmatprep.subr.bf16.mxu0 0
        %3435 = vmatpush1.bf16.msra.mxu0 0
        %3436 = vmatprep.subr.bf16.mxu0 0
        %3437 = vmatpush1.bf16.msra.mxu0 0
        %3438 = vmatprep.subr.bf16.mxu0 0
        %3439 = vmatpush1.bf16.msra.mxu0 0
        %3440 = vmatprep.subr.bf16.mxu0 0
        %3441 = vmatpush1.bf16.msra.mxu0 0
        %3442 = vmatprep.subr.bf16.mxu0 0
        %3443 = vmatpush1.bf16.msra.mxu0 0
        %3444 = vmatprep.subr.bf16.mxu0 0
        %3445 = vmatpush1.bf16.msra.mxu0 0
        %3446 = vmatprep.subr.bf16.mxu0 0
        %3447 = vmatpush1.bf16.msra.mxu0 0
        %3448 = vmatprep.subr.bf16.mxu0 0
        %3449 = vmatpush1.bf16.msra.mxu0 0
        %3450 = vmatprep.subr.bf16.mxu0 0
        %3451 = vmatpush1.bf16.msra.mxu0 0
        %3452 = vmatprep.subr.bf16.mxu0 0
        %3453 = vmatpush1.bf16.msra.mxu0 0
        %3454 = vmatprep.subr.bf16.mxu0 0
        %3455 = vmatpush1.bf16.msra.mxu0 0
        %3456 = vmatprep.subr.bf16.mxu0 0
        %3457 = vmatpush1.bf16.msra.mxu0 0
        %3458 = vmatprep.subr.bf16.mxu0 0
        %3459 = vmatpush1.bf16.msra.mxu0 0
        %3460 = vmatprep.mubr.bf16.mxu0 0
        %3461 = vmatmul.mubr.bf16.gmra.mrb[0].mxu0 %v3423
        %v3462 = vpop.f32.mrb[0].mxu0
        %v3463 = vadd.f32 0.0, %v3462
        %v3464 = vpop.f32.mrb[0].mxu0
        %v3465 = vpop.f32.mrb[0].mxu0
        %v3466 = vpop.f32.mrb[0].mxu0
        %3467 = vdwg.mxu0
        %v3469 = vsel %vm1648, %v3325, 0
        %v3472 = vsel %vm1895, %v3329, 0
        %3474 = vmatprep.subr.bf16.mxu0 0
        %3475 = vmatpush1.bf16.msra.mxu0 %v3472
        %3476 = vmatprep.subr.bf16.mxu0 0
        %3477 = vmatpush1.bf16.msra.mxu0 0
        %3478 = vmatprep.subr.bf16.mxu0 0
        %3479 = vmatpush1.bf16.msra.mxu0 0
        %3480 = vmatprep.subr.bf16.mxu0 0
        %3481 = vmatpush1.bf16.msra.mxu0 0
        %3482 = vmatprep.subr.bf16.mxu0 0
        %3483 = vmatpush1.bf16.msra.mxu0 0
        %3484 = vmatprep.subr.bf16.mxu0 0
        %3485 = vmatpush1.bf16.msra.mxu0 0
        %3486 = vmatprep.subr.bf16.mxu0 0
        %3487 = vmatpush1.bf16.msra.mxu0 0
        %3488 = vmatprep.subr.bf16.mxu0 0
        %3489 = vmatpush1.bf16.msra.mxu0 0
        %3490 = vmatprep.subr.bf16.mxu0 0
        %3491 = vmatpush1.bf16.msra.mxu0 0
        %3492 = vmatprep.subr.bf16.mxu0 0
        %3493 = vmatpush1.bf16.msra.mxu0 0
        %3494 = vmatprep.subr.bf16.mxu0 0
        %3495 = vmatpush1.bf16.msra.mxu0 0
        %3496 = vmatprep.subr.bf16.mxu0 0
        %3497 = vmatpush1.bf16.msra.mxu0 0
        %3498 = vmatprep.subr.bf16.mxu0 0
        %3499 = vmatpush1.bf16.msra.mxu0 0
        %3500 = vmatprep.subr.bf16.mxu0 0
        %3501 = vmatpush1.bf16.msra.mxu0 0
        %3502 = vmatprep.subr.bf16.mxu0 0
        %3503 = vmatpush1.bf16.msra.mxu0 0
        %3504 = vmatprep.subr.bf16.mxu0 0
        %3505 = vmatpush1.bf16.msra.mxu0 0
        %3506 = vmatprep.mubr.bf16.mxu0 0
        %3507 = vmatmul.mubr.bf16.gmra.mrb[0].mxu0 %v3469
        %v3508 = vpop.f32.mrb[0].mxu0
        %v3509 = vadd.f32 0.0, %v3508
        %v3510 = vpop.f32.mrb[0].mxu0
        %v3511 = vpop.f32.mrb[0].mxu0
        %v3512 = vpop.f32.mrb[0].mxu0
        %3513 = vdwg.mxu0
        %v3514 = vpack.c.bf16 %v3371, %v3371
        %v3515 = vpack.c.bf16 %v3417, %v3417
        %v3516 = vpack.c.bf16 %v3463, %v3463
        %v3517 = vpack.c.bf16 %v3509, %v3509
        %v3519 = vsel %vm1648, %v3514, 0
        %v3522 = vsel %vm1895, %v2366, 0
        %3524 = vmatprep.subr.bf16.mxu0 0
        %3525 = vmatpush1.bf16.msra.mxu0 %v3522
        %3526 = vmatprep.subr.bf16.mxu0 0
        %3527 = vmatpush1.bf16.msra.mxu0 0
        %3528 = vmatprep.subr.bf16.mxu0 0
        %3529 = vmatpush1.bf16.msra.mxu0 0
        %3530 = vmatprep.subr.bf16.mxu0 0
        %3531 = vmatpush1.bf16.msra.mxu0 0
        %3532 = vmatprep.subr.bf16.mxu0 0
        %3533 = vmatpush1.bf16.msra.mxu0 0
        %3534 = vmatprep.subr.bf16.mxu0 0
        %3535 = vmatpush1.bf16.msra.mxu0 0
        %3536 = vmatprep.subr.bf16.mxu0 0
        %3537 = vmatpush1.bf16.msra.mxu0 0
        %3538 = vmatprep.subr.bf16.mxu0 0
        %3539 = vmatpush1.bf16.msra.mxu0 0
        %3540 = vmatprep.subr.bf16.mxu0 0
        %3541 = vmatpush1.bf16.msra.mxu0 0
        %3542 = vmatprep.subr.bf16.mxu0 0
        %3543 = vmatpush1.bf16.msra.mxu0 0
        %3544 = vmatprep.subr.bf16.mxu0 0
        %3545 = vmatpush1.bf16.msra.mxu0 0
        %3546 = vmatprep.subr.bf16.mxu0 0
        %3547 = vmatpush1.bf16.msra.mxu0 0
        %3548 = vmatprep.subr.bf16.mxu0 0
        %3549 = vmatpush1.bf16.msra.mxu0 0
        %3550 = vmatprep.subr.bf16.mxu0 0
        %3551 = vmatpush1.bf16.msra.mxu0 0
        %3552 = vmatprep.subr.bf16.mxu0 0
        %3553 = vmatpush1.bf16.msra.mxu0 0
        %3554 = vmatprep.subr.bf16.mxu0 0
        %3555 = vmatpush1.bf16.msra.mxu0 0
        %3556 = vmatprep.mubr.bf16.mxu0 0
        %3557 = vmatmul.mubr.bf16.gmra.mrb[0].mxu0 %v3519
        %v3558 = vpop.f32.mrb[0].mxu0
        %v3559 = vadd.f32 0.0, %v3558
        %v3560 = vpop.f32.mrb[0].mxu0
        %v3561 = vpop.f32.mrb[0].mxu0
        %v3562 = vpop.f32.mrb[0].mxu0
        %3563 = vdwg.mxu0
        %v3565 = vsel %vm1648, %v3515, 0
        %v3568 = vsel %vm1895, %v2367, 0
        %3570 = vmatprep.subr.bf16.mxu0 0
        %3571 = vmatpush1.bf16.msra.mxu0 %v3568
        %3572 = vmatprep.subr.bf16.mxu0 0
        %3573 = vmatpush1.bf16.msra.mxu0 0
        %3574 = vmatprep.subr.bf16.mxu0 0
        %3575 = vmatpush1.bf16.msra.mxu0 0
        %3576 = vmatprep.subr.bf16.mxu0 0
        %3577 = vmatpush1.bf16.msra.mxu0 0
        %3578 = vmatprep.subr.bf16.mxu0 0
        %3579 = vmatpush1.bf16.msra.mxu0 0
        %3580 = vmatprep.subr.bf16.mxu0 0
        %3581 = vmatpush1.bf16.msra.mxu0 0
        %3582 = vmatprep.subr.bf16.mxu0 0
        %3583 = vmatpush1.bf16.msra.mxu0 0
        %3584 = vmatprep.subr.bf16.mxu0 0
        %3585 = vmatpush1.bf16.msra.mxu0 0
        %3586 = vmatprep.subr.bf16.mxu0 0
        %3587 = vmatpush1.bf16.msra.mxu0 0
        %3588 = vmatprep.subr.bf16.mxu0 0
        %3589 = vmatpush1.bf16.msra.mxu0 0
        %3590 = vmatprep.subr.bf16.mxu0 0
        %3591 = vmatpush1.bf16.msra.mxu0 0
        %3592 = vmatprep.subr.bf16.mxu0 0
        %3593 = vmatpush1.bf16.msra.mxu0 0
        %3594 = vmatprep.subr.bf16.mxu0 0
        %3595 = vmatpush1.bf16.msra.mxu0 0
        %3596 = vmatprep.subr.bf16.mxu0 0
        %3597 = vmatpush1.bf16.msra.mxu0 0
        %3598 = vmatprep.subr.bf16.mxu0 0
        %3599 = vmatpush1.bf16.msra.mxu0 0
        %3600 = vmatprep.subr.bf16.mxu0 0
        %3601 = vmatpush1.bf16.msra.mxu0 0
        %3602 = vmatprep.mubr.bf16.mxu0 0
        %3603 = vmatmul.mubr.bf16.gmra.mrb[0].mxu0 %v3565
        %v3604 = vpop.f32.mrb[0].mxu0
        %v3605 = vadd.f32 0.0, %v3604
        %v3606 = vpop.f32.mrb[0].mxu0
        %v3607 = vpop.f32.mrb[0].mxu0
        %v3608 = vpop.f32.mrb[0].mxu0
        %3609 = vdwg.mxu0
        %v3611 = vsel %vm1648, %v3516, 0
        %v3614 = vsel %vm1895, %v2368, 0
        %3616 = vmatprep.subr.bf16.mxu0 0
        %3617 = vmatpush1.bf16.msra.mxu0 %v3614
        %3618 = vmatprep.subr.bf16.mxu0 0
        %3619 = vmatpush1.bf16.msra.mxu0 0
        %3620 = vmatprep.subr.bf16.mxu0 0
        %3621 = vmatpush1.bf16.msra.mxu0 0
        %3622 = vmatprep.subr.bf16.mxu0 0
        %3623 = vmatpush1.bf16.msra.mxu0 0
        %3624 = vmatprep.subr.bf16.mxu0 0
        %3625 = vmatpush1.bf16.msra.mxu0 0
        %3626 = vmatprep.subr.bf16.mxu0 0
        %3627 = vmatpush1.bf16.msra.mxu0 0
        %3628 = vmatprep.subr.bf16.mxu0 0
        %3629 = vmatpush1.bf16.msra.mxu0 0
        %3630 = vmatprep.subr.bf16.mxu0 0
        %3631 = vmatpush1.bf16.msra.mxu0 0
        %3632 = vmatprep.subr.bf16.mxu0 0
        %3633 = vmatpush1.bf16.msra.mxu0 0
        %3634 = vmatprep.subr.bf16.mxu0 0
        %3635 = vmatpush1.bf16.msra.mxu0 0
        %3636 = vmatprep.subr.bf16.mxu0 0
        %3637 = vmatpush1.bf16.msra.mxu0 0
        %3638 = vmatprep.subr.bf16.mxu0 0
        %3639 = vmatpush1.bf16.msra.mxu0 0
        %3640 = vmatprep.subr.bf16.mxu0 0
        %3641 = vmatpush1.bf16.msra.mxu0 0
        %3642 = vmatprep.subr.bf16.mxu0 0
        %3643 = vmatpush1.bf16.msra.mxu0 0
        %3644 = vmatprep.subr.bf16.mxu0 0
        %3645 = vmatpush1.bf16.msra.mxu0 0
        %3646 = vmatprep.subr.bf16.mxu0 0
        %3647 = vmatpush1.bf16.msra.mxu0 0
        %3648 = vmatprep.mubr.bf16.mxu0 0
        %3649 = vmatmul.mubr.bf16.gmra.mrb[0].mxu0 %v3611
        %v3650 = vpop.f32.mrb[0].mxu0
        %v3651 = vadd.f32 0.0, %v3650
        %v3652 = vpop.f32.mrb[0].mxu0
        %v3653 = vpop.f32.mrb[0].mxu0
        %v3654 = vpop.f32.mrb[0].mxu0
        %3655 = vdwg.mxu0
        %v3657 = vsel %vm1648, %v3517, 0
        %v3660 = vsel %vm1895, %v2369, 0
        %3662 = vmatprep.subr.bf16.mxu0 0
        %3663 = vmatpush1.bf16.msra.mxu0 %v3660
        %3664 = vmatprep.subr.bf16.mxu0 0
        %3665 = vmatpush1.bf16.msra.mxu0 0
        %3666 = vmatprep.subr.bf16.mxu0 0
        %3667 = vmatpush1.bf16.msra.mxu0 0
        %3668 = vmatprep.subr.bf16.mxu0 0
        %3669 = vmatpush1.bf16.msra.mxu0 0
        %3670 = vmatprep.subr.bf16.mxu0 0
        %3671 = vmatpush1.bf16.msra.mxu0 0
        %3672 = vmatprep.subr.bf16.mxu0 0
        %3673 = vmatpush1.bf16.msra.mxu0 0
        %3674 = vmatprep.subr.bf16.mxu0 0
        %3675 = vmatpush1.bf16.msra.mxu0 0
        %3676 = vmatprep.subr.bf16.mxu0 0
        %3677 = vmatpush1.bf16.msra.mxu0 0
        %3678 = vmatprep.subr.bf16.mxu0 0
        %3679 = vmatpush1.bf16.msra.mxu0 0
        %3680 = vmatprep.subr.bf16.mxu0 0
        %3681 = vmatpush1.bf16.msra.mxu0 0
        %3682 = vmatprep.subr.bf16.mxu0 0
        %3683 = vmatpush1.bf16.msra.mxu0 0
        %3684 = vmatprep.subr.bf16.mxu0 0
        %3685 = vmatpush1.bf16.msra.mxu0 0
        %3686 = vmatprep.subr.bf16.mxu0 0
        %3687 = vmatpush1.bf16.msra.mxu0 0
        %3688 = vmatprep.subr.bf16.mxu0 0
        %3689 = vmatpush1.bf16.msra.mxu0 0
        %3690 = vmatprep.subr.bf16.mxu0 0
        %3691 = vmatpush1.bf16.msra.mxu0 0
        %3692 = vmatprep.subr.bf16.mxu0 0
        %3693 = vmatpush1.bf16.msra.mxu0 0
        %3694 = vmatprep.mubr.bf16.mxu0 0
        %3695 = vmatmul.mubr.bf16.gmra.mrb[0].mxu0 %v3657
        %v3696 = vpop.f32.mrb[0].mxu0
        %v3697 = vadd.f32 0.0, %v3696
        %v3698 = vpop.f32.mrb[0].mxu0
        %v3699 = vpop.f32.mrb[0].mxu0
        %v3700 = vpop.f32.mrb[0].mxu0
        %3701 = vdwg.mxu0
        %v3702 = vsel %vm849, %v3559, 0.0
        %v3703 = vsel %vm849, %v3605, 0.0
        %v3704 = vadd.f32 %v3702, %v3703
        %v3705 = vsel %vm849, %v3651, 0.0
        %v3706 = vadd.f32 %v3704, %v3705
        %v3707 = vsel %vm849, %v3697, 0.0
        %v3708 = vadd.f32 %v3706, %v3707
        %v3710 = vlaneseq
        %v3711 = vshrl.u32 %v3710, 7
        %v3712 = vsub.s32 0, %v3711
        %v3713 = vrot.slane %v2370, %v3712
        %v3715 = vadd.f32 %v3708, %v3713
        %v3716 = vadd.f32 %v2279, %v3715
        %s3717 = sld [smem:[#allocation2 + $0x4]]
        %s3718 = sld [smem:[#allocation2 + $0x5]]
        %v3719 = vsel %vm849, %v3716, 0.0
        %3720 = vadd.xlane.f32.xlu0 %v3719
        %v3721 = vpop.xlane.xlu0 %3720
        %v3722 = vmul.f32 %v3721, %v853
        %v3723 = vsub.f32 %v3716, %v3722
        %v3724 = vmul.f32 %v3723, %v3723
        %v3725 = vsel %vm849, %v3724, 0.0
        %3726 = vadd.xlane.f32.xlu0 %v3725
        %v3727 = vpop.xlane.xlu0 %3726
        %v3728 = vmul.f32 %v3727, 0.032258064
        %v3729 = vrsqrt.pop %v3728
        %v3730 = vmul.f32 %v3728, %v3729
        %vm3731 = vcmp.eq.f32.partialorder %v3728, inf
        %v3732 = vsel %vm3731, %v3728, %v3730
        %vm3733 = vcmp.eq.f32.partialorder %v3728, 0.0
        %v3734 = vand.u32 %v3728, 2147483648
        %v3735 = vsel %vm3733, %v3734, %v3732
        %v3736 = vadd.f32 %v3735, 1e-06
        %v3737 = vrcp.pop %v3736
        %v3738 = vstv %s3717
        %v3739 = vmul.f32 %v3738, %v3737
        %v3740 = vmul.f32 %v3723, %v3739
        %v3741 = vstv %s3718
        %v3742 = vadd.f32 %v3740, %v3741
        %v3743 = vpack.c.bf16 %v3742, %v3742
        %v3744 = vld [vmem:[%s21] sm:$0xf]
        %v3745 = vld [vmem:[%s21 + $0x4] sm:$0xf]
        %v3746 = vld [vmem:[%s21 + $0x8] sm:$0xf]
        %v3747 = vld [vmem:[%s21 + $0xc] sm:$0xf]
        %v3748 = vld [vmem:[%s22] sm:$0x1]
        %v3750 = vlaneseq
        %v3751 = vshrl.u32 %v3750, 7
        %v3752 = vsub.s32 0, %v3751
        %v3753 = vrot.slane %v3748, %v3752
        %v3759 = vunpack.c.l.b16 %v3744
        %v3760 = vunpack.c.l.b16 %v3745
        %v3761 = vunpack.c.l.b16 %v3746
        %v3762 = vunpack.c.l.b16 %v3747
        %v3763 = vpack.c.b16 %v3760, %v3759
        %v3764 = vpack.c.b16 %v3762, %v3761
        %v3768 = vsel %vm849, %v3743, 0
        %3770 = vmatprep.subr.bf16.mxu0 0
        %3771 = vmatpush1.bf16.msra.mxu0 %v3763
        %3772 = vmatprep.subr.bf16.mxu0 0
        %3773 = vmatpush1.bf16.msra.mxu0 %v3764
        %3774 = vmatprep.subr.bf16.mxu0 0
        %3775 = vmatpush1.bf16.msra.mxu0 0
        %3776 = vmatprep.subr.bf16.mxu0 0
        %3777 = vmatpush1.bf16.msra.mxu0 0
        %3778 = vmatprep.subr.bf16.mxu0 0
        %3779 = vmatpush1.bf16.msra.mxu0 0
        %3780 = vmatprep.subr.bf16.mxu0 0
        %3781 = vmatpush1.bf16.msra.mxu0 0
        %3782 = vmatprep.subr.bf16.mxu0 0
        %3783 = vmatpush1.bf16.msra.mxu0 0
        %3784 = vmatprep.subr.bf16.mxu0 0
        %3785 = vmatpush1.bf16.msra.mxu0 0
        %3786 = vmatprep.subr.bf16.mxu0 0
        %3787 = vmatpush1.bf16.msra.mxu0 0
        %3788 = vmatprep.subr.bf16.mxu0 0
        %3789 = vmatpush1.bf16.msra.mxu0 0
        %3790 = vmatprep.subr.bf16.mxu0 0
        %3791 = vmatpush1.bf16.msra.mxu0 0
        %3792 = vmatprep.subr.bf16.mxu0 0
        %3793 = vmatpush1.bf16.msra.mxu0 0
        %3794 = vmatprep.subr.bf16.mxu0 0
        %3795 = vmatpush1.bf16.msra.mxu0 0
        %3796 = vmatprep.subr.bf16.mxu0 0
        %3797 = vmatpush1.bf16.msra.mxu0 0
        %3798 = vmatprep.subr.bf16.mxu0 0
        %3799 = vmatpush1.bf16.msra.mxu0 0
        %3800 = vmatprep.subr.bf16.mxu0 0
        %3801 = vmatpush1.bf16.msra.mxu0 0
        %3802 = vmatprep.mubr.bf16.mxu0 0
        %3803 = vmatmul.mubr.bf16.gmra.mrb[0].mxu0 %v3768
        %v3804 = vpop.f32.mrb[0].mxu0
        %v3805 = vadd.f32 %v3753, %v3804
        %v3806 = vpop.f32.mrb[0].mxu0
        %v3807 = vpop.f32.mrb[0].mxu0
        %v3808 = vpop.f32.mrb[0].mxu0
        %3809 = vdwg.mxu0
        %v3810 = vmax.f32 %v3805, 0.0
        %v3811 = vpack.c.bf16 %v3810, %v3810
        %v3812 = vld [vmem:[%s23] sm:$0xf]
        %v3813 = vld [vmem:[%s23 + $0x4] sm:$0xf]
        %v3814 = vld [vmem:[%s23 + $0x8] sm:$0xf]
        %v3815 = vld [vmem:[%s23 + $0xc] sm:$0xf]
        %v3816 = vld [vmem:[%s23 + $0x10] sm:$0xf]
        %v3817 = vld [vmem:[%s23 + $0x14] sm:$0xf]
        %v3818 = vld [vmem:[%s23 + $0x18] sm:$0xf]
        %v3819 = vld [vmem:[%s23 + $0x1c] sm:$0xf]
        %v3820 = vld [vmem:[%s24] sm:$0x1]
        %v3822 = vlaneseq
        %v3823 = vshrl.u32 %v3822, 7
        %v3824 = vsub.s32 0, %v3823
        %v3825 = vrot.slane %v3820, %v3824
        %v3835 = vunpack.c.l.b16 %v3812
        %v3836 = vunpack.c.l.b16 %v3813
        %v3837 = vunpack.c.l.b16 %v3814
        %v3838 = vunpack.c.l.b16 %v3815
        %v3839 = vunpack.c.l.b16 %v3816
        %v3840 = vunpack.c.l.b16 %v3817
        %v3841 = vunpack.c.l.b16 %v3818
        %v3842 = vunpack.c.l.b16 %v3819
        %v3843 = vpack.c.b16 %v3836, %v3835
        %v3844 = vpack.c.b16 %v3838, %v3837
        %v3845 = vpack.c.b16 %v3840, %v3839
        %v3846 = vpack.c.b16 %v3842, %v3841
        %vm3851 = vcmask 523264
        %v3853 = vsel %vm3851, %v3811, 0
        %3855 = vmatprep.subr.bf16.mxu0 0
        %3856 = vmatpush1.bf16.msra.mxu0 %v3843
        %3857 = vmatprep.subr.bf16.mxu0 0
        %3858 = vmatpush1.bf16.msra.mxu0 %v3844
        %3859 = vmatprep.subr.bf16.mxu0 0
        %3860 = vmatpush1.bf16.msra.mxu0 %v3845
        %3861 = vmatprep.subr.bf16.mxu0 0
        %3862 = vmatpush1.bf16.msra.mxu0 %v3846
        %3863 = vmatprep.subr.bf16.mxu0 0
        %3864 = vmatpush1.bf16.msra.mxu0 0
        %3865 = vmatprep.subr.bf16.mxu0 0
        %3866 = vmatpush1.bf16.msra.mxu0 0
        %3867 = vmatprep.subr.bf16.mxu0 0
        %3868 = vmatpush1.bf16.msra.mxu0 0
        %3869 = vmatprep.subr.bf16.mxu0 0
        %3870 = vmatpush1.bf16.msra.mxu0 0
        %3871 = vmatprep.subr.bf16.mxu0 0
        %3872 = vmatpush1.bf16.msra.mxu0 0
        %3873 = vmatprep.subr.bf16.mxu0 0
        %3874 = vmatpush1.bf16.msra.mxu0 0
        %3875 = vmatprep.subr.bf16.mxu0 0
        %3876 = vmatpush1.bf16.msra.mxu0 0
        %3877 = vmatprep.subr.bf16.mxu0 0
        %3878 = vmatpush1.bf16.msra.mxu0 0
        %3879 = vmatprep.subr.bf16.mxu0 0
        %3880 = vmatpush1.bf16.msra.mxu0 0
        %3881 = vmatprep.subr.bf16.mxu0 0
        %3882 = vmatpush1.bf16.msra.mxu0 0
        %3883 = vmatprep.subr.bf16.mxu0 0
        %3884 = vmatpush1.bf16.msra.mxu0 0
        %3885 = vmatprep.subr.bf16.mxu0 0
        %3886 = vmatpush1.bf16.msra.mxu0 0
        %3887 = vmatprep.mubr.bf16.mxu0 0
        %3888 = vmatmul.mubr.bf16.gmra.mrb[0].mxu0 %v3853
        %v3889 = vpop.f32.mrb[0].mxu0
        %v3890 = vadd.f32 %v3825, %v3889
        %v3891 = vpop.f32.mrb[0].mxu0
        %v3892 = vpop.f32.mrb[0].mxu0
        %v3893 = vpop.f32.mrb[0].mxu0
        %3894 = vdwg.mxu0
        %v3895 = vadd.f32 %v3716, %v3890
        %3896 = vst.msk [vmem:[%s830] sm:$0xff] %vm849, %v3895
        %s3897 = sand.u32 %s596, 1
        %s3898 = scalar_lea.sflag [#allocation4], %s3897
        %s3899 = sand.u32 %s596, 1
        %s3900 = smul.addr %s3899, 8
        %s3901 = scalar_lea.vmem [#allocation7], %s3900
        // Predicated region
        $region129: #{tpu_custom_call.1} parent=119 // pred_check
          %p3902 = pneg %p606
        $region130: #{tpu_custom_call.1} parent=119 // pred_check_branch
          %3904 = sbr.rel (%p3902) target = $region132
        $region131: #{tpu_custom_call.1} parent=119 // pred_region
          %s3906 = ssub.s32 128, 128
          %3907 = vsyncadd %s3898, %s3906
          %s3908 = smul.addr %s43, 128
          %s3909 = scalar_lea.hbm %s25, %s3908
          %s3911 = sshll.u32 %s3901, 4
          %s3912 = int_to_ptr.vmem [resolvable:$true] %s3911
          %3914 = dma.vmem_to_hbm [thread:$0]  %s3912, 128, %s3909, %s3898
        $region132: #{tpu_custom_call.1} parent=119 // pred_fallthru
          _
      $region120: #{tpu_custom_call.1} parent=5 // pred_fallthru
        _
      %p3915 = scmp.le.s32.totalorder 2, %s38
      // Predicated region
      $region133: #{tpu_custom_call.1} parent=5 // pred_check
        %p3916 = pneg %p3915
      $region134: #{tpu_custom_call.1} parent=5 // pred_check_branch
        %3918 = sbr.rel (%p3916) target = $region136
      $region135: #{tpu_custom_call.1} parent=5 // pred_region
        %s3919 = ssub.s32 %s38, 2
        // Predicated region
        $region137: #{tpu_custom_call.1} parent=135 // pred_check
          %p3920 = pneg %p612
        $region138: #{tpu_custom_call.1} parent=135 // pred_check_branch
          %3922 = sbr.rel (%p3920) target = $region140
        $region139: #{tpu_custom_call.1} parent=135 // pred_region
          %s3923 = sand.u32 %s597, 1
          %s3924 = scalar_lea.sflag [#allocation4], %s3923
          %s3925 = sand.u32 %s597, 1
          %s3926 = smul.addr %s3925, 8
          %s3927 = scalar_lea.vmem [#allocation7], %s3926
          %3928 = dma.done %s3924, 128
        $region140: #{tpu_custom_call.1} parent=135 // pred_fallthru
          _
      $region136: #{tpu_custom_call.1} parent=5 // pred_fallthru
        _
    $region6: #{tpu_custom_call.1} parent=1 // loop_footer
      %s42 = sadd.s32 1, %s38
    $region7: #{tpu_custom_call.1} parent=1 // loop_footer_branch
      %37 = sbr.rel target = $region3
    $region8: #{tpu_custom_call.1} parent=1 // loop_exit
      _
    %3929 = vsyncpa [#allocation3], 1
    %s3930 = scalar_lea.sflag [#allocation3], 1
    %3931 = vsyncpa %s3930, 1
    %3932 = vsyncpa [#allocation4], 1
    %s3933 = scalar_lea.sflag [#allocation4], 1
    %3934 = vsyncpa %s3933, 1
    %3935 = vsyncpa [#allocation5], 1
    %s3936 = scalar_lea.sflag [#allocation5], 1
    %3937 = vsyncpa %s3936, 1

</llo_original>
